<compile_context>
chip_gen: v6e
topology: v6e:2x2x1
jax: 0.10.0
libtpu: 0.0.40
codegen_flags: <defaults>
</compile_context>

<pallas_src>
import jax
import jax.numpy as jnp
import numpy as np
from jax import lax
from jax.experimental import pallas as pl
from jax.experimental.pallas import tpu as pltpu

EPS_L2 = 1e-9     # l2_norm eps in the reference code
EPS_ENT = 1e-15   # EPS inside PyG dense_diff_pool entropy term


def _node_contract(a, b):
    """result[g, p, q] = sum_n a[g, n, p] * b[g, n, q]  (a^T @ b per graph)."""
    return lax.dot_general(a, b, (((1,), (1,)), ((0,), (0,))),
                           preferred_element_type=jnp.float32)


def _bmm(a, b):
    """result[g, p, q] = sum_k a[g, p, k] * b[g, k, q]."""
    return lax.dot_general(a, b, (((2,), (1,)), ((0,), (0,))),
                           preferred_element_type=jnp.float32)


def _softmax_lastdim(z, sub_max=True):
    if sub_max:
        z = z - jnp.max(z, axis=-1, keepdims=True)
    e = jnp.exp(z)
    return e * pl.reciprocal(jnp.sum(e, axis=-1, keepdims=True), approx=False)


def _sum_last2(v):
    return jnp.sum(jnp.sum(v, axis=-1, keepdims=True), axis=-2, keepdims=True)


def diffpool_kernel(x_ref, adj_ref, bd_ref, w1_ref, w2_ref, out_ref):
    x3 = x_ref[...]                            # (G, N, Din)
    adj = adj_ref[...]                         # (G, N, N)
    G, N, Din = x3.shape
    GN = G * N
    H = w1_ref.shape[-1] // 2                  # w1 slab: (2*Din+1, 2*H)
    C = w2_ref.shape[-1] - H                   # w2 slab: (4*H+1, H+C)

    # --- block-diagonal, in-degree-normalized neighbour-mean operator -------
    # mask[g, j, i] = 1 iff edge j -> i; columns divided once by max(deg, 1)
    # so every later mean aggregation is a single MXU contraction (isolated
    # nodes get 0, matching PyG scatter-mean on the dense adjacency).
    mask = (adj != 0.0).astype(jnp.float32)                        # (G, N, N)
    deg = jnp.sum(mask, axis=1, keepdims=True)                     # (G, 1, N)
    mask_norm = mask * pl.reciprocal(jnp.maximum(deg, 1.0), approx=False)
    mask_flat = mask_norm.reshape(GN, N)
    # tile the per-graph columns across all G column blocks, then keep only
    # the diagonal blocks via the static 0/1 template -> (GN, GN) block-diag.
    mask_bd = jnp.concatenate([mask_flat] * G, axis=-1) * bd_ref[...]

    def aggregate(h):
        # agg[g*N + i, :] = mean_{j in N_in(i)} h[g*N + j, :]
        return lax.dot_general(mask_bd, h, (((0,), (0,)), ((), ())),
                               preferred_element_type=jnp.float32)

    def relu_l2(pre):
        h = jnp.maximum(pre, 0.0)
        nrm = jnp.sqrt(jnp.sum(h * h, axis=-1, keepdims=True))
        return h * pl.reciprocal(nrm + EPS_L2, approx=False)

    x2 = x3.reshape(GN, Din)
    agg_x = aggregate(x2)                                          # (GN, Din)

    # --- fused SAGE layer 1 (embedding + assignment branches, one matmul) ---
    w1 = w1_ref[0:2 * Din, :]
    b1 = w1_ref[2 * Din:2 * Din + 1, :]
    pre1 = jnp.dot(jnp.concatenate([agg_x, x2], axis=-1), w1,
                   preferred_element_type=jnp.float32) + b1        # (GN, 2H)
    h1 = jnp.concatenate(
        [relu_l2(pre1[:, 0:H]), relu_l2(pre1[:, H:2 * H])], axis=-1)  # (GN, 2H)

    # --- fused SAGE layer 2 (block-structured weights, one matmul) ----------
    agg1 = aggregate(h1)                                           # (GN, 2H)
    w2 = w2_ref[0:4 * H, :]
    b2 = w2_ref[4 * H:4 * H + 1, :]
    pre2 = jnp.dot(jnp.concatenate([agg1, h1], axis=-1), w2,
                   preferred_element_type=jnp.float32) + b2        # (GN, H+C)
    h_emb = relu_l2(pre2[:, 0:H])                                  # (GN, H)
    h_asn = relu_l2(pre2[:, H:H + C])                              # (GN, C)

    # DiffPoolStep softmax + second softmax inside dense_diff_pool; the second
    # one skips max-subtraction (inputs already in (0, 1]).
    s = _softmax_lastdim(h_asn, sub_max=True)
    s = _softmax_lastdim(s, sub_max=False)                         # (GN, C)
    s3 = s.reshape(G, N, C)
    he3 = h_emb.reshape(G, N, H)

    hp = _node_contract(s3, he3)             # (G, C, H)   S^T X
    sTa = _node_contract(s3, adj)            # (G, C, N)   S^T A
    ap = _bmm(sTa, s3)                       # (G, C, C)   S^T A S
    sts = _node_contract(s3, s3)             # (G, C, C)   S^T S

    # link loss without the (N, N) diff:
    #   ||A - S S^T||_F^2 = ||A||_F^2 - 2 tr(S^T A S) + ||S^T S||_F^2
    adj_sq = _sum_last2(adj * adj)                                 # (G, 1, 1)
    eye_c = (lax.broadcasted_iota(jnp.int32, (C, C), 0) ==
             lax.broadcasted_iota(jnp.int32, (C, C), 1)).astype(jnp.float32)
    tr_ap = _sum_last2(ap * eye_c)                                 # (G, 1, 1)
    sts_sq = _sum_last2(sts * sts)                                 # (G, 1, 1)
    # clamp: cancellation can make this slightly negative -> NaN after sqrt.
    link_sq = jnp.maximum(adj_sq - 2.0 * tr_ap + sts_sq, 0.0)      # (G, 1, 1)
    ent = _sum_last2(-s3 * jnp.log(s3 + EPS_ENT))                  # (G, 1, 1)

    # single lane-dense store: [h_pooled | adj_pooled | (link_sq, ent) | 0 pad]
    parts = [link_sq, ent]
    if C > 2:
        parts.append(jnp.zeros((G, C - 2, 1), jnp.float32))
    loss_col = jnp.concatenate(parts, axis=1)                      # (G, C, 1)
    slab = [hp, ap, loss_col]
    pad = out_ref.shape[-1] - (H + C + 1)
    if pad > 0:
        slab.append(jnp.zeros((G, C, pad), jnp.float32))
    out_ref[...] = jnp.concatenate(slab, axis=-1)


def init_params(key, in_channels, hidden_channels, out_clusters):
    """Synthetic params: per SAGEConv, W_l [out,in], b_l [out], W_r [out,in]."""
    layer_dims = [
        ("e1", in_channels, hidden_channels),
        ("e2", hidden_channels, hidden_channels),
        ("a1", in_channels, hidden_channels),
        ("a2", hidden_channels, out_clusters),
    ]
    params = {}
    for name, din, dout in layer_dims:
        key, k1, k2, k3 = jax.random.split(key, 4)
        params[f"w_l_{name}"] = 0.3 * jax.random.normal(k1, (dout, din), jnp.float32)
        params[f"b_l_{name}"] = 0.1 * jax.random.normal(k2, (dout,), jnp.float32)
        params[f"w_r_{name}"] = 0.3 * jax.random.normal(k3, (dout, din), jnp.float32)
    return params


def _pack_params(params, din, H, C):
    """Fuse the 12 SAGE weights/biases into two slabs (bias as last row)."""
    # layer 1: input [agg_x | x] (2*Din) -> [embed | assign] (2*H)
    w1 = jnp.zeros((2 * din + 1, 2 * H), jnp.float32)
    w1 = w1.at[0:din, 0:H].set(params["w_l_e1"].T)
    w1 = w1.at[0:din, H:2 * H].set(params["w_l_a1"].T)
    w1 = w1.at[din:2 * din, 0:H].set(params["w_r_e1"].T)
    w1 = w1.at[din:2 * din, H:2 * H].set(params["w_r_a1"].T)
    w1 = w1.at[2 * din, 0:H].set(params["b_l_e1"])
    w1 = w1.at[2 * din, H:2 * H].set(params["b_l_a1"])

    # layer 2: input [agg_e1 | agg_a1 | h_e1 | h_a1] (4*H) -> [embed | assign]
    w2 = jnp.zeros((4 * H + 1, H + C), jnp.float32)
    w2 = w2.at[0:H, 0:H].set(params["w_l_e2"].T)
    w2 = w2.at[H:2 * H, H:H + C].set(params["w_l_a2"].T)
    w2 = w2.at[2 * H:3 * H, 0:H].set(params["w_r_e2"].T)
    w2 = w2.at[3 * H:4 * H, H:H + C].set(params["w_r_a2"].T)
    w2 = w2.at[4 * H, 0:H].set(params["b_l_e2"])
    w2 = w2.at[4 * H, H:H + C].set(params["b_l_a2"])
    return w1, w2


def _choose_graphs_per_step(b, N, din, H, C, vmem_budget=40 * 1024 * 1024):
    """One grid step per TensorCore (1 on v5e/v6e, 2 on v7x), VMEM-capped."""
    n_tc = 1
    try:
        if "v7" in jax.devices()[0].device_kind.lower():
            n_tc = 2
    except Exception:
        pass
    steps = n_tc if (b % n_tc == 0) else 1
    G = b // steps

    def fits(g):
        gn = g * N
        bytes_ = 4 * (
            2 * g * (N * din + N * N)          # double-buffered x / adj blocks
            + 3 * gn * gn                      # block-diag mask + template + temp
            + gn * (2 * din + 8 * H + 2 * C)   # activation slabs
            + 2 * g * C * 128                  # double-buffered packed output
        )
        return bytes_ <= vmem_budget

    while G > 1 and not (b % G == 0 and fits(G)):
        G -= 1
    return G


def diffpool_step(x, adj, params, hidden_channels, out_clusters, graphs_per_step=None):
    b, N, din = x.shape
    H, C = hidden_channels, out_clusters
    assert C >= 2, "need at least 2 clusters to pack the two scalar losses"

    G = graphs_per_step if graphs_per_step is not None else \
        _choose_graphs_per_step(b, N, din, H, C)
    assert b % G == 0, "batch must be divisible by graphs_per_step"
    steps = b // G
    GN = G * N

    w1, w2 = _pack_params(params, din, H, C)
    # static 0/1 block-diagonal template (loop-invariant input)
    bd_template = jnp.asarray(np.kron(np.eye(G, dtype=np.float32),
                                      np.ones((N, N), dtype=np.float32)))

    out_w = ((H + C + 1 + 127) // 128) * 128   # lane-dense packed output width

    packed = pl.pallas_call(
        diffpool_kernel,
        out_shape=jax.ShapeDtypeStruct((b, C, out_w), jnp.float32),
        grid_spec=pltpu.PrefetchScalarGridSpec(
            num_scalar_prefetch=0,
            grid=(steps,),
            in_specs=[
                pl.BlockSpec((G, N, din), lambda i: (i, 0, 0)),
                pl.BlockSpec((G, N, N), lambda i: (i, 0, 0)),
                pl.BlockSpec((GN, GN), lambda i: (0, 0)),
                pl.BlockSpec(w1.shape, lambda i: (0, 0)),
                pl.BlockSpec(w2.shape, lambda i: (0, 0)),
            ],
            out_specs=pl.BlockSpec((G, C, out_w), lambda i: (i, 0, 0)),
        ),
        compiler_params=pltpu.CompilerParams(
            dimension_semantics=("parallel",),
            vmem_limit_bytes=48 * 1024 * 1024,   # fits v7x's 64 MiB as well
        ),
    )(x, adj, bd_template, w1, w2)

    hp = packed[:, :, 0:H]
    ap = packed[:, :, H:H + C]
    # link_loss = ||adj - S S^T||_F / numel(adj); ent_loss = mean over (b*N)
    link_loss = jnp.sqrt(jnp.sum(packed[:, 0, H + C])) / (b * N * N)
    ent_loss = jnp.sum(packed[:, 1, H + C]) / (b * N)
    return hp, ap, link_loss, ent_loss


# ---- pure-JAX reference (sanity check only) ----
def _reference(x, adj, params):
    def one_graph(xg, adjg):
        mask_t = (adjg != 0.0).astype(jnp.float32).T
        deg = jnp.maximum(jnp.sum(mask_t, axis=1, keepdims=True), 1.0)

        def sage(h, name):
            agg = (mask_t @ h) / deg
            out = (agg @ params[f"w_l_{name}"].T + params[f"b_l_{name}"]
                   + h @ params[f"w_r_{name}"].T)
            out = jax.nn.relu(out)
            return out / (jnp.linalg.norm(out, axis=-1, keepdims=True) + EPS_L2)

        he = sage(sage(xg, "e1"), "e2")
        ha = sage(sage(xg, "a1"), "a2")
        s = jax.nn.softmax(jax.nn.softmax(ha, axis=-1), axis=-1)
        hp = s.T @ he
        ap = s.T @ adjg @ s
        link_sq = jnp.sum((adjg - s @ s.T) ** 2)
        ent = jnp.sum(-s * jnp.log(s + EPS_ENT))
        return hp, ap, link_sq, ent

    hp, ap, lk, en = jax.vmap(one_graph)(x, adj)
    b, N, _ = x.shape
    return hp, ap, jnp.sqrt(jnp.sum(lk)) / (b * N * N), jnp.sum(en) / (b * N)


if __name__ == "__main__":
    b, N = 8, 16
    in_channels, hidden_channels, out_clusters = 8, 16, 4

    key = jax.random.PRNGKey(0)
    kx, kadj, kp = jax.random.split(key, 3)

    x = jax.random.normal(kx, (b, N, in_channels), jnp.float32)
    a = jax.random.uniform(kadj, (b, N, N), jnp.float32)
    adj = ((a + jnp.swapaxes(a, 1, 2)) > 1.0).astype(jnp.float32)  # symmetric 0/1

    params = init_params(kp, in_channels, hidden_channels, out_clusters)

    hp, ap, link_loss, ent_loss = diffpool_step(x, adj, params,
                                                hidden_channels, out_clusters)
    jax.block_until_ready((hp, ap, link_loss, ent_loss))

    # sanity check against pure-JAX reference
    hp_r, ap_r, link_r, ent_r = _reference(x, adj, params)
    np.testing.assert_allclose(np.asarray(hp), np.asarray(hp_r), rtol=1e-5, atol=1e-5)
    np.testing.assert_allclose(np.asarray(ap), np.asarray(ap_r), rtol=1e-5, atol=1e-5)
    np.testing.assert_allclose(np.asarray(link_loss), np.asarray(link_r), rtol=1e-4, atol=1e-6)
    np.testing.assert_allclose(np.asarray(ent_loss), np.asarray(ent_r), rtol=1e-5, atol=1e-6)

    print("KERNEL_OK")
</pallas_src>

<mosaic_0001>
module attributes {stable_mosaic.version = 11 : i64} {
  func.func @diffpool_kernel(%arg0: i32, %arg1: memref<8x16x8xf32, #tpu.memory_space<vmem>>, %arg2: memref<8x16x16xf32, #tpu.memory_space<vmem>>, %arg3: memref<128x128xf32, #tpu.memory_space<vmem>>, %arg4: memref<17x32xf32, #tpu.memory_space<vmem>>, %arg5: memref<65x20xf32, #tpu.memory_space<vmem>>, %arg6: memref<8x4x128xf32, #tpu.memory_space<vmem>>) attributes {dimension_semantics = [#tpu.dimension_semantics<parallel>], iteration_bounds = array<i64: 1>, scalar_prefetch = 0 : i64, scratch_operands = 0 : i64, tpu.core_type = #tpu.core_type<tc>, window_params = [{transform_indices = @transform_0, window_bounds = array<i64: 8, 16, 8>}, {transform_indices = @transform_1, window_bounds = array<i64: 8, 16, 16>}, {pipeline_mode = #tpu.pipeline_mode<synchronous>, transform_indices = @transform_2, window_bounds = array<i64: 128, 128>}, {pipeline_mode = #tpu.pipeline_mode<synchronous>, transform_indices = @transform_3, window_bounds = array<i64: 17, 32>}, {pipeline_mode = #tpu.pipeline_mode<synchronous>, transform_indices = @transform_4, window_bounds = array<i64: 65, 20>}, {transform_indices = @transform_5, window_bounds = array<i64: 8, 4, 128>}]} {
    %c0 = arith.constant 0 : index
    %c0_0 = arith.constant 0 : index
    %c0_1 = arith.constant 0 : index
    %0 = vector.load %arg1[%c0, %c0_0, %c0_1] : memref<8x16x8xf32, #tpu.memory_space<vmem>>, vector<8x16x8xf32>
    %c0_2 = arith.constant 0 : index
    %c0_3 = arith.constant 0 : index
    %c0_4 = arith.constant 0 : index
    %1 = vector.load %arg2[%c0_2, %c0_3, %c0_4] : memref<8x16x16xf32, #tpu.memory_space<vmem>>, vector<8x16x16xf32>
    %cst = arith.constant 0.000000e+00 : f32
    %2 = vector.broadcast %cst : f32 to vector<8x16x16xf32>
    %3 = arith.cmpf one, %1, %2 : vector<8x16x16xf32>
    %4 = arith.extui %3 : vector<8x16x16xi1> to vector<8x16x16xi32>
    %5 = arith.sitofp %4 : vector<8x16x16xi32> to vector<8x16x16xf32>
    %cst_5 = arith.constant dense<0.000000e+00> : vector<8x16xf32>
    %6 = vector.multi_reduction <add>, %5, %cst_5 [1] : vector<8x16x16xf32> to vector<8x16xf32>
    %7 = vector.shape_cast %6 : vector<8x16xf32> to vector<8x1x16xf32>
    %cst_6 = arith.constant 1.000000e+00 : f32
    %8 = vector.broadcast %cst_6 : f32 to vector<8x1x16xf32>
    %9 = arith.maximumf %7, %8 : vector<8x1x16xf32>
    %10 = tpu.reciprocal %9 : vector<8x1x16xf32> -> vector<8x1x16xf32>
    %11 = vector.broadcast %10 : vector<8x1x16xf32> to vector<8x16x16xf32>
    %12 = arith.mulf %5, %11 : vector<8x16x16xf32>
    %13 = vector.shape_cast %12 : vector<8x16x16xf32> to vector<128x16xf32>
    %14 = tpu.concatenate %13, %13, %13, %13, %13, %13, %13, %13 in 1 : vector<128x16xf32>, vector<128x16xf32>, vector<128x16xf32>, vector<128x16xf32>, vector<128x16xf32>, vector<128x16xf32>, vector<128x16xf32>, vector<128x16xf32> -> vector<128x128xf32>
    %c0_7 = arith.constant 0 : index
    %c0_8 = arith.constant 0 : index
    %15 = vector.load %arg3[%c0_7, %c0_8] : memref<128x128xf32, #tpu.memory_space<vmem>>, vector<128x128xf32>
    %16 = arith.mulf %14, %15 : vector<128x128xf32>
    %17 = vector.shape_cast %0 : vector<8x16x8xf32> to vector<128x8xf32>
    %cst_9 = arith.constant dense<0.000000e+00> : vector<128x8xf32>
    %18 = tpu.matmul %16, %17, %cst_9 {dimension_numbers = #tpu.dot_dimension_numbers<[0], [0], [1], [1], [0, 1, 1, 1], [], []>} : vector<128x128xf32>, vector<128x8xf32>, vector<128x8xf32> -> vector<128x8xf32>
    %c0_10 = arith.constant 0 : index
    %c0_11 = arith.constant 0 : index
    %19 = vector.load %arg4[%c0_10, %c0_11] : memref<17x32xf32, #tpu.memory_space<vmem>>, vector<16x32xf32>
    %c16 = arith.constant 16 : index
    %c0_12 = arith.constant 0 : index
    %20 = vector.load %arg4[%c16, %c0_12] : memref<17x32xf32, #tpu.memory_space<vmem>>, vector<1x32xf32>
    %21 = tpu.concatenate %18, %17 in 1 : vector<128x8xf32>, vector<128x8xf32> -> vector<128x16xf32>
    %cst_13 = arith.constant dense<0.000000e+00> : vector<128x32xf32>
    %22 = tpu.matmul %21, %19, %cst_13 {dimension_numbers = #tpu.dot_dimension_numbers<[1], [0], [0], [1], [0, 0, 1, 1], [], []>} : vector<128x16xf32>, vector<16x32xf32>, vector<128x32xf32> -> vector<128x32xf32>
    %23 = vector.broadcast %20 : vector<1x32xf32> to vector<128x32xf32>
    %24 = arith.addf %22, %23 : vector<128x32xf32>
    %25 = vector.extract_strided_slice %24 {offsets = [0, 0], sizes = [128, 16], strides = [1, 1]} : vector<128x32xf32> to vector<128x16xf32>
    %cst_14 = arith.constant 0.000000e+00 : f32
    %26 = vector.broadcast %cst_14 : f32 to vector<128x16xf32>
    %27 = arith.maximumf %25, %26 : vector<128x16xf32>
    %28 = arith.mulf %27, %27 : vector<128x16xf32>
    %cst_15 = arith.constant dense<0.000000e+00> : vector<128xf32>
    %29 = vector.multi_reduction <add>, %28, %cst_15 [1] : vector<128x16xf32> to vector<128xf32>
    %30 = vector.shape_cast %29 : vector<128xf32> to vector<128x1xf32>
    %31 = math.sqrt %30 : vector<128x1xf32>
    %cst_16 = arith.constant 9.99999971E-10 : f32
    %32 = vector.broadcast %cst_16 : f32 to vector<128x1xf32>
    %33 = arith.addf %31, %32 : vector<128x1xf32>
    %34 = tpu.reciprocal %33 : vector<128x1xf32> -> vector<128x1xf32>
    %35 = vector.broadcast %34 : vector<128x1xf32> to vector<128x16xf32>
    %36 = arith.mulf %27, %35 : vector<128x16xf32>
    %37 = vector.extract_strided_slice %24 {offsets = [0, 16], sizes = [128, 16], strides = [1, 1]} : vector<128x32xf32> to vector<128x16xf32>
    %cst_17 = arith.constant 0.000000e+00 : f32
    %38 = vector.broadcast %cst_17 : f32 to vector<128x16xf32>
    %39 = arith.maximumf %37, %38 : vector<128x16xf32>
    %40 = arith.mulf %39, %39 : vector<128x16xf32>
    %cst_18 = arith.constant dense<0.000000e+00> : vector<128xf32>
    %41 = vector.multi_reduction <add>, %40, %cst_18 [1] : vector<128x16xf32> to vector<128xf32>
    %42 = vector.shape_cast %41 : vector<128xf32> to vector<128x1xf32>
    %43 = math.sqrt %42 : vector<128x1xf32>
    %cst_19 = arith.constant 9.99999971E-10 : f32
    %44 = vector.broadcast %cst_19 : f32 to vector<128x1xf32>
    %45 = arith.addf %43, %44 : vector<128x1xf32>
    %46 = tpu.reciprocal %45 : vector<128x1xf32> -> vector<128x1xf32>
    %47 = vector.broadcast %46 : vector<128x1xf32> to vector<128x16xf32>
    %48 = arith.mulf %39, %47 : vector<128x16xf32>
    %49 = tpu.concatenate %36, %48 in 1 : vector<128x16xf32>, vector<128x16xf32> -> vector<128x32xf32>
    %cst_20 = arith.constant dense<0.000000e+00> : vector<128x32xf32>
    %50 = tpu.matmul %16, %49, %cst_20 {dimension_numbers = #tpu.dot_dimension_numbers<[0], [0], [1], [1], [0, 1, 1, 1], [], []>} : vector<128x128xf32>, vector<128x32xf32>, vector<128x32xf32> -> vector<128x32xf32>
    %c0_21 = arith.constant 0 : index
    %c0_22 = arith.constant 0 : index
    %51 = vector.load %arg5[%c0_21, %c0_22] : memref<65x20xf32, #tpu.memory_space<vmem>>, vector<64x20xf32>
    %c64 = arith.constant 64 : index
    %c0_23 = arith.constant 0 : index
    %52 = vector.load %arg5[%c64, %c0_23] : memref<65x20xf32, #tpu.memory_space<vmem>>, vector<1x20xf32>
    %53 = tpu.concatenate %50, %49 in 1 : vector<128x32xf32>, vector<128x32xf32> -> vector<128x64xf32>
    %cst_24 = arith.constant dense<0.000000e+00> : vector<128x20xf32>
    %54 = tpu.matmul %53, %51, %cst_24 {dimension_numbers = #tpu.dot_dimension_numbers<[1], [0], [0], [1], [0, 0, 1, 1], [], []>} : vector<128x64xf32>, vector<64x20xf32>, vector<128x20xf32> -> vector<128x20xf32>
    %55 = vector.broadcast %52 : vector<1x20xf32> to vector<128x20xf32>
    %56 = arith.addf %54, %55 : vector<128x20xf32>
    %57 = vector.extract_strided_slice %56 {offsets = [0, 0], sizes = [128, 16], strides = [1, 1]} : vector<128x20xf32> to vector<128x16xf32>
    %cst_25 = arith.constant 0.000000e+00 : f32
    %58 = vector.broadcast %cst_25 : f32 to vector<128x16xf32>
    %59 = arith.maximumf %57, %58 : vector<128x16xf32>
    %60 = arith.mulf %59, %59 : vector<128x16xf32>
    %cst_26 = arith.constant dense<0.000000e+00> : vector<128xf32>
    %61 = vector.multi_reduction <add>, %60, %cst_26 [1] : vector<128x16xf32> to vector<128xf32>
    %62 = vector.shape_cast %61 : vector<128xf32> to vector<128x1xf32>
    %63 = math.sqrt %62 : vector<128x1xf32>
    %cst_27 = arith.constant 9.99999971E-10 : f32
    %64 = vector.broadcast %cst_27 : f32 to vector<128x1xf32>
    %65 = arith.addf %63, %64 : vector<128x1xf32>
    %66 = tpu.reciprocal %65 : vector<128x1xf32> -> vector<128x1xf32>
    %67 = vector.broadcast %66 : vector<128x1xf32> to vector<128x16xf32>
    %68 = arith.mulf %59, %67 : vector<128x16xf32>
    %69 = vector.extract_strided_slice %56 {offsets = [0, 16], sizes = [128, 4], strides = [1, 1]} : vector<128x20xf32> to vector<128x4xf32>
    %cst_28 = arith.constant 0.000000e+00 : f32
    %70 = vector.broadcast %cst_28 : f32 to vector<128x4xf32>
    %71 = arith.maximumf %69, %70 : vector<128x4xf32>
    %72 = arith.mulf %71, %71 : vector<128x4xf32>
    %cst_29 = arith.constant dense<0.000000e+00> : vector<128xf32>
    %73 = vector.multi_reduction <add>, %72, %cst_29 [1] : vector<128x4xf32> to vector<128xf32>
    %74 = vector.shape_cast %73 : vector<128xf32> to vector<128x1xf32>
    %75 = math.sqrt %74 : vector<128x1xf32>
    %cst_30 = arith.constant 9.99999971E-10 : f32
    %76 = vector.broadcast %cst_30 : f32 to vector<128x1xf32>
    %77 = arith.addf %75, %76 : vector<128x1xf32>
    %78 = tpu.reciprocal %77 : vector<128x1xf32> -> vector<128x1xf32>
    %79 = vector.broadcast %78 : vector<128x1xf32> to vector<128x4xf32>
    %80 = arith.mulf %71, %79 : vector<128x4xf32>
    %cst_31 = arith.constant dense<0xFF800000> : vector<128xf32>
    %81 = vector.multi_reduction <maximumf>, %80, %cst_31 [1] : vector<128x4xf32> to vector<128xf32>
    %82 = vector.shape_cast %81 : vector<128xf32> to vector<128x1xf32>
    %83 = vector.broadcast %82 : vector<128x1xf32> to vector<128x4xf32>
    %84 = arith.subf %80, %83 : vector<128x4xf32>
    %85 = math.exp %84 : vector<128x4xf32>
    %cst_32 = arith.constant dense<0.000000e+00> : vector<128xf32>
    %86 = vector.multi_reduction <add>, %85, %cst_32 [1] : vector<128x4xf32> to vector<128xf32>
    %87 = vector.shape_cast %86 : vector<128xf32> to vector<128x1xf32>
    %88 = tpu.reciprocal %87 : vector<128x1xf32> -> vector<128x1xf32>
    %89 = vector.broadcast %88 : vector<128x1xf32> to vector<128x4xf32>
    %90 = arith.mulf %85, %89 : vector<128x4xf32>
    %91 = math.exp %90 : vector<128x4xf32>
    %cst_33 = arith.constant dense<0.000000e+00> : vector<128xf32>
    %92 = vector.multi_reduction <add>, %91, %cst_33 [1] : vector<128x4xf32> to vector<128xf32>
    %93 = vector.shape_cast %92 : vector<128xf32> to vector<128x1xf32>
    %94 = tpu.reciprocal %93 : vector<128x1xf32> -> vector<128x1xf32>
    %95 = vector.broadcast %94 : vector<128x1xf32> to vector<128x4xf32>
    %96 = arith.mulf %91, %95 : vector<128x4xf32>
    %97 = vector.shape_cast %96 : vector<128x4xf32> to vector<8x16x4xf32>
    %98 = vector.shape_cast %68 : vector<128x16xf32> to vector<8x16x16xf32>
    %cst_34 = arith.constant dense<0.000000e+00> : vector<8x4x16xf32>
    %99 = tpu.matmul %97, %98, %cst_34 {dimension_numbers = #tpu.dot_dimension_numbers<[1], [1], [2], [2], [0, 0, 0, 2, 1, 2], [0], [0]>} : vector<8x16x4xf32>, vector<8x16x16xf32>, vector<8x4x16xf32> -> vector<8x4x16xf32>
    %cst_35 = arith.constant dense<0.000000e+00> : vector<8x4x16xf32>
    %100 = tpu.matmul %97, %1, %cst_35 {dimension_numbers = #tpu.dot_dimension_numbers<[1], [1], [2], [2], [0, 0, 0, 2, 1, 2], [0], [0]>} : vector<8x16x4xf32>, vector<8x16x16xf32>, vector<8x4x16xf32> -> vector<8x4x16xf32>
    %cst_36 = arith.constant dense<0.000000e+00> : vector<8x4x4xf32>
    %101 = tpu.matmul %100, %97, %cst_36 {dimension_numbers = #tpu.dot_dimension_numbers<[2], [1], [1], [2], [0, 0, 0, 1, 1, 2], [0], [0]>} : vector<8x4x16xf32>, vector<8x16x4xf32>, vector<8x4x4xf32> -> vector<8x4x4xf32>
    %cst_37 = arith.constant dense<0.000000e+00> : vector<8x4x4xf32>
    %102 = tpu.matmul %97, %97, %cst_37 {dimension_numbers = #tpu.dot_dimension_numbers<[1], [1], [2], [2], [0, 0, 0, 2, 1, 2], [0], [0]>} : vector<8x16x4xf32>, vector<8x16x4xf32>, vector<8x4x4xf32> -> vector<8x4x4xf32>
    %103 = arith.mulf %1, %1 : vector<8x16x16xf32>
    %cst_38 = arith.constant dense<0.000000e+00> : vector<8x16xf32>
    %104 = vector.multi_reduction <add>, %103, %cst_38 [2] : vector<8x16x16xf32> to vector<8x16xf32>
    %105 = vector.shape_cast %104 : vector<8x16xf32> to vector<8x16x1xf32>
    %cst_39 = arith.constant dense<0.000000e+00> : vector<8x1xf32>
    %106 = vector.multi_reduction <add>, %105, %cst_39 [1] : vector<8x16x1xf32> to vector<8x1xf32>
    %107 = vector.shape_cast %106 : vector<8x1xf32> to vector<8x1x1xf32>
    %108 = tpu.iota {dimensions = array<i32: 0>} : vector<4x4xi32>
    %109 = tpu.iota {dimensions = array<i32: 1>} : vector<4x4xi32>
    %110 = arith.cmpi eq, %108, %109 : vector<4x4xi32>
    %111 = arith.extui %110 : vector<4x4xi1> to vector<4x4xi32>
    %112 = arith.sitofp %111 : vector<4x4xi32> to vector<4x4xf32>
    %113 = vector.shape_cast %112 : vector<4x4xf32> to vector<1x4x4xf32>
    %114 = vector.broadcast %113 : vector<1x4x4xf32> to vector<8x4x4xf32>
    %115 = arith.mulf %101, %114 : vector<8x4x4xf32>
    %cst_40 = arith.constant dense<0.000000e+00> : vector<8x4xf32>
    %116 = vector.multi_reduction <add>, %115, %cst_40 [2] : vector<8x4x4xf32> to vector<8x4xf32>
    %117 = vector.shape_cast %116 : vector<8x4xf32> to vector<8x4x1xf32>
    %cst_41 = arith.constant dense<0.000000e+00> : vector<8x1xf32>
    %118 = vector.multi_reduction <add>, %117, %cst_41 [1] : vector<8x4x1xf32> to vector<8x1xf32>
    %119 = vector.shape_cast %118 : vector<8x1xf32> to vector<8x1x1xf32>
    %120 = arith.mulf %102, %102 : vector<8x4x4xf32>
    %cst_42 = arith.constant dense<0.000000e+00> : vector<8x4xf32>
    %121 = vector.multi_reduction <add>, %120, %cst_42 [2] : vector<8x4x4xf32> to vector<8x4xf32>
    %122 = vector.shape_cast %121 : vector<8x4xf32> to vector<8x4x1xf32>
    %cst_43 = arith.constant dense<0.000000e+00> : vector<8x1xf32>
    %123 = vector.multi_reduction <add>, %122, %cst_43 [1] : vector<8x4x1xf32> to vector<8x1xf32>
    %124 = vector.shape_cast %123 : vector<8x1xf32> to vector<8x1x1xf32>
    %cst_44 = arith.constant 2.000000e+00 : f32
    %125 = vector.broadcast %cst_44 : f32 to vector<8x1x1xf32>
    %126 = arith.mulf %125, %119 : vector<8x1x1xf32>
    %127 = arith.subf %107, %126 : vector<8x1x1xf32>
    %128 = arith.addf %127, %124 : vector<8x1x1xf32>
    %cst_45 = arith.constant 0.000000e+00 : f32
    %129 = vector.broadcast %cst_45 : f32 to vector<8x1x1xf32>
    %130 = arith.maximumf %128, %129 : vector<8x1x1xf32>
    %cst_46 = arith.constant 0.000000e+00 : f32
    %131 = vector.broadcast %cst_46 : f32 to vector<8x16x4xf32>
    %132 = arith.subf %131, %97 : vector<8x16x4xf32>
    %cst_47 = arith.constant 1.000000e-15 : f32
    %133 = vector.broadcast %cst_47 : f32 to vector<8x16x4xf32>
    %134 = arith.addf %97, %133 : vector<8x16x4xf32>
    %135 = math.log %134 : vector<8x16x4xf32>
    %136 = arith.mulf %132, %135 : vector<8x16x4xf32>
    %cst_48 = arith.constant dense<0.000000e+00> : vector<8x16xf32>
    %137 = vector.multi_reduction <add>, %136, %cst_48 [2] : vector<8x16x4xf32> to vector<8x16xf32>
    %138 = vector.shape_cast %137 : vector<8x16xf32> to vector<8x16x1xf32>
    %cst_49 = arith.constant dense<0.000000e+00> : vector<8x1xf32>
    %139 = vector.multi_reduction <add>, %138, %cst_49 [1] : vector<8x16x1xf32> to vector<8x1xf32>
    %140 = vector.shape_cast %139 : vector<8x1xf32> to vector<8x1x1xf32>
    %cst_50 = arith.constant 0.000000e+00 : f32
    %141 = vector.broadcast %cst_50 : f32 to vector<8x2x1xf32>
    %142 = tpu.concatenate %130, %140, %141 in 1 : vector<8x1x1xf32>, vector<8x1x1xf32>, vector<8x2x1xf32> -> vector<8x4x1xf32>
    %cst_51 = arith.constant 0.000000e+00 : f32
    %143 = vector.broadcast %cst_51 : f32 to vector<8x4x107xf32>
    %144 = tpu.concatenate %99, %101, %142, %143 in 2 : vector<8x4x16xf32>, vector<8x4x4xf32>, vector<8x4x1xf32>, vector<8x4x107xf32> -> vector<8x4x128xf32>
    %c0_52 = arith.constant 0 : index
    %c0_53 = arith.constant 0 : index
    %c0_54 = arith.constant 0 : index
    %145 = vector.load %arg6[%c0_52, %c0_53, %c0_54] : memref<8x4x128xf32, #tpu.memory_space<vmem>>, vector<8x4x128xf32>
    tpu.vector_store %arg6[%c0_52, %c0_53, %c0_54], %144 {strides = array<i32>} : memref<8x4x128xf32, #tpu.memory_space<vmem>>, vector<8x4x128xf32>,
    return
  }
  func.func @transform_0(%arg0: i32) -> (i32, i32, i32) {
    %c0_i32 = arith.constant 0 : i32
    %c0_i32_0 = arith.constant 0 : i32
    %c0_i32_1 = arith.constant 0 : i32
    return %arg0, %c0_i32, %c0_i32_0 : i32, i32, i32
  }
  func.func @transform_1(%arg0: i32) -> (i32, i32, i32) {
    %c0_i32 = arith.constant 0 : i32
    %c0_i32_0 = arith.constant 0 : i32
    %c0_i32_1 = arith.constant 0 : i32
    return %arg0, %c0_i32, %c0_i32_0 : i32, i32, i32
  }
  func.func @transform_2(%arg0: i32) -> (i32, i32) {
    %c0_i32 = arith.constant 0 : i32
    %c0_i32_0 = arith.constant 0 : i32
    %c0_i32_1 = arith.constant 0 : i32
    return %c0_i32, %c0_i32_0 : i32, i32
  }
  func.func @transform_3(%arg0: i32) -> (i32, i32) {
    %c0_i32 = arith.constant 0 : i32
    %c0_i32_0 = arith.constant 0 : i32
    %c0_i32_1 = arith.constant 0 : i32
    return %c0_i32, %c0_i32_0 : i32, i32
  }
  func.func @transform_4(%arg0: i32) -> (i32, i32) {
    %c0_i32 = arith.constant 0 : i32
    %c0_i32_0 = arith.constant 0 : i32
    %c0_i32_1 = arith.constant 0 : i32
    return %c0_i32, %c0_i32_0 : i32, i32
  }
  func.func @transform_5(%arg0: i32) -> (i32, i32, i32) {
    %c0_i32 = arith.constant 0 : i32
    %c0_i32_0 = arith.constant 0 : i32
    %c0_i32_1 = arith.constant 0 : i32
    return %arg0, %c0_i32, %c0_i32_0 : i32, i32, i32
  }
}

</mosaic_0001>

<llo_original>
// kernel: tpu_custom_call.1
$region0: #{tpu_custom_call.1}
  #allocation0 [shape = 'u32[]', space=smem, size = 0x4, offset = 0x4, fixed_abs, tag = 'smem constant byte address 0x4 - core index']
  #allocation1 [shape = 'u32[144,128]{1,0:T(1,128)}', space=vmem, size = 0x12000, scoped, tag = 'internal scratch']
  %s0 = inlined_call_operand.vmem [shape: f32[8,16,8], index: 0, kind: input, shape index: {}]
  %s1 = inlined_call_operand.vmem [shape: f32[8,16,16], index: 1, kind: input, shape index: {}]
  %s2 = inlined_call_operand.vmem [shape: f32[128,128], index: 2, kind: input, shape index: {}]
  %s3 = inlined_call_operand.vmem [shape: f32[17,32], index: 3, kind: input, shape index: {}]
  %s4 = inlined_call_operand.vmem [shape: f32[65,20], index: 4, kind: input, shape index: {}]
  %s5 = inlined_call_operand.hbm [shape: f32[8,4,128], index: 5, kind: output, shape index: {}]
  %s6 = sld [smem:[#allocation0]]
  $region30: #{tpu_custom_call.1} parent=0
    _
  %s8 = ssub.s32 1, %s6
  %s9 = scalar_select 0, %s8, %s6
  $region1: #{tpu_custom_call.1} parent=0
    #allocation2 [shape = 'u8[16384]{0}', space=vmem, size = 0x4000, scoped, tag = 'output window, operand 0, single buffered']
    #allocation3 [shape = 's32[1]{0}', space=sflag, size = 0x4, scoped, tag = 'scoped memory for tpu_custom_call.1']
    %10 = vsyncpa [#allocation3], 0
    // Predicated region
    $region2: #{tpu_custom_call.1} parent=1 // pred_check
      _
    $region3: #{tpu_custom_call.1} parent=1 // pred_check_branch
      %12 = sbr.rel (0) target = $region5
    $region4: #{tpu_custom_call.1} parent=1 // pred_region
      _
    $region5: #{tpu_custom_call.1} parent=1 // pred_fallthru
      _
    // Predicated region
    $region6: #{tpu_custom_call.1} parent=1 // pred_check
      _
    $region7: #{tpu_custom_call.1} parent=1 // pred_check_branch
      %14 = sbr.rel (0) target = $region9
    $region8: #{tpu_custom_call.1} parent=1 // pred_region
      _
    $region9: #{tpu_custom_call.1} parent=1 // pred_fallthru
      _
    // Predicated region
    $region10: #{tpu_custom_call.1} parent=1 // pred_check
      _
    $region11: #{tpu_custom_call.1} parent=1 // pred_check_branch
      %16 = sbr.rel (0) target = $region13
    $region12: #{tpu_custom_call.1} parent=1 // pred_region
      _
    $region13: #{tpu_custom_call.1} parent=1 // pred_fallthru
      _
    // Predicated region
    $region14: #{tpu_custom_call.1} parent=1 // pred_check
      _
    $region15: #{tpu_custom_call.1} parent=1 // pred_check_branch
      %18 = sbr.rel (0) target = $region17
    $region16: #{tpu_custom_call.1} parent=1 // pred_region
      _
    $region17: #{tpu_custom_call.1} parent=1 // pred_fallthru
      _
    // Predicated region
    $region18: #{tpu_custom_call.1} parent=1 // pred_check
      _
    $region19: #{tpu_custom_call.1} parent=1 // pred_check_branch
      %20 = sbr.rel (0) target = $region21
    $region20: #{tpu_custom_call.1} parent=1 // pred_region
      _
    $region21: #{tpu_custom_call.1} parent=1 // pred_fallthru
      _
    %v21 = vld [vmem:[%s0] sm:$0xff]
    %v22 = vld [vmem:[%s0 + $0x8] sm:$0xff]
    %v23 = vld [vmem:[%s0 + $0x10] sm:$0xff]
    %v24 = vld [vmem:[%s0 + $0x18] sm:$0xff]
    %v25 = vld [vmem:[%s0 + $0x20] sm:$0xff]
    %v26 = vld [vmem:[%s0 + $0x28] sm:$0xff]
    %v27 = vld [vmem:[%s0 + $0x30] sm:$0xff]
    %v28 = vld [vmem:[%s0 + $0x38] sm:$0xff]
    %v29 = vld [vmem:[%s0 + $0x40] sm:$0xff]
    %v30 = vld [vmem:[%s0 + $0x48] sm:$0xff]
    %v31 = vld [vmem:[%s0 + $0x50] sm:$0xff]
    %v32 = vld [vmem:[%s0 + $0x58] sm:$0xff]
    %v33 = vld [vmem:[%s0 + $0x60] sm:$0xff]
    %v34 = vld [vmem:[%s0 + $0x68] sm:$0xff]
    %v35 = vld [vmem:[%s0 + $0x70] sm:$0xff]
    %v36 = vld [vmem:[%s0 + $0x78] sm:$0xff]
    %v37 = vld [vmem:[%s1] sm:$0xff]
    %v38 = vld [vmem:[%s1 + $0x8] sm:$0xff]
    %v39 = vld [vmem:[%s1 + $0x10] sm:$0xff]
    %v40 = vld [vmem:[%s1 + $0x18] sm:$0xff]
    %v41 = vld [vmem:[%s1 + $0x20] sm:$0xff]
    %v42 = vld [vmem:[%s1 + $0x28] sm:$0xff]
    %v43 = vld [vmem:[%s1 + $0x30] sm:$0xff]
    %v44 = vld [vmem:[%s1 + $0x38] sm:$0xff]
    %v45 = vld [vmem:[%s1 + $0x40] sm:$0xff]
    %v46 = vld [vmem:[%s1 + $0x48] sm:$0xff]
    %v47 = vld [vmem:[%s1 + $0x50] sm:$0xff]
    %v48 = vld [vmem:[%s1 + $0x58] sm:$0xff]
    %v49 = vld [vmem:[%s1 + $0x60] sm:$0xff]
    %v50 = vld [vmem:[%s1 + $0x68] sm:$0xff]
    %v51 = vld [vmem:[%s1 + $0x70] sm:$0xff]
    %v52 = vld [vmem:[%s1 + $0x78] sm:$0xff]
    %vm53 = vcmp.ne.f32.partialorder %v37, 0.0
    %vm54 = vcmp.ne.f32.partialorder %v38, 0.0
    %vm55 = vcmp.ne.f32.partialorder %v39, 0.0
    %vm56 = vcmp.ne.f32.partialorder %v40, 0.0
    %vm57 = vcmp.ne.f32.partialorder %v41, 0.0
    %vm58 = vcmp.ne.f32.partialorder %v42, 0.0
    %vm59 = vcmp.ne.f32.partialorder %v43, 0.0
    %vm60 = vcmp.ne.f32.partialorder %v44, 0.0
    %vm61 = vcmp.ne.f32.partialorder %v45, 0.0
    %vm62 = vcmp.ne.f32.partialorder %v46, 0.0
    %vm63 = vcmp.ne.f32.partialorder %v47, 0.0
    %vm64 = vcmp.ne.f32.partialorder %v48, 0.0
    %vm65 = vcmp.ne.f32.partialorder %v49, 0.0
    %vm66 = vcmp.ne.f32.partialorder %v50, 0.0
    %vm67 = vcmp.ne.f32.partialorder %v51, 0.0
    %vm68 = vcmp.ne.f32.partialorder %v52, 0.0
    %v69 = vsel %vm53, 1, 0
    %v70 = vsel %vm54, 1, 0
    %v71 = vsel %vm55, 1, 0
    %v72 = vsel %vm56, 1, 0
    %v73 = vsel %vm57, 1, 0
    %v74 = vsel %vm58, 1, 0
    %v75 = vsel %vm59, 1, 0
    %v76 = vsel %vm60, 1, 0
    %v77 = vsel %vm61, 1, 0
    %v78 = vsel %vm62, 1, 0
    %v79 = vsel %vm63, 1, 0
    %v80 = vsel %vm64, 1, 0
    %v81 = vsel %vm65, 1, 0
    %v82 = vsel %vm66, 1, 0
    %v83 = vsel %vm67, 1, 0
    %v84 = vsel %vm68, 1, 0
    %v85 = vcvt.s32.f32 %v69
    %v86 = vcvt.s32.f32 %v70
    %v87 = vcvt.s32.f32 %v71
    %v88 = vcvt.s32.f32 %v72
    %v89 = vcvt.s32.f32 %v73
    %v90 = vcvt.s32.f32 %v74
    %v91 = vcvt.s32.f32 %v75
    %v92 = vcvt.s32.f32 %v76
    %v93 = vcvt.s32.f32 %v77
    %v94 = vcvt.s32.f32 %v78
    %v95 = vcvt.s32.f32 %v79
    %v96 = vcvt.s32.f32 %v80
    %v97 = vcvt.s32.f32 %v81
    %v98 = vcvt.s32.f32 %v82
    %v99 = vcvt.s32.f32 %v83
    %v100 = vcvt.s32.f32 %v84
    %vm101 = vcmask 130048
    %v102 = vsel %vm101, %v85, 0.0
    %v103 = vsel %vm101, %v86, 0.0
    %v104 = vadd.f32 %v102, %v103
    %v105 = vrot.slane %v104, 4
    %v106 = vadd.f32 %v104, %v105
    %v107 = vrot.slane %v106, 2
    %v108 = vadd.f32 %v106, %v107
    %v109 = vrot.slane %v108, 1
    %v110 = vadd.f32 %v108, %v109
    %v111 = vsel %vm101, %v87, 0.0
    %v112 = vsel %vm101, %v88, 0.0
    %v113 = vadd.f32 %v111, %v112
    %v114 = vrot.slane %v113, 4
    %v115 = vadd.f32 %v113, %v114
    %v116 = vrot.slane %v115, 2
    %v117 = vadd.f32 %v115, %v116
    %v118 = vrot.slane %v117, 1
    %v119 = vadd.f32 %v117, %v118
    %v120 = vsel %vm101, %v89, 0.0
    %v121 = vsel %vm101, %v90, 0.0
    %v122 = vadd.f32 %v120, %v121
    %v123 = vrot.slane %v122, 4
    %v124 = vadd.f32 %v122, %v123
    %v125 = vrot.slane %v124, 2
    %v126 = vadd.f32 %v124, %v125
    %v127 = vrot.slane %v126, 1
    %v128 = vadd.f32 %v126, %v127
    %v129 = vsel %vm101, %v91, 0.0
    %v130 = vsel %vm101, %v92, 0.0
    %v131 = vadd.f32 %v129, %v130
    %v132 = vrot.slane %v131, 4
    %v133 = vadd.f32 %v131, %v132
    %v134 = vrot.slane %v133, 2
    %v135 = vadd.f32 %v133, %v134
    %v136 = vrot.slane %v135, 1
    %v137 = vadd.f32 %v135, %v136
    %v138 = vsel %vm101, %v93, 0.0
    %v139 = vsel %vm101, %v94, 0.0
    %v140 = vadd.f32 %v138, %v139
    %v141 = vrot.slane %v140, 4
    %v142 = vadd.f32 %v140, %v141
    %v143 = vrot.slane %v142, 2
    %v144 = vadd.f32 %v142, %v143
    %v145 = vrot.slane %v144, 1
    %v146 = vadd.f32 %v144, %v145
    %v147 = vsel %vm101, %v95, 0.0
    %v148 = vsel %vm101, %v96, 0.0
    %v149 = vadd.f32 %v147, %v148
    %v150 = vrot.slane %v149, 4
    %v151 = vadd.f32 %v149, %v150
    %v152 = vrot.slane %v151, 2
    %v153 = vadd.f32 %v151, %v152
    %v154 = vrot.slane %v153, 1
    %v155 = vadd.f32 %v153, %v154
    %v156 = vsel %vm101, %v97, 0.0
    %v157 = vsel %vm101, %v98, 0.0
    %v158 = vadd.f32 %v156, %v157
    %v159 = vrot.slane %v158, 4
    %v160 = vadd.f32 %v158, %v159
    %v161 = vrot.slane %v160, 2
    %v162 = vadd.f32 %v160, %v161
    %v163 = vrot.slane %v162, 1
    %v164 = vadd.f32 %v162, %v163
    %v165 = vsel %vm101, %v99, 0.0
    %v166 = vsel %vm101, %v100, 0.0
    %v167 = vadd.f32 %v165, %v166
    %v168 = vrot.slane %v167, 4
    %v169 = vadd.f32 %v167, %v168
    %v170 = vrot.slane %v169, 2
    %v171 = vadd.f32 %v169, %v170
    %v172 = vrot.slane %v171, 1
    %v173 = vadd.f32 %v171, %v172
    %v174 = vmax.f32 %v110, 1.0
    %v175 = vmax.f32 %v119, 1.0
    %v176 = vmax.f32 %v128, 1.0
    %v177 = vmax.f32 %v137, 1.0
    %v178 = vmax.f32 %v146, 1.0
    %v179 = vmax.f32 %v155, 1.0
    %v180 = vmax.f32 %v164, 1.0
    %v181 = vmax.f32 %v173, 1.0
    %v182 = vrcp.pop %v174
    %v183 = vrcp.pop %v175
    %v184 = vrcp.pop %v176
    %v185 = vrcp.pop %v177
    %v186 = vrcp.pop %v178
    %v187 = vrcp.pop %v179
    %v188 = vrcp.pop %v180
    %v189 = vrcp.pop %v181
    %v190 = vmul.f32 %v85, %v182
    %v191 = vmul.f32 %v86, %v182
    %v192 = vmul.f32 %v87, %v183
    %v193 = vmul.f32 %v88, %v183
    %v194 = vmul.f32 %v89, %v184
    %v195 = vmul.f32 %v90, %v184
    %v196 = vmul.f32 %v91, %v185
    %v197 = vmul.f32 %v92, %v185
    %v198 = vmul.f32 %v93, %v186
    %v199 = vmul.f32 %v94, %v186
    %v200 = vmul.f32 %v95, %v187
    %v201 = vmul.f32 %v96, %v187
    %v202 = vmul.f32 %v97, %v188
    %v203 = vmul.f32 %v98, %v188
    %v204 = vmul.f32 %v99, %v189
    %v205 = vmul.f32 %v100, %v189
    %222 = vrot.lane.b32.xlu0 %v190, 16
    %v223 = vpop.permute.xlu0 %222
    %224 = vrot.lane.b32.xlu0 %v191, 16
    %v225 = vpop.permute.xlu0 %224
    %226 = vrot.lane.b32.xlu0 %v192, 16
    %v227 = vpop.permute.xlu0 %226
    %228 = vrot.lane.b32.xlu0 %v193, 16
    %v229 = vpop.permute.xlu0 %228
    %230 = vrot.lane.b32.xlu0 %v194, 16
    %v231 = vpop.permute.xlu0 %230
    %232 = vrot.lane.b32.xlu0 %v195, 16
    %v233 = vpop.permute.xlu0 %232
    %234 = vrot.lane.b32.xlu0 %v196, 16
    %v235 = vpop.permute.xlu0 %234
    %236 = vrot.lane.b32.xlu0 %v197, 16
    %v237 = vpop.permute.xlu0 %236
    %238 = vrot.lane.b32.xlu0 %v198, 16
    %v239 = vpop.permute.xlu0 %238
    %240 = vrot.lane.b32.xlu0 %v199, 16
    %v241 = vpop.permute.xlu0 %240
    %242 = vrot.lane.b32.xlu0 %v200, 16
    %v243 = vpop.permute.xlu0 %242
    %244 = vrot.lane.b32.xlu0 %v201, 16
    %v245 = vpop.permute.xlu0 %244
    %246 = vrot.lane.b32.xlu0 %v202, 16
    %v247 = vpop.permute.xlu0 %246
    %248 = vrot.lane.b32.xlu0 %v203, 16
    %v249 = vpop.permute.xlu0 %248
    %250 = vrot.lane.b32.xlu0 %v204, 16
    %v251 = vpop.permute.xlu0 %250
    %252 = vrot.lane.b32.xlu0 %v205, 16
    %v253 = vpop.permute.xlu0 %252
    %270 = vrot.lane.b32.xlu0 %v190, 32
    %v271 = vpop.permute.xlu0 %270
    %272 = vrot.lane.b32.xlu0 %v191, 32
    %v273 = vpop.permute.xlu0 %272
    %274 = vrot.lane.b32.xlu0 %v192, 32
    %v275 = vpop.permute.xlu0 %274
    %276 = vrot.lane.b32.xlu0 %v193, 32
    %v277 = vpop.permute.xlu0 %276
    %278 = vrot.lane.b32.xlu0 %v194, 32
    %v279 = vpop.permute.xlu0 %278
    %280 = vrot.lane.b32.xlu0 %v195, 32
    %v281 = vpop.permute.xlu0 %280
    %282 = vrot.lane.b32.xlu0 %v196, 32
    %v283 = vpop.permute.xlu0 %282
    %284 = vrot.lane.b32.xlu0 %v197, 32
    %v285 = vpop.permute.xlu0 %284
    %286 = vrot.lane.b32.xlu0 %v198, 32
    %v287 = vpop.permute.xlu0 %286
    %288 = vrot.lane.b32.xlu0 %v199, 32
    %v289 = vpop.permute.xlu0 %288
    %290 = vrot.lane.b32.xlu0 %v200, 32
    %v291 = vpop.permute.xlu0 %290
    %292 = vrot.lane.b32.xlu0 %v201, 32
    %v293 = vpop.permute.xlu0 %292
    %294 = vrot.lane.b32.xlu0 %v202, 32
    %v295 = vpop.permute.xlu0 %294
    %296 = vrot.lane.b32.xlu0 %v203, 32
    %v297 = vpop.permute.xlu0 %296
    %298 = vrot.lane.b32.xlu0 %v204, 32
    %v299 = vpop.permute.xlu0 %298
    %300 = vrot.lane.b32.xlu0 %v205, 32
    %v301 = vpop.permute.xlu0 %300
    %318 = vrot.lane.b32.xlu0 %v190, 48
    %v319 = vpop.permute.xlu0 %318
    %320 = vrot.lane.b32.xlu0 %v191, 48
    %v321 = vpop.permute.xlu0 %320
    %322 = vrot.lane.b32.xlu0 %v192, 48
    %v323 = vpop.permute.xlu0 %322
    %324 = vrot.lane.b32.xlu0 %v193, 48
    %v325 = vpop.permute.xlu0 %324
    %326 = vrot.lane.b32.xlu0 %v194, 48
    %v327 = vpop.permute.xlu0 %326
    %328 = vrot.lane.b32.xlu0 %v195, 48
    %v329 = vpop.permute.xlu0 %328
    %330 = vrot.lane.b32.xlu0 %v196, 48
    %v331 = vpop.permute.xlu0 %330
    %332 = vrot.lane.b32.xlu0 %v197, 48
    %v333 = vpop.permute.xlu0 %332
    %334 = vrot.lane.b32.xlu0 %v198, 48
    %v335 = vpop.permute.xlu0 %334
    %336 = vrot.lane.b32.xlu0 %v199, 48
    %v337 = vpop.permute.xlu0 %336
    %338 = vrot.lane.b32.xlu0 %v200, 48
    %v339 = vpop.permute.xlu0 %338
    %340 = vrot.lane.b32.xlu0 %v201, 48
    %v341 = vpop.permute.xlu0 %340
    %342 = vrot.lane.b32.xlu0 %v202, 48
    %v343 = vpop.permute.xlu0 %342
    %344 = vrot.lane.b32.xlu0 %v203, 48
    %v345 = vpop.permute.xlu0 %344
    %346 = vrot.lane.b32.xlu0 %v204, 48
    %v347 = vpop.permute.xlu0 %346
    %348 = vrot.lane.b32.xlu0 %v205, 48
    %v349 = vpop.permute.xlu0 %348
    %366 = vrot.lane.b32.xlu0 %v190, 64
    %v367 = vpop.permute.xlu0 %366
    %368 = vrot.lane.b32.xlu0 %v191, 64
    %v369 = vpop.permute.xlu0 %368
    %370 = vrot.lane.b32.xlu0 %v192, 64
    %v371 = vpop.permute.xlu0 %370
    %372 = vrot.lane.b32.xlu0 %v193, 64
    %v373 = vpop.permute.xlu0 %372
    %374 = vrot.lane.b32.xlu0 %v194, 64
    %v375 = vpop.permute.xlu0 %374
    %376 = vrot.lane.b32.xlu0 %v195, 64
    %v377 = vpop.permute.xlu0 %376
    %378 = vrot.lane.b32.xlu0 %v196, 64
    %v379 = vpop.permute.xlu0 %378
    %380 = vrot.lane.b32.xlu0 %v197, 64
    %v381 = vpop.permute.xlu0 %380
    %382 = vrot.lane.b32.xlu0 %v198, 64
    %v383 = vpop.permute.xlu0 %382
    %384 = vrot.lane.b32.xlu0 %v199, 64
    %v385 = vpop.permute.xlu0 %384
    %386 = vrot.lane.b32.xlu0 %v200, 64
    %v387 = vpop.permute.xlu0 %386
    %388 = vrot.lane.b32.xlu0 %v201, 64
    %v389 = vpop.permute.xlu0 %388
    %390 = vrot.lane.b32.xlu0 %v202, 64
    %v391 = vpop.permute.xlu0 %390
    %392 = vrot.lane.b32.xlu0 %v203, 64
    %v393 = vpop.permute.xlu0 %392
    %394 = vrot.lane.b32.xlu0 %v204, 64
    %v395 = vpop.permute.xlu0 %394
    %396 = vrot.lane.b32.xlu0 %v205, 64
    %v397 = vpop.permute.xlu0 %396
    %414 = vrot.lane.b32.xlu0 %v190, 80
    %v415 = vpop.permute.xlu0 %414
    %416 = vrot.lane.b32.xlu0 %v191, 80
    %v417 = vpop.permute.xlu0 %416
    %418 = vrot.lane.b32.xlu0 %v192, 80
    %v419 = vpop.permute.xlu0 %418
    %420 = vrot.lane.b32.xlu0 %v193, 80
    %v421 = vpop.permute.xlu0 %420
    %422 = vrot.lane.b32.xlu0 %v194, 80
    %v423 = vpop.permute.xlu0 %422
    %424 = vrot.lane.b32.xlu0 %v195, 80
    %v425 = vpop.permute.xlu0 %424
    %426 = vrot.lane.b32.xlu0 %v196, 80
    %v427 = vpop.permute.xlu0 %426
    %428 = vrot.lane.b32.xlu0 %v197, 80
    %v429 = vpop.permute.xlu0 %428
    %430 = vrot.lane.b32.xlu0 %v198, 80
    %v431 = vpop.permute.xlu0 %430
    %432 = vrot.lane.b32.xlu0 %v199, 80
    %v433 = vpop.permute.xlu0 %432
    %434 = vrot.lane.b32.xlu0 %v200, 80
    %v435 = vpop.permute.xlu0 %434
    %436 = vrot.lane.b32.xlu0 %v201, 80
    %v437 = vpop.permute.xlu0 %436
    %438 = vrot.lane.b32.xlu0 %v202, 80
    %v439 = vpop.permute.xlu0 %438
    %440 = vrot.lane.b32.xlu0 %v203, 80
    %v441 = vpop.permute.xlu0 %440
    %442 = vrot.lane.b32.xlu0 %v204, 80
    %v443 = vpop.permute.xlu0 %442
    %444 = vrot.lane.b32.xlu0 %v205, 80
    %v445 = vpop.permute.xlu0 %444
    %462 = vrot.lane.b32.xlu0 %v190, 96
    %v463 = vpop.permute.xlu0 %462
    %464 = vrot.lane.b32.xlu0 %v191, 96
    %v465 = vpop.permute.xlu0 %464
    %466 = vrot.lane.b32.xlu0 %v192, 96
    %v467 = vpop.permute.xlu0 %466
    %468 = vrot.lane.b32.xlu0 %v193, 96
    %v469 = vpop.permute.xlu0 %468
    %470 = vrot.lane.b32.xlu0 %v194, 96
    %v471 = vpop.permute.xlu0 %470
    %472 = vrot.lane.b32.xlu0 %v195, 96
    %v473 = vpop.permute.xlu0 %472
    %474 = vrot.lane.b32.xlu0 %v196, 96
    %v475 = vpop.permute.xlu0 %474
    %476 = vrot.lane.b32.xlu0 %v197, 96
    %v477 = vpop.permute.xlu0 %476
    %478 = vrot.lane.b32.xlu0 %v198, 96
    %v479 = vpop.permute.xlu0 %478
    %480 = vrot.lane.b32.xlu0 %v199, 96
    %v481 = vpop.permute.xlu0 %480
    %482 = vrot.lane.b32.xlu0 %v200, 96
    %v483 = vpop.permute.xlu0 %482
    %484 = vrot.lane.b32.xlu0 %v201, 96
    %v485 = vpop.permute.xlu0 %484
    %486 = vrot.lane.b32.xlu0 %v202, 96
    %v487 = vpop.permute.xlu0 %486
    %488 = vrot.lane.b32.xlu0 %v203, 96
    %v489 = vpop.permute.xlu0 %488
    %490 = vrot.lane.b32.xlu0 %v204, 96
    %v491 = vpop.permute.xlu0 %490
    %492 = vrot.lane.b32.xlu0 %v205, 96
    %v493 = vpop.permute.xlu0 %492
    %510 = vrot.lane.b32.xlu0 %v190, 112
    %v511 = vpop.permute.xlu0 %510
    %512 = vrot.lane.b32.xlu0 %v191, 112
    %v513 = vpop.permute.xlu0 %512
    %514 = vrot.lane.b32.xlu0 %v192, 112
    %v515 = vpop.permute.xlu0 %514
    %516 = vrot.lane.b32.xlu0 %v193, 112
    %v517 = vpop.permute.xlu0 %516
    %518 = vrot.lane.b32.xlu0 %v194, 112
    %v519 = vpop.permute.xlu0 %518
    %520 = vrot.lane.b32.xlu0 %v195, 112
    %v521 = vpop.permute.xlu0 %520
    %522 = vrot.lane.b32.xlu0 %v196, 112
    %v523 = vpop.permute.xlu0 %522
    %524 = vrot.lane.b32.xlu0 %v197, 112
    %v525 = vpop.permute.xlu0 %524
    %526 = vrot.lane.b32.xlu0 %v198, 112
    %v527 = vpop.permute.xlu0 %526
    %528 = vrot.lane.b32.xlu0 %v199, 112
    %v529 = vpop.permute.xlu0 %528
    %530 = vrot.lane.b32.xlu0 %v200, 112
    %v531 = vpop.permute.xlu0 %530
    %532 = vrot.lane.b32.xlu0 %v201, 112
    %v533 = vpop.permute.xlu0 %532
    %534 = vrot.lane.b32.xlu0 %v202, 112
    %v535 = vpop.permute.xlu0 %534
    %536 = vrot.lane.b32.xlu0 %v203, 112
    %v537 = vpop.permute.xlu0 %536
    %538 = vrot.lane.b32.xlu0 %v204, 112
    %v539 = vpop.permute.xlu0 %538
    %540 = vrot.lane.b32.xlu0 %v205, 112
    %v541 = vpop.permute.xlu0 %540
    %v558 = vsel %vm101, %v190, %v223
    %v559 = vsel %vm101, %v191, %v225
    %v560 = vsel %vm101, %v192, %v227
    %v561 = vsel %vm101, %v193, %v229
    %v562 = vsel %vm101, %v194, %v231
    %v563 = vsel %vm101, %v195, %v233
    %v564 = vsel %vm101, %v196, %v235
    %v565 = vsel %vm101, %v197, %v237
    %v566 = vsel %vm101, %v198, %v239
    %v567 = vsel %vm101, %v199, %v241
    %v568 = vsel %vm101, %v200, %v243
    %v569 = vsel %vm101, %v201, %v245
    %v570 = vsel %vm101, %v202, %v247
    %v571 = vsel %vm101, %v203, %v249
    %v572 = vsel %vm101, %v204, %v251
    %v573 = vsel %vm101, %v205, %v253
    %vm574 = vcmask 261120
    %v575 = vsel %vm574, %v558, %v271
    %v576 = vsel %vm574, %v559, %v273
    %v577 = vsel %vm574, %v560, %v275
    %v578 = vsel %vm574, %v561, %v277
    %v579 = vsel %vm574, %v562, %v279
    %v580 = vsel %vm574, %v563, %v281
    %v581 = vsel %vm574, %v564, %v283
    %v582 = vsel %vm574, %v565, %v285
    %v583 = vsel %vm574, %v566, %v287
    %v584 = vsel %vm574, %v567, %v289
    %v585 = vsel %vm574, %v568, %v291
    %v586 = vsel %vm574, %v569, %v293
    %v587 = vsel %vm574, %v570, %v295
    %v588 = vsel %vm574, %v571, %v297
    %v589 = vsel %vm574, %v572, %v299
    %v590 = vsel %vm574, %v573, %v301
    %vm591 = vcmask 392192
    %v592 = vsel %vm591, %v575, %v319
    %v593 = vsel %vm591, %v576, %v321
    %v594 = vsel %vm591, %v577, %v323
    %v595 = vsel %vm591, %v578, %v325
    %v596 = vsel %vm591, %v579, %v327
    %v597 = vsel %vm591, %v580, %v329
    %v598 = vsel %vm591, %v581, %v331
    %v599 = vsel %vm591, %v582, %v333
    %v600 = vsel %vm591, %v583, %v335
    %v601 = vsel %vm591, %v584, %v337
    %v602 = vsel %vm591, %v585, %v339
    %v603 = vsel %vm591, %v586, %v341
    %v604 = vsel %vm591, %v587, %v343
    %v605 = vsel %vm591, %v588, %v345
    %v606 = vsel %vm591, %v589, %v347
    %v607 = vsel %vm591, %v590, %v349
    %vm608 = vcmask 523264
    %v609 = vsel %vm608, %v592, %v367
    %v610 = vsel %vm608, %v593, %v369
    %v611 = vsel %vm608, %v594, %v371
    %v612 = vsel %vm608, %v595, %v373
    %v613 = vsel %vm608, %v596, %v375
    %v614 = vsel %vm608, %v597, %v377
    %v615 = vsel %vm608, %v598, %v379
    %v616 = vsel %vm608, %v599, %v381
    %v617 = vsel %vm608, %v600, %v383
    %v618 = vsel %vm608, %v601, %v385
    %v619 = vsel %vm608, %v602, %v387
    %v620 = vsel %vm608, %v603, %v389
    %v621 = vsel %vm608, %v604, %v391
    %v622 = vsel %vm608, %v605, %v393
    %v623 = vsel %vm608, %v606, %v395
    %v624 = vsel %vm608, %v607, %v397
    %vm625 = vcmask 654336
    %v626 = vsel %vm625, %v609, %v415
    %v627 = vsel %vm625, %v610, %v417
    %v628 = vsel %vm625, %v611, %v419
    %v629 = vsel %vm625, %v612, %v421
    %v630 = vsel %vm625, %v613, %v423
    %v631 = vsel %vm625, %v614, %v425
    %v632 = vsel %vm625, %v615, %v427
    %v633 = vsel %vm625, %v616, %v429
    %v634 = vsel %vm625, %v617, %v431
    %v635 = vsel %vm625, %v618, %v433
    %v636 = vsel %vm625, %v619, %v435
    %v637 = vsel %vm625, %v620, %v437
    %v638 = vsel %vm625, %v621, %v439
    %v639 = vsel %vm625, %v622, %v441
    %v640 = vsel %vm625, %v623, %v443
    %v641 = vsel %vm625, %v624, %v445
    %vm642 = vcmask 785408
    %v643 = vsel %vm642, %v626, %v463
    %v644 = vsel %vm642, %v627, %v465
    %v645 = vsel %vm642, %v628, %v467
    %v646 = vsel %vm642, %v629, %v469
    %v647 = vsel %vm642, %v630, %v471
    %v648 = vsel %vm642, %v631, %v473
    %v649 = vsel %vm642, %v632, %v475
    %v650 = vsel %vm642, %v633, %v477
    %v651 = vsel %vm642, %v634, %v479
    %v652 = vsel %vm642, %v635, %v481
    %v653 = vsel %vm642, %v636, %v483
    %v654 = vsel %vm642, %v637, %v485
    %v655 = vsel %vm642, %v638, %v487
    %v656 = vsel %vm642, %v639, %v489
    %v657 = vsel %vm642, %v640, %v491
    %v658 = vsel %vm642, %v641, %v493
    %vm659 = vcmask 916480
    %v660 = vsel %vm659, %v643, %v511
    %v661 = vsel %vm659, %v644, %v513
    %v662 = vsel %vm659, %v645, %v515
    %v663 = vsel %vm659, %v646, %v517
    %v664 = vsel %vm659, %v647, %v519
    %v665 = vsel %vm659, %v648, %v521
    %v666 = vsel %vm659, %v649, %v523
    %v667 = vsel %vm659, %v650, %v525
    %v668 = vsel %vm659, %v651, %v527
    %v669 = vsel %vm659, %v652, %v529
    %v670 = vsel %vm659, %v653, %v531
    %v671 = vsel %vm659, %v654, %v533
    %v672 = vsel %vm659, %v655, %v535
    %v673 = vsel %vm659, %v656, %v537
    %v674 = vsel %vm659, %v657, %v539
    %v675 = vsel %vm659, %v658, %v541
    %v676 = vld [vmem:[%s2] sm:$0xff]
    %v677 = vld [vmem:[%s2 + $0x8] sm:$0xff]
    %v678 = vld [vmem:[%s2 + $0x10] sm:$0xff]
    %v679 = vld [vmem:[%s2 + $0x18] sm:$0xff]
    %v680 = vld [vmem:[%s2 + $0x20] sm:$0xff]
    %v681 = vld [vmem:[%s2 + $0x28] sm:$0xff]
    %v682 = vld [vmem:[%s2 + $0x30] sm:$0xff]
    %v683 = vld [vmem:[%s2 + $0x38] sm:$0xff]
    %v684 = vld [vmem:[%s2 + $0x40] sm:$0xff]
    %v685 = vld [vmem:[%s2 + $0x48] sm:$0xff]
    %v686 = vld [vmem:[%s2 + $0x50] sm:$0xff]
    %v687 = vld [vmem:[%s2 + $0x58] sm:$0xff]
    %v688 = vld [vmem:[%s2 + $0x60] sm:$0xff]
    %v689 = vld [vmem:[%s2 + $0x68] sm:$0xff]
    %v690 = vld [vmem:[%s2 + $0x70] sm:$0xff]
    %v691 = vld [vmem:[%s2 + $0x78] sm:$0xff]
    %v692 = vmul.f32 %v660, %v676
    %v693 = vmul.f32 %v661, %v677
    %v694 = vmul.f32 %v662, %v678
    %v695 = vmul.f32 %v663, %v679
    %v696 = vmul.f32 %v664, %v680
    %v697 = vmul.f32 %v665, %v681
    %v698 = vmul.f32 %v666, %v682
    %v699 = vmul.f32 %v667, %v683
    %v700 = vmul.f32 %v668, %v684
    %v701 = vmul.f32 %v669, %v685
    %v702 = vmul.f32 %v670, %v686
    %v703 = vmul.f32 %v671, %v687
    %v704 = vmul.f32 %v672, %v688
    %v705 = vmul.f32 %v673, %v689
    %v706 = vmul.f32 %v674, %v690
    %v707 = vmul.f32 %v675, %v691
    %708 = vxpose.xlu0.b32.start [1/16] %v692, 128
    %709 = vxpose.xlu0.b32.cont [2/16] %v693, 128
    %710 = vxpose.xlu0.b32.cont [3/16] %v694, 128
    %711 = vxpose.xlu0.b32.cont [4/16] %v695, 128
    %712 = vxpose.xlu0.b32.cont [5/16] %v696, 128
    %713 = vxpose.xlu0.b32.cont [6/16] %v697, 128
    %714 = vxpose.xlu0.b32.cont [7/16] %v698, 128
    %715 = vxpose.xlu0.b32.cont [8/16] %v699, 128
    %716 = vxpose.xlu0.b32.cont [9/16] %v700, 128
    %717 = vxpose.xlu0.b32.cont [10/16] %v701, 128
    %718 = vxpose.xlu0.b32.cont [11/16] %v702, 128
    %719 = vxpose.xlu0.b32.cont [12/16] %v703, 128
    %720 = vxpose.xlu0.b32.cont [13/16] %v704, 128
    %721 = vxpose.xlu0.b32.cont [14/16] %v705, 128
    %722 = vxpose.xlu0.b32.cont [15/16] %v706, 128
    %723 = vxpose.xlu0.b32.end [16/16] %v707, 128
    %v724 = vpop.trf.xlu0
    %v725 = vpop.trf.xlu0
    %v726 = vpop.trf.xlu0
    %v727 = vpop.trf.xlu0
    %v728 = vpop.trf.xlu0
    %v729 = vpop.trf.xlu0
    %v730 = vpop.trf.xlu0
    %v731 = vpop.trf.xlu0
    %v732 = vpop.trf.xlu0
    %v733 = vpop.trf.xlu0
    %v734 = vpop.trf.xlu0
    %v735 = vpop.trf.xlu0
    %v736 = vpop.trf.xlu0
    %v737 = vpop.trf.xlu0
    %v738 = vpop.trf.xlu0
    %v739 = vpop.trf.xlu0
    %740 = vmatprep.subr.mxu0 0.0
    %741 = vmatpush1.msra.mxu0 %v36
    %742 = vmatprep.subr.mxu0 0.0
    %743 = vmatpush1.msra.mxu0 %v35
    %744 = vmatprep.subr.mxu0 0.0
    %745 = vmatpush1.msra.mxu0 %v34
    %746 = vmatprep.subr.mxu0 0.0
    %747 = vmatpush1.msra.mxu0 %v33
    %748 = vmatprep.subr.mxu0 0.0
    %749 = vmatpush1.msra.mxu0 %v32
    %750 = vmatprep.subr.mxu0 0.0
    %751 = vmatpush1.msra.mxu0 %v31
    %752 = vmatprep.subr.mxu0 0.0
    %753 = vmatpush1.msra.mxu0 %v30
    %754 = vmatprep.subr.mxu0 0.0
    %755 = vmatpush1.msra.mxu0 %v29
    %756 = vmatprep.subr.mxu0 0.0
    %757 = vmatpush1.msra.mxu0 %v28
    %758 = vmatprep.subr.mxu0 0.0
    %759 = vmatpush1.msra.mxu0 %v27
    %760 = vmatprep.subr.mxu0 0.0
    %761 = vmatpush1.msra.mxu0 %v26
    %762 = vmatprep.subr.mxu0 0.0
    %763 = vmatpush1.msra.mxu0 %v25
    %764 = vmatprep.subr.mxu0 0.0
    %765 = vmatpush1.msra.mxu0 %v24
    %766 = vmatprep.subr.mxu0 0.0
    %767 = vmatpush1.msra.mxu0 %v23
    %768 = vmatprep.subr.mxu0 0.0
    %769 = vmatpush1.msra.mxu0 %v22
    %770 = vmatprep.subr.mxu0 0.0
    %771 = vmatpush1.msra.mxu0 %v21
    %772 = vmatprep.subr.mxu0 0.0
    %773 = vmatpush2.msra.mxu0 0.0
    %774 = vmatprep.subr.mxu0 0.0
    %775 = vmatpush2.msra.mxu0 0.0
    %776 = vmatprep.subr.mxu0 0.0
    %777 = vmatpush2.msra.mxu0 0.0
    %778 = vmatprep.subr.mxu0 0.0
    %779 = vmatpush2.msra.mxu0 0.0
    %780 = vmatprep.subr.mxu0 0.0
    %781 = vmatpush2.msra.mxu0 0.0
    %782 = vmatprep.subr.mxu0 0.0
    %783 = vmatpush2.msra.mxu0 0.0
    %784 = vmatprep.subr.mxu0 0.0
    %785 = vmatpush2.msra.mxu0 0.0
    %786 = vmatprep.subr.mxu0 0.0
    %787 = vmatpush2.msra.mxu0 0.0
    %788 = vmatprep.subr.mxu0 0.0
    %789 = vmatpush2.msra.mxu0 0.0
    %790 = vmatprep.subr.mxu0 0.0
    %791 = vmatpush2.msra.mxu0 0.0
    %792 = vmatprep.subr.mxu0 0.0
    %793 = vmatpush2.msra.mxu0 0.0
    %794 = vmatprep.subr.mxu0 0.0
    %795 = vmatpush2.msra.mxu0 0.0
    %796 = vmatprep.subr.mxu0 0.0
    %797 = vmatpush2.msra.mxu0 0.0
    %798 = vmatprep.subr.mxu0 0.0
    %799 = vmatpush2.msra.mxu0 0.0
    %800 = vmatprep.subr.mxu0 0.0
    %801 = vmatpush2.msra.mxu0 0.0
    %802 = vmatprep.subr.mxu0 0.0
    %803 = vmatpush2.msra.mxu0 0.0
    %804 = vmatprep.mubr.f32.mxu0 0.0
    %805 = vmatmul.mubr.f32.gmra.mxu0 %v724
    %v806 = vpop.f32.mrf.mxu0
    %v807 = vadd.f32 0.0, %v806
    %v808 = vpop.f32.mrf.mxu0
    %809 = vmatprep.mubr.f32.mxu0 0.0
    %810 = vmatmul.mubr.f32.gmra.mxu0 %v725
    %v811 = vpop.f32.mrf.mxu0
    %v812 = vadd.f32 0.0, %v811
    %v813 = vpop.f32.mrf.mxu0
    %814 = vmatprep.mubr.f32.mxu0 0.0
    %815 = vmatmul.mubr.f32.gmra.mxu0 %v726
    %v816 = vpop.f32.mrf.mxu0
    %v817 = vadd.f32 0.0, %v816
    %v818 = vpop.f32.mrf.mxu0
    %819 = vmatprep.mubr.f32.mxu0 0.0
    %820 = vmatmul.mubr.f32.gmra.mxu0 %v727
    %v821 = vpop.f32.mrf.mxu0
    %v822 = vadd.f32 0.0, %v821
    %v823 = vpop.f32.mrf.mxu0
    %824 = vmatprep.mubr.f32.mxu0 0.0
    %825 = vmatmul.mubr.f32.gmra.mxu0 %v728
    %v826 = vpop.f32.mrf.mxu0
    %v827 = vadd.f32 0.0, %v826
    %v828 = vpop.f32.mrf.mxu0
    %829 = vmatprep.mubr.f32.mxu0 0.0
    %830 = vmatmul.mubr.f32.gmra.mxu0 %v729
    %v831 = vpop.f32.mrf.mxu0
    %v832 = vadd.f32 0.0, %v831
    %v833 = vpop.f32.mrf.mxu0
    %834 = vmatprep.mubr.f32.mxu0 0.0
    %835 = vmatmul.mubr.f32.gmra.mxu0 %v730
    %v836 = vpop.f32.mrf.mxu0
    %v837 = vadd.f32 0.0, %v836
    %v838 = vpop.f32.mrf.mxu0
    %839 = vmatprep.mubr.f32.mxu0 0.0
    %840 = vmatmul.mubr.f32.gmra.mxu0 %v731
    %v841 = vpop.f32.mrf.mxu0
    %v842 = vadd.f32 0.0, %v841
    %v843 = vpop.f32.mrf.mxu0
    %844 = vmatprep.mubr.f32.mxu0 0.0
    %845 = vmatmul.mubr.f32.gmra.mxu0 %v732
    %v846 = vpop.f32.mrf.mxu0
    %v847 = vadd.f32 0.0, %v846
    %v848 = vpop.f32.mrf.mxu0
    %849 = vmatprep.mubr.f32.mxu0 0.0
    %850 = vmatmul.mubr.f32.gmra.mxu0 %v733
    %v851 = vpop.f32.mrf.mxu0
    %v852 = vadd.f32 0.0, %v851
    %v853 = vpop.f32.mrf.mxu0
    %854 = vmatprep.mubr.f32.mxu0 0.0
    %855 = vmatmul.mubr.f32.gmra.mxu0 %v734
    %v856 = vpop.f32.mrf.mxu0
    %v857 = vadd.f32 0.0, %v856
    %v858 = vpop.f32.mrf.mxu0
    %859 = vmatprep.mubr.f32.mxu0 0.0
    %860 = vmatmul.mubr.f32.gmra.mxu0 %v735
    %v861 = vpop.f32.mrf.mxu0
    %v862 = vadd.f32 0.0, %v861
    %v863 = vpop.f32.mrf.mxu0
    %864 = vmatprep.mubr.f32.mxu0 0.0
    %865 = vmatmul.mubr.f32.gmra.mxu0 %v736
    %v866 = vpop.f32.mrf.mxu0
    %v867 = vadd.f32 0.0, %v866
    %v868 = vpop.f32.mrf.mxu0
    %869 = vmatprep.mubr.f32.mxu0 0.0
    %870 = vmatmul.mubr.f32.gmra.mxu0 %v737
    %v871 = vpop.f32.mrf.mxu0
    %v872 = vadd.f32 0.0, %v871
    %v873 = vpop.f32.mrf.mxu0
    %874 = vmatprep.mubr.f32.mxu0 0.0
    %875 = vmatmul.mubr.f32.gmra.mxu0 %v738
    %v876 = vpop.f32.mrf.mxu0
    %v877 = vadd.f32 0.0, %v876
    %v878 = vpop.f32.mrf.mxu0
    %879 = vmatprep.mubr.f32.mxu0 0.0
    %880 = vmatmul.mubr.f32.gmra.mxu0 %v739
    %v881 = vpop.f32.mrf.mxu0
    %v882 = vadd.f32 0.0, %v881
    %v883 = vpop.f32.mrf.mxu0
    %884 = vdwg.mxu0
    %v885 = vld [vmem:[%s3] sm:$0xff]
    %v886 = vld [vmem:[%s3 + $0x8] sm:$0xff]
    %v887 = vld [vmem:[%s3 + $0x10] sm:$0x1]
    %904 = vrot.lane.b32.xlu0 %v21, 8
    %v905 = vpop.permute.xlu0 %904
    %906 = vrot.lane.b32.xlu0 %v22, 8
    %v907 = vpop.permute.xlu0 %906
    %908 = vrot.lane.b32.xlu0 %v23, 8
    %v909 = vpop.permute.xlu0 %908
    %910 = vrot.lane.b32.xlu0 %v24, 8
    %v911 = vpop.permute.xlu0 %910
    %912 = vrot.lane.b32.xlu0 %v25, 8
    %v913 = vpop.permute.xlu0 %912
    %914 = vrot.lane.b32.xlu0 %v26, 8
    %v915 = vpop.permute.xlu0 %914
    %916 = vrot.lane.b32.xlu0 %v27, 8
    %v917 = vpop.permute.xlu0 %916
    %918 = vrot.lane.b32.xlu0 %v28, 8
    %v919 = vpop.permute.xlu0 %918
    %920 = vrot.lane.b32.xlu0 %v29, 8
    %v921 = vpop.permute.xlu0 %920
    %922 = vrot.lane.b32.xlu0 %v30, 8
    %v923 = vpop.permute.xlu0 %922
    %924 = vrot.lane.b32.xlu0 %v31, 8
    %v925 = vpop.permute.xlu0 %924
    %926 = vrot.lane.b32.xlu0 %v32, 8
    %v927 = vpop.permute.xlu0 %926
    %928 = vrot.lane.b32.xlu0 %v33, 8
    %v929 = vpop.permute.xlu0 %928
    %930 = vrot.lane.b32.xlu0 %v34, 8
    %v931 = vpop.permute.xlu0 %930
    %932 = vrot.lane.b32.xlu0 %v35, 8
    %v933 = vpop.permute.xlu0 %932
    %934 = vrot.lane.b32.xlu0 %v36, 8
    %v935 = vpop.permute.xlu0 %934
    %vm952 = vcmask 64512
    %v953 = vsel %vm952, %v807, %v905
    %v954 = vsel %vm952, %v812, %v907
    %v955 = vsel %vm952, %v817, %v909
    %v956 = vsel %vm952, %v822, %v911
    %v957 = vsel %vm952, %v827, %v913
    %v958 = vsel %vm952, %v832, %v915
    %v959 = vsel %vm952, %v837, %v917
    %v960 = vsel %vm952, %v842, %v919
    %v961 = vsel %vm952, %v847, %v921
    %v962 = vsel %vm952, %v852, %v923
    %v963 = vsel %vm952, %v857, %v925
    %v964 = vsel %vm952, %v862, %v927
    %v965 = vsel %vm952, %v867, %v929
    %v966 = vsel %vm952, %v872, %v931
    %v967 = vsel %vm952, %v877, %v933
    %v968 = vsel %vm952, %v882, %v935
    %v969 = vlaneseq
    %v970 = vshrl.u32 %v969, 7
    %v971 = vsub.s32 0, %v970
    %v972 = vrot.slane %v887, %v971
    %v974 = vsel %vm101, %v953, 0
    %v977 = vsel %vm101, %v954, 0
    %v980 = vsel %vm101, %v955, 0
    %v983 = vsel %vm101, %v956, 0
    %v986 = vsel %vm101, %v957, 0
    %v989 = vsel %vm101, %v958, 0
    %v992 = vsel %vm101, %v959, 0
    %v995 = vsel %vm101, %v960, 0
    %v998 = vsel %vm101, %v961, 0
    %v1001 = vsel %vm101, %v962, 0
    %v1004 = vsel %vm101, %v963, 0
    %v1007 = vsel %vm101, %v964, 0
    %v1010 = vsel %vm101, %v965, 0
    %v1013 = vsel %vm101, %v966, 0
    %v1016 = vsel %vm101, %v967, 0
    %v1019 = vsel %vm101, %v968, 0
    %1021 = vmatprep.subr.mxu0 0.0
    %1022 = vmatpush1.msra.mxu0 0.0
    %1023 = vmatprep.subr.mxu0 0.0
    %1024 = vmatpush1.msra.mxu0 0.0
    %1025 = vmatprep.subr.mxu0 0.0
    %1026 = vmatpush1.msra.mxu0 0.0
    %1027 = vmatprep.subr.mxu0 0.0
    %1028 = vmatpush1.msra.mxu0 0.0
    %1029 = vmatprep.subr.mxu0 0.0
    %1030 = vmatpush1.msra.mxu0 0.0
    %1031 = vmatprep.subr.mxu0 0.0
    %1032 = vmatpush1.msra.mxu0 0.0
    %1033 = vmatprep.subr.mxu0 0.0
    %1034 = vmatpush1.msra.mxu0 0.0
    %1035 = vmatprep.subr.mxu0 0.0
    %1036 = vmatpush1.msra.mxu0 0.0
    %1037 = vmatprep.subr.mxu0 0.0
    %1038 = vmatpush1.msra.mxu0 0.0
    %1039 = vmatprep.subr.mxu0 0.0
    %1040 = vmatpush1.msra.mxu0 0.0
    %1041 = vmatprep.subr.mxu0 0.0
    %1042 = vmatpush1.msra.mxu0 0.0
    %1043 = vmatprep.subr.mxu0 0.0
    %1044 = vmatpush1.msra.mxu0 0.0
    %1045 = vmatprep.subr.mxu0 0.0
    %1046 = vmatpush1.msra.mxu0 0.0
    %1047 = vmatprep.subr.mxu0 0.0
    %1048 = vmatpush1.msra.mxu0 0.0
    %1049 = vmatprep.subr.mxu0 0.0
    %1050 = vmatpush1.msra.mxu0 %v886
    %1051 = vmatprep.subr.mxu0 0.0
    %1052 = vmatpush1.msra.mxu0 %v885
    %1053 = vmatprep.subr.mxu0 0.0
    %1054 = vmatpush2.msra.mxu0 0.0
    %1055 = vmatprep.subr.mxu0 0.0
    %1056 = vmatpush2.msra.mxu0 0.0
    %1057 = vmatprep.subr.mxu0 0.0
    %1058 = vmatpush2.msra.mxu0 0.0
    %1059 = vmatprep.subr.mxu0 0.0
    %1060 = vmatpush2.msra.mxu0 0.0
    %1061 = vmatprep.subr.mxu0 0.0
    %1062 = vmatpush2.msra.mxu0 0.0
    %1063 = vmatprep.subr.mxu0 0.0
    %1064 = vmatpush2.msra.mxu0 0.0
    %1065 = vmatprep.subr.mxu0 0.0
    %1066 = vmatpush2.msra.mxu0 0.0
    %1067 = vmatprep.subr.mxu0 0.0
    %1068 = vmatpush2.msra.mxu0 0.0
    %1069 = vmatprep.subr.mxu0 0.0
    %1070 = vmatpush2.msra.mxu0 0.0
    %1071 = vmatprep.subr.mxu0 0.0
    %1072 = vmatpush2.msra.mxu0 0.0
    %1073 = vmatprep.subr.mxu0 0.0
    %1074 = vmatpush2.msra.mxu0 0.0
    %1075 = vmatprep.subr.mxu0 0.0
    %1076 = vmatpush2.msra.mxu0 0.0
    %1077 = vmatprep.subr.mxu0 0.0
    %1078 = vmatpush2.msra.mxu0 0.0
    %1079 = vmatprep.subr.mxu0 0.0
    %1080 = vmatpush2.msra.mxu0 0.0
    %1081 = vmatprep.subr.mxu0 0.0
    %1082 = vmatpush2.msra.mxu0 0.0
    %1083 = vmatprep.subr.mxu0 0.0
    %1084 = vmatpush2.msra.mxu0 0.0
    %1085 = vmatprep.mubr.f32.mxu0 0.0
    %1086 = vmatmul.mubr.f32.gmra.mxu0 %v974
    %v1087 = vpop.f32.mrf.mxu0
    %v1088 = vadd.f32 %v972, %v1087
    %v1089 = vpop.f32.mrf.mxu0
    %1090 = vmatprep.mubr.f32.mxu0 0.0
    %1091 = vmatmul.mubr.f32.gmra.mxu0 %v977
    %v1092 = vpop.f32.mrf.mxu0
    %v1093 = vadd.f32 %v972, %v1092
    %v1094 = vpop.f32.mrf.mxu0
    %1095 = vmatprep.mubr.f32.mxu0 0.0
    %1096 = vmatmul.mubr.f32.gmra.mxu0 %v980
    %v1097 = vpop.f32.mrf.mxu0
    %v1098 = vadd.f32 %v972, %v1097
    %v1099 = vpop.f32.mrf.mxu0
    %1100 = vmatprep.mubr.f32.mxu0 0.0
    %1101 = vmatmul.mubr.f32.gmra.mxu0 %v983
    %v1102 = vpop.f32.mrf.mxu0
    %v1103 = vadd.f32 %v972, %v1102
    %v1104 = vpop.f32.mrf.mxu0
    %1105 = vmatprep.mubr.f32.mxu0 0.0
    %1106 = vmatmul.mubr.f32.gmra.mxu0 %v986
    %v1107 = vpop.f32.mrf.mxu0
    %v1108 = vadd.f32 %v972, %v1107
    %v1109 = vpop.f32.mrf.mxu0
    %1110 = vmatprep.mubr.f32.mxu0 0.0
    %1111 = vmatmul.mubr.f32.gmra.mxu0 %v989
    %v1112 = vpop.f32.mrf.mxu0
    %v1113 = vadd.f32 %v972, %v1112
    %v1114 = vpop.f32.mrf.mxu0
    %1115 = vmatprep.mubr.f32.mxu0 0.0
    %1116 = vmatmul.mubr.f32.gmra.mxu0 %v992
    %v1117 = vpop.f32.mrf.mxu0
    %v1118 = vadd.f32 %v972, %v1117
    %v1119 = vpop.f32.mrf.mxu0
    %1120 = vmatprep.mubr.f32.mxu0 0.0
    %1121 = vmatmul.mubr.f32.gmra.mxu0 %v995
    %v1122 = vpop.f32.mrf.mxu0
    %v1123 = vadd.f32 %v972, %v1122
    %v1124 = vpop.f32.mrf.mxu0
    %1125 = vmatprep.mubr.f32.mxu0 0.0
    %1126 = vmatmul.mubr.f32.gmra.mxu0 %v998
    %v1127 = vpop.f32.mrf.mxu0
    %v1128 = vadd.f32 %v972, %v1127
    %v1129 = vpop.f32.mrf.mxu0
    %1130 = vmatprep.mubr.f32.mxu0 0.0
    %1131 = vmatmul.mubr.f32.gmra.mxu0 %v1001
    %v1132 = vpop.f32.mrf.mxu0
    %v1133 = vadd.f32 %v972, %v1132
    %v1134 = vpop.f32.mrf.mxu0
    %1135 = vmatprep.mubr.f32.mxu0 0.0
    %1136 = vmatmul.mubr.f32.gmra.mxu0 %v1004
    %v1137 = vpop.f32.mrf.mxu0
    %v1138 = vadd.f32 %v972, %v1137
    %v1139 = vpop.f32.mrf.mxu0
    %1140 = vmatprep.mubr.f32.mxu0 0.0
    %1141 = vmatmul.mubr.f32.gmra.mxu0 %v1007
    %v1142 = vpop.f32.mrf.mxu0
    %v1143 = vadd.f32 %v972, %v1142
    %v1144 = vpop.f32.mrf.mxu0
    %1145 = vmatprep.mubr.f32.mxu0 0.0
    %1146 = vmatmul.mubr.f32.gmra.mxu0 %v1010
    %v1147 = vpop.f32.mrf.mxu0
    %v1148 = vadd.f32 %v972, %v1147
    %v1149 = vpop.f32.mrf.mxu0
    %1150 = vmatprep.mubr.f32.mxu0 0.0
    %1151 = vmatmul.mubr.f32.gmra.mxu0 %v1013
    %v1152 = vpop.f32.mrf.mxu0
    %v1153 = vadd.f32 %v972, %v1152
    %v1154 = vpop.f32.mrf.mxu0
    %1155 = vmatprep.mubr.f32.mxu0 0.0
    %1156 = vmatmul.mubr.f32.gmra.mxu0 %v1016
    %v1157 = vpop.f32.mrf.mxu0
    %v1158 = vadd.f32 %v972, %v1157
    %v1159 = vpop.f32.mrf.mxu0
    %1160 = vmatprep.mubr.f32.mxu0 0.0
    %1161 = vmatmul.mubr.f32.gmra.mxu0 %v1019
    %v1162 = vpop.f32.mrf.mxu0
    %v1163 = vadd.f32 %v972, %v1162
    %v1164 = vpop.f32.mrf.mxu0
    %1165 = vdwg.mxu0
    %v1166 = vmax.f32 %v1088, 0.0
    %v1167 = vmax.f32 %v1093, 0.0
    %v1168 = vmax.f32 %v1098, 0.0
    %v1169 = vmax.f32 %v1103, 0.0
    %v1170 = vmax.f32 %v1108, 0.0
    %v1171 = vmax.f32 %v1113, 0.0
    %v1172 = vmax.f32 %v1118, 0.0
    %v1173 = vmax.f32 %v1123, 0.0
    %v1174 = vmax.f32 %v1128, 0.0
    %v1175 = vmax.f32 %v1133, 0.0
    %v1176 = vmax.f32 %v1138, 0.0
    %v1177 = vmax.f32 %v1143, 0.0
    %v1178 = vmax.f32 %v1148, 0.0
    %v1179 = vmax.f32 %v1153, 0.0
    %v1180 = vmax.f32 %v1158, 0.0
    %v1181 = vmax.f32 %v1163, 0.0
    %v1182 = vmul.f32 %v1166, %v1166
    %v1183 = vmul.f32 %v1167, %v1167
    %v1184 = vmul.f32 %v1168, %v1168
    %v1185 = vmul.f32 %v1169, %v1169
    %v1186 = vmul.f32 %v1170, %v1170
    %v1187 = vmul.f32 %v1171, %v1171
    %v1188 = vmul.f32 %v1172, %v1172
    %v1189 = vmul.f32 %v1173, %v1173
    %v1190 = vmul.f32 %v1174, %v1174
    %v1191 = vmul.f32 %v1175, %v1175
    %v1192 = vmul.f32 %v1176, %v1176
    %v1193 = vmul.f32 %v1177, %v1177
    %v1194 = vmul.f32 %v1178, %v1178
    %v1195 = vmul.f32 %v1179, %v1179
    %v1196 = vmul.f32 %v1180, %v1180
    %v1197 = vmul.f32 %v1181, %v1181
    %v1198 = vsel %vm101, %v1182, 0.0
    %1199 = vadd.xlane.f32.xlu0 %v1198
    %v1200 = vpop.xlane.xlu0 %1199
    %v1201 = vsel %vm101, %v1183, 0.0
    %1202 = vadd.xlane.f32.xlu0 %v1201
    %v1203 = vpop.xlane.xlu0 %1202
    %v1204 = vsel %vm101, %v1184, 0.0
    %1205 = vadd.xlane.f32.xlu0 %v1204
    %v1206 = vpop.xlane.xlu0 %1205
    %v1207 = vsel %vm101, %v1185, 0.0
    %1208 = vadd.xlane.f32.xlu0 %v1207
    %v1209 = vpop.xlane.xlu0 %1208
    %v1210 = vsel %vm101, %v1186, 0.0
    %1211 = vadd.xlane.f32.xlu0 %v1210
    %v1212 = vpop.xlane.xlu0 %1211
    %v1213 = vsel %vm101, %v1187, 0.0
    %1214 = vadd.xlane.f32.xlu0 %v1213
    %v1215 = vpop.xlane.xlu0 %1214
    %v1216 = vsel %vm101, %v1188, 0.0
    %1217 = vadd.xlane.f32.xlu0 %v1216
    %v1218 = vpop.xlane.xlu0 %1217
    %v1219 = vsel %vm101, %v1189, 0.0
    %1220 = vadd.xlane.f32.xlu0 %v1219
    %v1221 = vpop.xlane.xlu0 %1220
    %v1222 = vsel %vm101, %v1190, 0.0
    %1223 = vadd.xlane.f32.xlu0 %v1222
    %v1224 = vpop.xlane.xlu0 %1223
    %v1225 = vsel %vm101, %v1191, 0.0
    %1226 = vadd.xlane.f32.xlu0 %v1225
    %v1227 = vpop.xlane.xlu0 %1226
    %v1228 = vsel %vm101, %v1192, 0.0
    %1229 = vadd.xlane.f32.xlu0 %v1228
    %v1230 = vpop.xlane.xlu0 %1229
    %v1231 = vsel %vm101, %v1193, 0.0
    %1232 = vadd.xlane.f32.xlu0 %v1231
    %v1233 = vpop.xlane.xlu0 %1232
    %v1234 = vsel %vm101, %v1194, 0.0
    %1235 = vadd.xlane.f32.xlu0 %v1234
    %v1236 = vpop.xlane.xlu0 %1235
    %v1237 = vsel %vm101, %v1195, 0.0
    %1238 = vadd.xlane.f32.xlu0 %v1237
    %v1239 = vpop.xlane.xlu0 %1238
    %v1240 = vsel %vm101, %v1196, 0.0
    %1241 = vadd.xlane.f32.xlu0 %v1240
    %v1242 = vpop.xlane.xlu0 %1241
    %v1243 = vsel %vm101, %v1197, 0.0
    %1244 = vadd.xlane.f32.xlu0 %v1243
    %v1245 = vpop.xlane.xlu0 %1244
    %v1246 = vrsqrt.pop %v1200
    %v1247 = vmul.f32 %v1200, %v1246
    %vm1248 = vcmp.eq.f32.partialorder %v1200, inf
    %v1249 = vsel %vm1248, %v1200, %v1247
    %vm1250 = vcmp.eq.f32.partialorder %v1200, 0.0
    %v1251 = vand.u32 %v1200, 2147483648
    %v1252 = vsel %vm1250, %v1251, %v1249
    %v1253 = vrsqrt.pop %v1203
    %v1254 = vmul.f32 %v1203, %v1253
    %vm1255 = vcmp.eq.f32.partialorder %v1203, inf
    %v1256 = vsel %vm1255, %v1203, %v1254
    %vm1257 = vcmp.eq.f32.partialorder %v1203, 0.0
    %v1258 = vand.u32 %v1203, 2147483648
    %v1259 = vsel %vm1257, %v1258, %v1256
    %v1260 = vrsqrt.pop %v1206
    %v1261 = vmul.f32 %v1206, %v1260
    %vm1262 = vcmp.eq.f32.partialorder %v1206, inf
    %v1263 = vsel %vm1262, %v1206, %v1261
    %vm1264 = vcmp.eq.f32.partialorder %v1206, 0.0
    %v1265 = vand.u32 %v1206, 2147483648
    %v1266 = vsel %vm1264, %v1265, %v1263
    %v1267 = vrsqrt.pop %v1209
    %v1268 = vmul.f32 %v1209, %v1267
    %vm1269 = vcmp.eq.f32.partialorder %v1209, inf
    %v1270 = vsel %vm1269, %v1209, %v1268
    %vm1271 = vcmp.eq.f32.partialorder %v1209, 0.0
    %v1272 = vand.u32 %v1209, 2147483648
    %v1273 = vsel %vm1271, %v1272, %v1270
    %v1274 = vrsqrt.pop %v1212
    %v1275 = vmul.f32 %v1212, %v1274
    %vm1276 = vcmp.eq.f32.partialorder %v1212, inf
    %v1277 = vsel %vm1276, %v1212, %v1275
    %vm1278 = vcmp.eq.f32.partialorder %v1212, 0.0
    %v1279 = vand.u32 %v1212, 2147483648
    %v1280 = vsel %vm1278, %v1279, %v1277
    %v1281 = vrsqrt.pop %v1215
    %v1282 = vmul.f32 %v1215, %v1281
    %vm1283 = vcmp.eq.f32.partialorder %v1215, inf
    %v1284 = vsel %vm1283, %v1215, %v1282
    %vm1285 = vcmp.eq.f32.partialorder %v1215, 0.0
    %v1286 = vand.u32 %v1215, 2147483648
    %v1287 = vsel %vm1285, %v1286, %v1284
    %v1288 = vrsqrt.pop %v1218
    %v1289 = vmul.f32 %v1218, %v1288
    %vm1290 = vcmp.eq.f32.partialorder %v1218, inf
    %v1291 = vsel %vm1290, %v1218, %v1289
    %vm1292 = vcmp.eq.f32.partialorder %v1218, 0.0
    %v1293 = vand.u32 %v1218, 2147483648
    %v1294 = vsel %vm1292, %v1293, %v1291
    %v1295 = vrsqrt.pop %v1221
    %v1296 = vmul.f32 %v1221, %v1295
    %vm1297 = vcmp.eq.f32.partialorder %v1221, inf
    %v1298 = vsel %vm1297, %v1221, %v1296
    %vm1299 = vcmp.eq.f32.partialorder %v1221, 0.0
    %v1300 = vand.u32 %v1221, 2147483648
    %v1301 = vsel %vm1299, %v1300, %v1298
    %v1302 = vrsqrt.pop %v1224
    %v1303 = vmul.f32 %v1224, %v1302
    %vm1304 = vcmp.eq.f32.partialorder %v1224, inf
    %v1305 = vsel %vm1304, %v1224, %v1303
    %vm1306 = vcmp.eq.f32.partialorder %v1224, 0.0
    %v1307 = vand.u32 %v1224, 2147483648
    %v1308 = vsel %vm1306, %v1307, %v1305
    %v1309 = vrsqrt.pop %v1227
    %v1310 = vmul.f32 %v1227, %v1309
    %vm1311 = vcmp.eq.f32.partialorder %v1227, inf
    %v1312 = vsel %vm1311, %v1227, %v1310
    %vm1313 = vcmp.eq.f32.partialorder %v1227, 0.0
    %v1314 = vand.u32 %v1227, 2147483648
    %v1315 = vsel %vm1313, %v1314, %v1312
    %v1316 = vrsqrt.pop %v1230
    %v1317 = vmul.f32 %v1230, %v1316
    %vm1318 = vcmp.eq.f32.partialorder %v1230, inf
    %v1319 = vsel %vm1318, %v1230, %v1317
    %vm1320 = vcmp.eq.f32.partialorder %v1230, 0.0
    %v1321 = vand.u32 %v1230, 2147483648
    %v1322 = vsel %vm1320, %v1321, %v1319
    %v1323 = vrsqrt.pop %v1233
    %v1324 = vmul.f32 %v1233, %v1323
    %vm1325 = vcmp.eq.f32.partialorder %v1233, inf
    %v1326 = vsel %vm1325, %v1233, %v1324
    %vm1327 = vcmp.eq.f32.partialorder %v1233, 0.0
    %v1328 = vand.u32 %v1233, 2147483648
    %v1329 = vsel %vm1327, %v1328, %v1326
    %v1330 = vrsqrt.pop %v1236
    %v1331 = vmul.f32 %v1236, %v1330
    %vm1332 = vcmp.eq.f32.partialorder %v1236, inf
    %v1333 = vsel %vm1332, %v1236, %v1331
    %vm1334 = vcmp.eq.f32.partialorder %v1236, 0.0
    %v1335 = vand.u32 %v1236, 2147483648
    %v1336 = vsel %vm1334, %v1335, %v1333
    %v1337 = vrsqrt.pop %v1239
    %v1338 = vmul.f32 %v1239, %v1337
    %vm1339 = vcmp.eq.f32.partialorder %v1239, inf
    %v1340 = vsel %vm1339, %v1239, %v1338
    %vm1341 = vcmp.eq.f32.partialorder %v1239, 0.0
    %v1342 = vand.u32 %v1239, 2147483648
    %v1343 = vsel %vm1341, %v1342, %v1340
    %v1344 = vrsqrt.pop %v1242
    %v1345 = vmul.f32 %v1242, %v1344
    %vm1346 = vcmp.eq.f32.partialorder %v1242, inf
    %v1347 = vsel %vm1346, %v1242, %v1345
    %vm1348 = vcmp.eq.f32.partialorder %v1242, 0.0
    %v1349 = vand.u32 %v1242, 2147483648
    %v1350 = vsel %vm1348, %v1349, %v1347
    %v1351 = vrsqrt.pop %v1245
    %v1352 = vmul.f32 %v1245, %v1351
    %vm1353 = vcmp.eq.f32.partialorder %v1245, inf
    %v1354 = vsel %vm1353, %v1245, %v1352
    %vm1355 = vcmp.eq.f32.partialorder %v1245, 0.0
    %v1356 = vand.u32 %v1245, 2147483648
    %v1357 = vsel %vm1355, %v1356, %v1354
    %v1358 = vadd.f32 %v1252, 1e-09
    %v1359 = vadd.f32 %v1259, 1e-09
    %v1360 = vadd.f32 %v1266, 1e-09
    %v1361 = vadd.f32 %v1273, 1e-09
    %v1362 = vadd.f32 %v1280, 1e-09
    %v1363 = vadd.f32 %v1287, 1e-09
    %v1364 = vadd.f32 %v1294, 1e-09
    %v1365 = vadd.f32 %v1301, 1e-09
    %v1366 = vadd.f32 %v1308, 1e-09
    %v1367 = vadd.f32 %v1315, 1e-09
    %v1368 = vadd.f32 %v1322, 1e-09
    %v1369 = vadd.f32 %v1329, 1e-09
    %v1370 = vadd.f32 %v1336, 1e-09
    %v1371 = vadd.f32 %v1343, 1e-09
    %v1372 = vadd.f32 %v1350, 1e-09
    %v1373 = vadd.f32 %v1357, 1e-09
    %v1374 = vrcp.pop %v1358
    %v1375 = vrcp.pop %v1359
    %v1376 = vrcp.pop %v1360
    %v1377 = vrcp.pop %v1361
    %v1378 = vrcp.pop %v1362
    %v1379 = vrcp.pop %v1363
    %v1380 = vrcp.pop %v1364
    %v1381 = vrcp.pop %v1365
    %v1382 = vrcp.pop %v1366
    %v1383 = vrcp.pop %v1367
    %v1384 = vrcp.pop %v1368
    %v1385 = vrcp.pop %v1369
    %v1386 = vrcp.pop %v1370
    %v1387 = vrcp.pop %v1371
    %v1388 = vrcp.pop %v1372
    %v1389 = vrcp.pop %v1373
    %v1390 = vmul.f32 %v1166, %v1374
    %v1391 = vmul.f32 %v1167, %v1375
    %v1392 = vmul.f32 %v1168, %v1376
    %v1393 = vmul.f32 %v1169, %v1377
    %v1394 = vmul.f32 %v1170, %v1378
    %v1395 = vmul.f32 %v1171, %v1379
    %v1396 = vmul.f32 %v1172, %v1380
    %v1397 = vmul.f32 %v1173, %v1381
    %v1398 = vmul.f32 %v1174, %v1382
    %v1399 = vmul.f32 %v1175, %v1383
    %v1400 = vmul.f32 %v1176, %v1384
    %v1401 = vmul.f32 %v1177, %v1385
    %v1402 = vmul.f32 %v1178, %v1386
    %v1403 = vmul.f32 %v1179, %v1387
    %v1404 = vmul.f32 %v1180, %v1388
    %v1405 = vmul.f32 %v1181, %v1389
    %1422 = vrot.lane.b32.xlu0 %v1182, 112
    %v1423 = vpop.permute.xlu0 %1422
    %1424 = vrot.lane.b32.xlu0 %v1183, 112
    %v1425 = vpop.permute.xlu0 %1424
    %1426 = vrot.lane.b32.xlu0 %v1184, 112
    %v1427 = vpop.permute.xlu0 %1426
    %1428 = vrot.lane.b32.xlu0 %v1185, 112
    %v1429 = vpop.permute.xlu0 %1428
    %1430 = vrot.lane.b32.xlu0 %v1186, 112
    %v1431 = vpop.permute.xlu0 %1430
    %1432 = vrot.lane.b32.xlu0 %v1187, 112
    %v1433 = vpop.permute.xlu0 %1432
    %1434 = vrot.lane.b32.xlu0 %v1188, 112
    %v1435 = vpop.permute.xlu0 %1434
    %1436 = vrot.lane.b32.xlu0 %v1189, 112
    %v1437 = vpop.permute.xlu0 %1436
    %1438 = vrot.lane.b32.xlu0 %v1190, 112
    %v1439 = vpop.permute.xlu0 %1438
    %1440 = vrot.lane.b32.xlu0 %v1191, 112
    %v1441 = vpop.permute.xlu0 %1440
    %1442 = vrot.lane.b32.xlu0 %v1192, 112
    %v1443 = vpop.permute.xlu0 %1442
    %1444 = vrot.lane.b32.xlu0 %v1193, 112
    %v1445 = vpop.permute.xlu0 %1444
    %1446 = vrot.lane.b32.xlu0 %v1194, 112
    %v1447 = vpop.permute.xlu0 %1446
    %1448 = vrot.lane.b32.xlu0 %v1195, 112
    %v1449 = vpop.permute.xlu0 %1448
    %1450 = vrot.lane.b32.xlu0 %v1196, 112
    %v1451 = vpop.permute.xlu0 %1450
    %1452 = vrot.lane.b32.xlu0 %v1197, 112
    %v1453 = vpop.permute.xlu0 %1452
    %v1470 = vsel %vm101, %v1423, 0.0
    %1471 = vadd.xlane.f32.xlu0 %v1470
    %v1472 = vpop.xlane.xlu0 %1471
    %v1473 = vsel %vm101, %v1425, 0.0
    %1474 = vadd.xlane.f32.xlu0 %v1473
    %v1475 = vpop.xlane.xlu0 %1474
    %v1476 = vsel %vm101, %v1427, 0.0
    %1477 = vadd.xlane.f32.xlu0 %v1476
    %v1478 = vpop.xlane.xlu0 %1477
    %v1479 = vsel %vm101, %v1429, 0.0
    %1480 = vadd.xlane.f32.xlu0 %v1479
    %v1481 = vpop.xlane.xlu0 %1480
    %v1482 = vsel %vm101, %v1431, 0.0
    %1483 = vadd.xlane.f32.xlu0 %v1482
    %v1484 = vpop.xlane.xlu0 %1483
    %v1485 = vsel %vm101, %v1433, 0.0
    %1486 = vadd.xlane.f32.xlu0 %v1485
    %v1487 = vpop.xlane.xlu0 %1486
    %v1488 = vsel %vm101, %v1435, 0.0
    %1489 = vadd.xlane.f32.xlu0 %v1488
    %v1490 = vpop.xlane.xlu0 %1489
    %v1491 = vsel %vm101, %v1437, 0.0
    %1492 = vadd.xlane.f32.xlu0 %v1491
    %v1493 = vpop.xlane.xlu0 %1492
    %v1494 = vsel %vm101, %v1439, 0.0
    %1495 = vadd.xlane.f32.xlu0 %v1494
    %v1496 = vpop.xlane.xlu0 %1495
    %v1497 = vsel %vm101, %v1441, 0.0
    %1498 = vadd.xlane.f32.xlu0 %v1497
    %v1499 = vpop.xlane.xlu0 %1498
    %v1500 = vsel %vm101, %v1443, 0.0
    %1501 = vadd.xlane.f32.xlu0 %v1500
    %v1502 = vpop.xlane.xlu0 %1501
    %v1503 = vsel %vm101, %v1445, 0.0
    %1504 = vadd.xlane.f32.xlu0 %v1503
    %v1505 = vpop.xlane.xlu0 %1504
    %v1506 = vsel %vm101, %v1447, 0.0
    %1507 = vadd.xlane.f32.xlu0 %v1506
    %v1508 = vpop.xlane.xlu0 %1507
    %v1509 = vsel %vm101, %v1449, 0.0
    %1510 = vadd.xlane.f32.xlu0 %v1509
    %v1511 = vpop.xlane.xlu0 %1510
    %v1512 = vsel %vm101, %v1451, 0.0
    %1513 = vadd.xlane.f32.xlu0 %v1512
    %v1514 = vpop.xlane.xlu0 %1513
    %v1515 = vsel %vm101, %v1453, 0.0
    %1516 = vadd.xlane.f32.xlu0 %v1515
    %v1517 = vpop.xlane.xlu0 %1516
    %v1518 = vrsqrt.pop %v1472
    %v1519 = vmul.f32 %v1472, %v1518
    %vm1520 = vcmp.eq.f32.partialorder %v1472, inf
    %v1521 = vsel %vm1520, %v1472, %v1519
    %vm1522 = vcmp.eq.f32.partialorder %v1472, 0.0
    %v1523 = vand.u32 %v1472, 2147483648
    %v1524 = vsel %vm1522, %v1523, %v1521
    %v1525 = vrsqrt.pop %v1475
    %v1526 = vmul.f32 %v1475, %v1525
    %vm1527 = vcmp.eq.f32.partialorder %v1475, inf
    %v1528 = vsel %vm1527, %v1475, %v1526
    %vm1529 = vcmp.eq.f32.partialorder %v1475, 0.0
    %v1530 = vand.u32 %v1475, 2147483648
    %v1531 = vsel %vm1529, %v1530, %v1528
    %v1532 = vrsqrt.pop %v1478
    %v1533 = vmul.f32 %v1478, %v1532
    %vm1534 = vcmp.eq.f32.partialorder %v1478, inf
    %v1535 = vsel %vm1534, %v1478, %v1533
    %vm1536 = vcmp.eq.f32.partialorder %v1478, 0.0
    %v1537 = vand.u32 %v1478, 2147483648
    %v1538 = vsel %vm1536, %v1537, %v1535
    %v1539 = vrsqrt.pop %v1481
    %v1540 = vmul.f32 %v1481, %v1539
    %vm1541 = vcmp.eq.f32.partialorder %v1481, inf
    %v1542 = vsel %vm1541, %v1481, %v1540
    %vm1543 = vcmp.eq.f32.partialorder %v1481, 0.0
    %v1544 = vand.u32 %v1481, 2147483648
    %v1545 = vsel %vm1543, %v1544, %v1542
    %v1546 = vrsqrt.pop %v1484
    %v1547 = vmul.f32 %v1484, %v1546
    %vm1548 = vcmp.eq.f32.partialorder %v1484, inf
    %v1549 = vsel %vm1548, %v1484, %v1547
    %vm1550 = vcmp.eq.f32.partialorder %v1484, 0.0
    %v1551 = vand.u32 %v1484, 2147483648
    %v1552 = vsel %vm1550, %v1551, %v1549
    %v1553 = vrsqrt.pop %v1487
    %v1554 = vmul.f32 %v1487, %v1553
    %vm1555 = vcmp.eq.f32.partialorder %v1487, inf
    %v1556 = vsel %vm1555, %v1487, %v1554
    %vm1557 = vcmp.eq.f32.partialorder %v1487, 0.0
    %v1558 = vand.u32 %v1487, 2147483648
    %v1559 = vsel %vm1557, %v1558, %v1556
    %v1560 = vrsqrt.pop %v1490
    %v1561 = vmul.f32 %v1490, %v1560
    %vm1562 = vcmp.eq.f32.partialorder %v1490, inf
    %v1563 = vsel %vm1562, %v1490, %v1561
    %vm1564 = vcmp.eq.f32.partialorder %v1490, 0.0
    %v1565 = vand.u32 %v1490, 2147483648
    %v1566 = vsel %vm1564, %v1565, %v1563
    %v1567 = vrsqrt.pop %v1493
    %v1568 = vmul.f32 %v1493, %v1567
    %vm1569 = vcmp.eq.f32.partialorder %v1493, inf
    %v1570 = vsel %vm1569, %v1493, %v1568
    %vm1571 = vcmp.eq.f32.partialorder %v1493, 0.0
    %v1572 = vand.u32 %v1493, 2147483648
    %v1573 = vsel %vm1571, %v1572, %v1570
    %v1574 = vrsqrt.pop %v1496
    %v1575 = vmul.f32 %v1496, %v1574
    %vm1576 = vcmp.eq.f32.partialorder %v1496, inf
    %v1577 = vsel %vm1576, %v1496, %v1575
    %vm1578 = vcmp.eq.f32.partialorder %v1496, 0.0
    %v1579 = vand.u32 %v1496, 2147483648
    %v1580 = vsel %vm1578, %v1579, %v1577
    %v1581 = vrsqrt.pop %v1499
    %v1582 = vmul.f32 %v1499, %v1581
    %vm1583 = vcmp.eq.f32.partialorder %v1499, inf
    %v1584 = vsel %vm1583, %v1499, %v1582
    %vm1585 = vcmp.eq.f32.partialorder %v1499, 0.0
    %v1586 = vand.u32 %v1499, 2147483648
    %v1587 = vsel %vm1585, %v1586, %v1584
    %v1588 = vrsqrt.pop %v1502
    %v1589 = vmul.f32 %v1502, %v1588
    %vm1590 = vcmp.eq.f32.partialorder %v1502, inf
    %v1591 = vsel %vm1590, %v1502, %v1589
    %vm1592 = vcmp.eq.f32.partialorder %v1502, 0.0
    %v1593 = vand.u32 %v1502, 2147483648
    %v1594 = vsel %vm1592, %v1593, %v1591
    %v1595 = vrsqrt.pop %v1505
    %v1596 = vmul.f32 %v1505, %v1595
    %vm1597 = vcmp.eq.f32.partialorder %v1505, inf
    %v1598 = vsel %vm1597, %v1505, %v1596
    %vm1599 = vcmp.eq.f32.partialorder %v1505, 0.0
    %v1600 = vand.u32 %v1505, 2147483648
    %v1601 = vsel %vm1599, %v1600, %v1598
    %v1602 = vrsqrt.pop %v1508
    %v1603 = vmul.f32 %v1508, %v1602
    %vm1604 = vcmp.eq.f32.partialorder %v1508, inf
    %v1605 = vsel %vm1604, %v1508, %v1603
    %vm1606 = vcmp.eq.f32.partialorder %v1508, 0.0
    %v1607 = vand.u32 %v1508, 2147483648
    %v1608 = vsel %vm1606, %v1607, %v1605
    %v1609 = vrsqrt.pop %v1511
    %v1610 = vmul.f32 %v1511, %v1609
    %vm1611 = vcmp.eq.f32.partialorder %v1511, inf
    %v1612 = vsel %vm1611, %v1511, %v1610
    %vm1613 = vcmp.eq.f32.partialorder %v1511, 0.0
    %v1614 = vand.u32 %v1511, 2147483648
    %v1615 = vsel %vm1613, %v1614, %v1612
    %v1616 = vrsqrt.pop %v1514
    %v1617 = vmul.f32 %v1514, %v1616
    %vm1618 = vcmp.eq.f32.partialorder %v1514, inf
    %v1619 = vsel %vm1618, %v1514, %v1617
    %vm1620 = vcmp.eq.f32.partialorder %v1514, 0.0
    %v1621 = vand.u32 %v1514, 2147483648
    %v1622 = vsel %vm1620, %v1621, %v1619
    %v1623 = vrsqrt.pop %v1517
    %v1624 = vmul.f32 %v1517, %v1623
    %vm1625 = vcmp.eq.f32.partialorder %v1517, inf
    %v1626 = vsel %vm1625, %v1517, %v1624
    %vm1627 = vcmp.eq.f32.partialorder %v1517, 0.0
    %v1628 = vand.u32 %v1517, 2147483648
    %v1629 = vsel %vm1627, %v1628, %v1626
    %v1630 = vadd.f32 %v1524, 1e-09
    %v1631 = vadd.f32 %v1531, 1e-09
    %v1632 = vadd.f32 %v1538, 1e-09
    %v1633 = vadd.f32 %v1545, 1e-09
    %v1634 = vadd.f32 %v1552, 1e-09
    %v1635 = vadd.f32 %v1559, 1e-09
    %v1636 = vadd.f32 %v1566, 1e-09
    %v1637 = vadd.f32 %v1573, 1e-09
    %v1638 = vadd.f32 %v1580, 1e-09
    %v1639 = vadd.f32 %v1587, 1e-09
    %v1640 = vadd.f32 %v1594, 1e-09
    %v1641 = vadd.f32 %v1601, 1e-09
    %v1642 = vadd.f32 %v1608, 1e-09
    %v1643 = vadd.f32 %v1615, 1e-09
    %v1644 = vadd.f32 %v1622, 1e-09
    %v1645 = vadd.f32 %v1629, 1e-09
    %v1646 = vrcp.pop %v1630
    %v1647 = vrcp.pop %v1631
    %v1648 = vrcp.pop %v1632
    %v1649 = vrcp.pop %v1633
    %v1650 = vrcp.pop %v1634
    %v1651 = vrcp.pop %v1635
    %v1652 = vrcp.pop %v1636
    %v1653 = vrcp.pop %v1637
    %v1654 = vrcp.pop %v1638
    %v1655 = vrcp.pop %v1639
    %v1656 = vrcp.pop %v1640
    %v1657 = vrcp.pop %v1641
    %v1658 = vrcp.pop %v1642
    %v1659 = vrcp.pop %v1643
    %v1660 = vrcp.pop %v1644
    %v1661 = vrcp.pop %v1645
    %v1662 = vmul.f32 %v1166, %v1646
    %v1663 = vmul.f32 %v1167, %v1647
    %v1664 = vmul.f32 %v1168, %v1648
    %v1665 = vmul.f32 %v1169, %v1649
    %v1666 = vmul.f32 %v1170, %v1650
    %v1667 = vmul.f32 %v1171, %v1651
    %v1668 = vmul.f32 %v1172, %v1652
    %v1669 = vmul.f32 %v1173, %v1653
    %v1670 = vmul.f32 %v1174, %v1654
    %v1671 = vmul.f32 %v1175, %v1655
    %v1672 = vmul.f32 %v1176, %v1656
    %v1673 = vmul.f32 %v1177, %v1657
    %v1674 = vmul.f32 %v1178, %v1658
    %v1675 = vmul.f32 %v1179, %v1659
    %v1676 = vmul.f32 %v1180, %v1660
    %v1677 = vmul.f32 %v1181, %v1661
    %v1678 = vsel %vm101, %v1390, %v1662
    %v1679 = vsel %vm101, %v1391, %v1663
    %v1680 = vsel %vm101, %v1392, %v1664
    %v1681 = vsel %vm101, %v1393, %v1665
    %v1682 = vsel %vm101, %v1394, %v1666
    %v1683 = vsel %vm101, %v1395, %v1667
    %v1684 = vsel %vm101, %v1396, %v1668
    %v1685 = vsel %vm101, %v1397, %v1669
    %v1686 = vsel %vm101, %v1398, %v1670
    %v1687 = vsel %vm101, %v1399, %v1671
    %v1688 = vsel %vm101, %v1400, %v1672
    %v1689 = vsel %vm101, %v1401, %v1673
    %v1690 = vsel %vm101, %v1402, %v1674
    %v1691 = vsel %vm101, %v1403, %v1675
    %v1692 = vsel %vm101, %v1404, %v1676
    %v1693 = vsel %vm101, %v1405, %v1677
    %1694 = vmatprep.subr.mxu0 0.0
    %1695 = vmatpush1.msra.mxu0 %v1693
    %1696 = vmatprep.subr.mxu0 0.0
    %1697 = vmatpush1.msra.mxu0 %v1692
    %1698 = vmatprep.subr.mxu0 0.0
    %1699 = vmatpush1.msra.mxu0 %v1691
    %1700 = vmatprep.subr.mxu0 0.0
    %1701 = vmatpush1.msra.mxu0 %v1690
    %1702 = vmatprep.subr.mxu0 0.0
    %1703 = vmatpush1.msra.mxu0 %v1689
    %1704 = vmatprep.subr.mxu0 0.0
    %1705 = vmatpush1.msra.mxu0 %v1688
    %1706 = vmatprep.subr.mxu0 0.0
    %1707 = vmatpush1.msra.mxu0 %v1687
    %1708 = vmatprep.subr.mxu0 0.0
    %1709 = vmatpush1.msra.mxu0 %v1686
    %1710 = vmatprep.subr.mxu0 0.0
    %1711 = vmatpush1.msra.mxu0 %v1685
    %1712 = vmatprep.subr.mxu0 0.0
    %1713 = vmatpush1.msra.mxu0 %v1684
    %1714 = vmatprep.subr.mxu0 0.0
    %1715 = vmatpush1.msra.mxu0 %v1683
    %1716 = vmatprep.subr.mxu0 0.0
    %1717 = vmatpush1.msra.mxu0 %v1682
    %1718 = vmatprep.subr.mxu0 0.0
    %1719 = vmatpush1.msra.mxu0 %v1681
    %1720 = vmatprep.subr.mxu0 0.0
    %1721 = vmatpush1.msra.mxu0 %v1680
    %1722 = vmatprep.subr.mxu0 0.0
    %1723 = vmatpush1.msra.mxu0 %v1679
    %1724 = vmatprep.subr.mxu0 0.0
    %1725 = vmatpush1.msra.mxu0 %v1678
    %1726 = vmatprep.subr.mxu0 0.0
    %1727 = vmatpush2.msra.mxu0 0.0
    %1728 = vmatprep.subr.mxu0 0.0
    %1729 = vmatpush2.msra.mxu0 0.0
    %1730 = vmatprep.subr.mxu0 0.0
    %1731 = vmatpush2.msra.mxu0 0.0
    %1732 = vmatprep.subr.mxu0 0.0
    %1733 = vmatpush2.msra.mxu0 0.0
    %1734 = vmatprep.subr.mxu0 0.0
    %1735 = vmatpush2.msra.mxu0 0.0
    %1736 = vmatprep.subr.mxu0 0.0
    %1737 = vmatpush2.msra.mxu0 0.0
    %1738 = vmatprep.subr.mxu0 0.0
    %1739 = vmatpush2.msra.mxu0 0.0
    %1740 = vmatprep.subr.mxu0 0.0
    %1741 = vmatpush2.msra.mxu0 0.0
    %1742 = vmatprep.subr.mxu0 0.0
    %1743 = vmatpush2.msra.mxu0 0.0
    %1744 = vmatprep.subr.mxu0 0.0
    %1745 = vmatpush2.msra.mxu0 0.0
    %1746 = vmatprep.subr.mxu0 0.0
    %1747 = vmatpush2.msra.mxu0 0.0
    %1748 = vmatprep.subr.mxu0 0.0
    %1749 = vmatpush2.msra.mxu0 0.0
    %1750 = vmatprep.subr.mxu0 0.0
    %1751 = vmatpush2.msra.mxu0 0.0
    %1752 = vmatprep.subr.mxu0 0.0
    %1753 = vmatpush2.msra.mxu0 0.0
    %1754 = vmatprep.subr.mxu0 0.0
    %1755 = vmatpush2.msra.mxu0 0.0
    %1756 = vmatprep.subr.mxu0 0.0
    %1757 = vmatpush2.msra.mxu0 0.0
    %1758 = vmatprep.mubr.f32.mxu0 0.0
    %1759 = vmatmul.mubr.f32.gmra.mxu0 %v724
    %v1760 = vpop.f32.mrf.mxu0
    %v1761 = vadd.f32 0.0, %v1760
    %v1762 = vpop.f32.mrf.mxu0
    %1763 = vmatprep.mubr.f32.mxu0 0.0
    %1764 = vmatmul.mubr.f32.gmra.mxu0 %v725
    %v1765 = vpop.f32.mrf.mxu0
    %v1766 = vadd.f32 0.0, %v1765
    %v1767 = vpop.f32.mrf.mxu0
    %1768 = vmatprep.mubr.f32.mxu0 0.0
    %1769 = vmatmul.mubr.f32.gmra.mxu0 %v726
    %v1770 = vpop.f32.mrf.mxu0
    %v1771 = vadd.f32 0.0, %v1770
    %v1772 = vpop.f32.mrf.mxu0
    %1773 = vmatprep.mubr.f32.mxu0 0.0
    %1774 = vmatmul.mubr.f32.gmra.mxu0 %v727
    %v1775 = vpop.f32.mrf.mxu0
    %v1776 = vadd.f32 0.0, %v1775
    %v1777 = vpop.f32.mrf.mxu0
    %1778 = vmatprep.mubr.f32.mxu0 0.0
    %1779 = vmatmul.mubr.f32.gmra.mxu0 %v728
    %v1780 = vpop.f32.mrf.mxu0
    %v1781 = vadd.f32 0.0, %v1780
    %v1782 = vpop.f32.mrf.mxu0
    %1783 = vmatprep.mubr.f32.mxu0 0.0
    %1784 = vmatmul.mubr.f32.gmra.mxu0 %v729
    %v1785 = vpop.f32.mrf.mxu0
    %v1786 = vadd.f32 0.0, %v1785
    %v1787 = vpop.f32.mrf.mxu0
    %1788 = vmatprep.mubr.f32.mxu0 0.0
    %1789 = vmatmul.mubr.f32.gmra.mxu0 %v730
    %v1790 = vpop.f32.mrf.mxu0
    %v1791 = vadd.f32 0.0, %v1790
    %v1792 = vpop.f32.mrf.mxu0
    %1793 = vmatprep.mubr.f32.mxu0 0.0
    %1794 = vmatmul.mubr.f32.gmra.mxu0 %v731
    %v1795 = vpop.f32.mrf.mxu0
    %v1796 = vadd.f32 0.0, %v1795
    %v1797 = vpop.f32.mrf.mxu0
    %1798 = vmatprep.mubr.f32.mxu0 0.0
    %1799 = vmatmul.mubr.f32.gmra.mxu0 %v732
    %v1800 = vpop.f32.mrf.mxu0
    %v1801 = vadd.f32 0.0, %v1800
    %v1802 = vpop.f32.mrf.mxu0
    %1803 = vmatprep.mubr.f32.mxu0 0.0
    %1804 = vmatmul.mubr.f32.gmra.mxu0 %v733
    %v1805 = vpop.f32.mrf.mxu0
    %v1806 = vadd.f32 0.0, %v1805
    %v1807 = vpop.f32.mrf.mxu0
    %1808 = vmatprep.mubr.f32.mxu0 0.0
    %1809 = vmatmul.mubr.f32.gmra.mxu0 %v734
    %v1810 = vpop.f32.mrf.mxu0
    %v1811 = vadd.f32 0.0, %v1810
    %v1812 = vpop.f32.mrf.mxu0
    %1813 = vmatprep.mubr.f32.mxu0 0.0
    %1814 = vmatmul.mubr.f32.gmra.mxu0 %v735
    %v1815 = vpop.f32.mrf.mxu0
    %v1816 = vadd.f32 0.0, %v1815
    %v1817 = vpop.f32.mrf.mxu0
    %1818 = vmatprep.mubr.f32.mxu0 0.0
    %1819 = vmatmul.mubr.f32.gmra.mxu0 %v736
    %v1820 = vpop.f32.mrf.mxu0
    %v1821 = vadd.f32 0.0, %v1820
    %v1822 = vpop.f32.mrf.mxu0
    %1823 = vmatprep.mubr.f32.mxu0 0.0
    %1824 = vmatmul.mubr.f32.gmra.mxu0 %v737
    %v1825 = vpop.f32.mrf.mxu0
    %v1826 = vadd.f32 0.0, %v1825
    %v1827 = vpop.f32.mrf.mxu0
    %1828 = vmatprep.mubr.f32.mxu0 0.0
    %1829 = vmatmul.mubr.f32.gmra.mxu0 %v738
    %v1830 = vpop.f32.mrf.mxu0
    %v1831 = vadd.f32 0.0, %v1830
    %v1832 = vpop.f32.mrf.mxu0
    %1833 = vmatprep.mubr.f32.mxu0 0.0
    %1834 = vmatmul.mubr.f32.gmra.mxu0 %v739
    %v1835 = vpop.f32.mrf.mxu0
    %v1836 = vadd.f32 0.0, %v1835
    %v1837 = vpop.f32.mrf.mxu0
    %1838 = vdwg.mxu0
    %v1839 = vld [vmem:[%s4] sm:$0xff]
    %v1840 = vld [vmem:[%s4 + $0x8] sm:$0xff]
    %v1841 = vld [vmem:[%s4 + $0x10] sm:$0xff]
    %v1842 = vld [vmem:[%s4 + $0x18] sm:$0xff]
    %v1843 = vld [vmem:[%s4 + $0x20] sm:$0xff]
    %v1844 = vld [vmem:[%s4 + $0x28] sm:$0xff]
    %v1845 = vld [vmem:[%s4 + $0x30] sm:$0xff]
    %v1846 = vld [vmem:[%s4 + $0x38] sm:$0xff]
    %v1847 = vld [vmem:[%s4 + $0x40] sm:$0x1]
    %1864 = vrot.lane.b32.xlu0 %v1678, 32
    %v1865 = vpop.permute.xlu0 %1864
    %1866 = vrot.lane.b32.xlu0 %v1679, 32
    %v1867 = vpop.permute.xlu0 %1866
    %1868 = vrot.lane.b32.xlu0 %v1680, 32
    %v1869 = vpop.permute.xlu0 %1868
    %1870 = vrot.lane.b32.xlu0 %v1681, 32
    %v1871 = vpop.permute.xlu0 %1870
    %1872 = vrot.lane.b32.xlu0 %v1682, 32
    %v1873 = vpop.permute.xlu0 %1872
    %1874 = vrot.lane.b32.xlu0 %v1683, 32
    %v1875 = vpop.permute.xlu0 %1874
    %1876 = vrot.lane.b32.xlu0 %v1684, 32
    %v1877 = vpop.permute.xlu0 %1876
    %1878 = vrot.lane.b32.xlu0 %v1685, 32
    %v1879 = vpop.permute.xlu0 %1878
    %1880 = vrot.lane.b32.xlu0 %v1686, 32
    %v1881 = vpop.permute.xlu0 %1880
    %1882 = vrot.lane.b32.xlu0 %v1687, 32
    %v1883 = vpop.permute.xlu0 %1882
    %1884 = vrot.lane.b32.xlu0 %v1688, 32
    %v1885 = vpop.permute.xlu0 %1884
    %1886 = vrot.lane.b32.xlu0 %v1689, 32
    %v1887 = vpop.permute.xlu0 %1886
    %1888 = vrot.lane.b32.xlu0 %v1690, 32
    %v1889 = vpop.permute.xlu0 %1888
    %1890 = vrot.lane.b32.xlu0 %v1691, 32
    %v1891 = vpop.permute.xlu0 %1890
    %1892 = vrot.lane.b32.xlu0 %v1692, 32
    %v1893 = vpop.permute.xlu0 %1892
    %1894 = vrot.lane.b32.xlu0 %v1693, 32
    %v1895 = vpop.permute.xlu0 %1894
    %v1912 = vsel %vm574, %v1761, %v1865
    %v1913 = vsel %vm574, %v1766, %v1867
    %v1914 = vsel %vm574, %v1771, %v1869
    %v1915 = vsel %vm574, %v1776, %v1871
    %v1916 = vsel %vm574, %v1781, %v1873
    %v1917 = vsel %vm574, %v1786, %v1875
    %v1918 = vsel %vm574, %v1791, %v1877
    %v1919 = vsel %vm574, %v1796, %v1879
    %v1920 = vsel %vm574, %v1801, %v1881
    %v1921 = vsel %vm574, %v1806, %v1883
    %v1922 = vsel %vm574, %v1811, %v1885
    %v1923 = vsel %vm574, %v1816, %v1887
    %v1924 = vsel %vm574, %v1821, %v1889
    %v1925 = vsel %vm574, %v1826, %v1891
    %v1926 = vsel %vm574, %v1831, %v1893
    %v1927 = vsel %vm574, %v1836, %v1895
    %v1928 = vlaneseq
    %v1929 = vshrl.u32 %v1928, 7
    %v1930 = vsub.s32 0, %v1929
    %v1931 = vrot.slane %v1847, %v1930
    %v1933 = vsel %vm608, %v1912, 0
    %v1936 = vsel %vm608, %v1913, 0
    %v1939 = vsel %vm608, %v1914, 0
    %v1942 = vsel %vm608, %v1915, 0
    %v1945 = vsel %vm608, %v1916, 0
    %v1948 = vsel %vm608, %v1917, 0
    %v1951 = vsel %vm608, %v1918, 0
    %v1954 = vsel %vm608, %v1919, 0
    %v1957 = vsel %vm608, %v1920, 0
    %v1960 = vsel %vm608, %v1921, 0
    %v1963 = vsel %vm608, %v1922, 0
    %v1966 = vsel %vm608, %v1923, 0
    %v1969 = vsel %vm608, %v1924, 0
    %v1972 = vsel %vm608, %v1925, 0
    %v1975 = vsel %vm608, %v1926, 0
    %v1978 = vsel %vm608, %v1927, 0
    %1980 = vmatprep.subr.mxu0 0.0
    %1981 = vmatpush1.msra.mxu0 0.0
    %1982 = vmatprep.subr.mxu0 0.0
    %1983 = vmatpush1.msra.mxu0 0.0
    %1984 = vmatprep.subr.mxu0 0.0
    %1985 = vmatpush1.msra.mxu0 0.0
    %1986 = vmatprep.subr.mxu0 0.0
    %1987 = vmatpush1.msra.mxu0 0.0
    %1988 = vmatprep.subr.mxu0 0.0
    %1989 = vmatpush1.msra.mxu0 0.0
    %1990 = vmatprep.subr.mxu0 0.0
    %1991 = vmatpush1.msra.mxu0 0.0
    %1992 = vmatprep.subr.mxu0 0.0
    %1993 = vmatpush1.msra.mxu0 0.0
    %1994 = vmatprep.subr.mxu0 0.0
    %1995 = vmatpush1.msra.mxu0 0.0
    %1996 = vmatprep.subr.mxu0 0.0
    %1997 = vmatpush1.msra.mxu0 %v1846
    %1998 = vmatprep.subr.mxu0 0.0
    %1999 = vmatpush1.msra.mxu0 %v1845
    %2000 = vmatprep.subr.mxu0 0.0
    %2001 = vmatpush1.msra.mxu0 %v1844
    %2002 = vmatprep.subr.mxu0 0.0
    %2003 = vmatpush1.msra.mxu0 %v1843
    %2004 = vmatprep.subr.mxu0 0.0
    %2005 = vmatpush1.msra.mxu0 %v1842
    %2006 = vmatprep.subr.mxu0 0.0
    %2007 = vmatpush1.msra.mxu0 %v1841
    %2008 = vmatprep.subr.mxu0 0.0
    %2009 = vmatpush1.msra.mxu0 %v1840
    %2010 = vmatprep.subr.mxu0 0.0
    %2011 = vmatpush1.msra.mxu0 %v1839
    %2012 = vmatprep.subr.mxu0 0.0
    %2013 = vmatpush2.msra.mxu0 0.0
    %2014 = vmatprep.subr.mxu0 0.0
    %2015 = vmatpush2.msra.mxu0 0.0
    %2016 = vmatprep.subr.mxu0 0.0
    %2017 = vmatpush2.msra.mxu0 0.0
    %2018 = vmatprep.subr.mxu0 0.0
    %2019 = vmatpush2.msra.mxu0 0.0
    %2020 = vmatprep.subr.mxu0 0.0
    %2021 = vmatpush2.msra.mxu0 0.0
    %2022 = vmatprep.subr.mxu0 0.0
    %2023 = vmatpush2.msra.mxu0 0.0
    %2024 = vmatprep.subr.mxu0 0.0
    %2025 = vmatpush2.msra.mxu0 0.0
    %2026 = vmatprep.subr.mxu0 0.0
    %2027 = vmatpush2.msra.mxu0 0.0
    %2028 = vmatprep.subr.mxu0 0.0
    %2029 = vmatpush2.msra.mxu0 0.0
    %2030 = vmatprep.subr.mxu0 0.0
    %2031 = vmatpush2.msra.mxu0 0.0
    %2032 = vmatprep.subr.mxu0 0.0
    %2033 = vmatpush2.msra.mxu0 0.0
    %2034 = vmatprep.subr.mxu0 0.0
    %2035 = vmatpush2.msra.mxu0 0.0
    %2036 = vmatprep.subr.mxu0 0.0
    %2037 = vmatpush2.msra.mxu0 0.0
    %2038 = vmatprep.subr.mxu0 0.0
    %2039 = vmatpush2.msra.mxu0 0.0
    %2040 = vmatprep.subr.mxu0 0.0
    %2041 = vmatpush2.msra.mxu0 0.0
    %2042 = vmatprep.subr.mxu0 0.0
    %2043 = vmatpush2.msra.mxu0 0.0
    %2044 = vmatprep.mubr.f32.mxu0 0.0
    %2045 = vmatmul.mubr.f32.gmra.mxu0 %v1933
    %v2046 = vpop.f32.mrf.mxu0
    %v2047 = vadd.f32 %v1931, %v2046
    %v2048 = vpop.f32.mrf.mxu0
    %2049 = vmatprep.mubr.f32.mxu0 0.0
    %2050 = vmatmul.mubr.f32.gmra.mxu0 %v1936
    %v2051 = vpop.f32.mrf.mxu0
    %v2052 = vadd.f32 %v1931, %v2051
    %v2053 = vpop.f32.mrf.mxu0
    %2054 = vmatprep.mubr.f32.mxu0 0.0
    %2055 = vmatmul.mubr.f32.gmra.mxu0 %v1939
    %v2056 = vpop.f32.mrf.mxu0
    %v2057 = vadd.f32 %v1931, %v2056
    %v2058 = vpop.f32.mrf.mxu0
    %2059 = vmatprep.mubr.f32.mxu0 0.0
    %2060 = vmatmul.mubr.f32.gmra.mxu0 %v1942
    %v2061 = vpop.f32.mrf.mxu0
    %v2062 = vadd.f32 %v1931, %v2061
    %v2063 = vpop.f32.mrf.mxu0
    %2064 = vmatprep.mubr.f32.mxu0 0.0
    %2065 = vmatmul.mubr.f32.gmra.mxu0 %v1945
    %v2066 = vpop.f32.mrf.mxu0
    %v2067 = vadd.f32 %v1931, %v2066
    %v2068 = vpop.f32.mrf.mxu0
    %2069 = vmatprep.mubr.f32.mxu0 0.0
    %2070 = vmatmul.mubr.f32.gmra.mxu0 %v1948
    %v2071 = vpop.f32.mrf.mxu0
    %v2072 = vadd.f32 %v1931, %v2071
    %v2073 = vpop.f32.mrf.mxu0
    %2074 = vmatprep.mubr.f32.mxu0 0.0
    %2075 = vmatmul.mubr.f32.gmra.mxu0 %v1951
    %v2076 = vpop.f32.mrf.mxu0
    %v2077 = vadd.f32 %v1931, %v2076
    %v2078 = vpop.f32.mrf.mxu0
    %2079 = vmatprep.mubr.f32.mxu0 0.0
    %2080 = vmatmul.mubr.f32.gmra.mxu0 %v1954
    %v2081 = vpop.f32.mrf.mxu0
    %v2082 = vadd.f32 %v1931, %v2081
    %v2083 = vpop.f32.mrf.mxu0
    %2084 = vmatprep.mubr.f32.mxu0 0.0
    %2085 = vmatmul.mubr.f32.gmra.mxu0 %v1957
    %v2086 = vpop.f32.mrf.mxu0
    %v2087 = vadd.f32 %v1931, %v2086
    %v2088 = vpop.f32.mrf.mxu0
    %2089 = vmatprep.mubr.f32.mxu0 0.0
    %2090 = vmatmul.mubr.f32.gmra.mxu0 %v1960
    %v2091 = vpop.f32.mrf.mxu0
    %v2092 = vadd.f32 %v1931, %v2091
    %v2093 = vpop.f32.mrf.mxu0
    %2094 = vmatprep.mubr.f32.mxu0 0.0
    %2095 = vmatmul.mubr.f32.gmra.mxu0 %v1963
    %v2096 = vpop.f32.mrf.mxu0
    %v2097 = vadd.f32 %v1931, %v2096
    %v2098 = vpop.f32.mrf.mxu0
    %2099 = vmatprep.mubr.f32.mxu0 0.0
    %2100 = vmatmul.mubr.f32.gmra.mxu0 %v1966
    %v2101 = vpop.f32.mrf.mxu0
    %v2102 = vadd.f32 %v1931, %v2101
    %v2103 = vpop.f32.mrf.mxu0
    %2104 = vmatprep.mubr.f32.mxu0 0.0
    %2105 = vmatmul.mubr.f32.gmra.mxu0 %v1969
    %v2106 = vpop.f32.mrf.mxu0
    %v2107 = vadd.f32 %v1931, %v2106
    %v2108 = vpop.f32.mrf.mxu0
    %2109 = vmatprep.mubr.f32.mxu0 0.0
    %2110 = vmatmul.mubr.f32.gmra.mxu0 %v1972
    %v2111 = vpop.f32.mrf.mxu0
    %v2112 = vadd.f32 %v1931, %v2111
    %v2113 = vpop.f32.mrf.mxu0
    %2114 = vmatprep.mubr.f32.mxu0 0.0
    %2115 = vmatmul.mubr.f32.gmra.mxu0 %v1975
    %v2116 = vpop.f32.mrf.mxu0
    %v2117 = vadd.f32 %v1931, %v2116
    %v2118 = vpop.f32.mrf.mxu0
    %2119 = vmatprep.mubr.f32.mxu0 0.0
    %2120 = vmatmul.mubr.f32.gmra.mxu0 %v1978
    %v2121 = vpop.f32.mrf.mxu0
    %v2122 = vadd.f32 %v1931, %v2121
    %v2123 = vpop.f32.mrf.mxu0
    %2124 = vdwg.mxu0
    %v2125 = vmax.f32 %v2047, 0.0
    %v2126 = vmax.f32 %v2052, 0.0
    %v2127 = vmax.f32 %v2057, 0.0
    %v2128 = vmax.f32 %v2062, 0.0
    %v2129 = vmax.f32 %v2067, 0.0
    %v2130 = vmax.f32 %v2072, 0.0
    %v2131 = vmax.f32 %v2077, 0.0
    %v2132 = vmax.f32 %v2082, 0.0
    %v2133 = vmax.f32 %v2087, 0.0
    %v2134 = vmax.f32 %v2092, 0.0
    %v2135 = vmax.f32 %v2097, 0.0
    %v2136 = vmax.f32 %v2102, 0.0
    %v2137 = vmax.f32 %v2107, 0.0
    %v2138 = vmax.f32 %v2112, 0.0
    %v2139 = vmax.f32 %v2117, 0.0
    %v2140 = vmax.f32 %v2122, 0.0
    %v2141 = vmul.f32 %v2125, %v2125
    %v2142 = vmul.f32 %v2126, %v2126
    %v2143 = vmul.f32 %v2127, %v2127
    %v2144 = vmul.f32 %v2128, %v2128
    %v2145 = vmul.f32 %v2129, %v2129
    %v2146 = vmul.f32 %v2130, %v2130
    %v2147 = vmul.f32 %v2131, %v2131
    %v2148 = vmul.f32 %v2132, %v2132
    %v2149 = vmul.f32 %v2133, %v2133
    %v2150 = vmul.f32 %v2134, %v2134
    %v2151 = vmul.f32 %v2135, %v2135
    %v2152 = vmul.f32 %v2136, %v2136
    %v2153 = vmul.f32 %v2137, %v2137
    %v2154 = vmul.f32 %v2138, %v2138
    %v2155 = vmul.f32 %v2139, %v2139
    %v2156 = vmul.f32 %v2140, %v2140
    %v2157 = vsel %vm101, %v2141, 0.0
    %2158 = vadd.xlane.f32.xlu0 %v2157
    %v2159 = vpop.xlane.xlu0 %2158
    %v2160 = vsel %vm101, %v2142, 0.0
    %2161 = vadd.xlane.f32.xlu0 %v2160
    %v2162 = vpop.xlane.xlu0 %2161
    %v2163 = vsel %vm101, %v2143, 0.0
    %2164 = vadd.xlane.f32.xlu0 %v2163
    %v2165 = vpop.xlane.xlu0 %2164
    %v2166 = vsel %vm101, %v2144, 0.0
    %2167 = vadd.xlane.f32.xlu0 %v2166
    %v2168 = vpop.xlane.xlu0 %2167
    %v2169 = vsel %vm101, %v2145, 0.0
    %2170 = vadd.xlane.f32.xlu0 %v2169
    %v2171 = vpop.xlane.xlu0 %2170
    %v2172 = vsel %vm101, %v2146, 0.0
    %2173 = vadd.xlane.f32.xlu0 %v2172
    %v2174 = vpop.xlane.xlu0 %2173
    %v2175 = vsel %vm101, %v2147, 0.0
    %2176 = vadd.xlane.f32.xlu0 %v2175
    %v2177 = vpop.xlane.xlu0 %2176
    %v2178 = vsel %vm101, %v2148, 0.0
    %2179 = vadd.xlane.f32.xlu0 %v2178
    %v2180 = vpop.xlane.xlu0 %2179
    %v2181 = vsel %vm101, %v2149, 0.0
    %2182 = vadd.xlane.f32.xlu0 %v2181
    %v2183 = vpop.xlane.xlu0 %2182
    %v2184 = vsel %vm101, %v2150, 0.0
    %2185 = vadd.xlane.f32.xlu0 %v2184
    %v2186 = vpop.xlane.xlu0 %2185
    %v2187 = vsel %vm101, %v2151, 0.0
    %2188 = vadd.xlane.f32.xlu0 %v2187
    %v2189 = vpop.xlane.xlu0 %2188
    %v2190 = vsel %vm101, %v2152, 0.0
    %2191 = vadd.xlane.f32.xlu0 %v2190
    %v2192 = vpop.xlane.xlu0 %2191
    %v2193 = vsel %vm101, %v2153, 0.0
    %2194 = vadd.xlane.f32.xlu0 %v2193
    %v2195 = vpop.xlane.xlu0 %2194
    %v2196 = vsel %vm101, %v2154, 0.0
    %2197 = vadd.xlane.f32.xlu0 %v2196
    %v2198 = vpop.xlane.xlu0 %2197
    %v2199 = vsel %vm101, %v2155, 0.0
    %2200 = vadd.xlane.f32.xlu0 %v2199
    %v2201 = vpop.xlane.xlu0 %2200
    %v2202 = vsel %vm101, %v2156, 0.0
    %2203 = vadd.xlane.f32.xlu0 %v2202
    %v2204 = vpop.xlane.xlu0 %2203
    %v2205 = vrsqrt.pop %v2159
    %v2206 = vmul.f32 %v2159, %v2205
    %vm2207 = vcmp.eq.f32.partialorder %v2159, inf
    %v2208 = vsel %vm2207, %v2159, %v2206
    %vm2209 = vcmp.eq.f32.partialorder %v2159, 0.0
    %v2210 = vand.u32 %v2159, 2147483648
    %v2211 = vsel %vm2209, %v2210, %v2208
    %v2212 = vrsqrt.pop %v2162
    %v2213 = vmul.f32 %v2162, %v2212
    %vm2214 = vcmp.eq.f32.partialorder %v2162, inf
    %v2215 = vsel %vm2214, %v2162, %v2213
    %vm2216 = vcmp.eq.f32.partialorder %v2162, 0.0
    %v2217 = vand.u32 %v2162, 2147483648
    %v2218 = vsel %vm2216, %v2217, %v2215
    %v2219 = vrsqrt.pop %v2165
    %v2220 = vmul.f32 %v2165, %v2219
    %vm2221 = vcmp.eq.f32.partialorder %v2165, inf
    %v2222 = vsel %vm2221, %v2165, %v2220
    %vm2223 = vcmp.eq.f32.partialorder %v2165, 0.0
    %v2224 = vand.u32 %v2165, 2147483648
    %v2225 = vsel %vm2223, %v2224, %v2222
    %v2226 = vrsqrt.pop %v2168
    %v2227 = vmul.f32 %v2168, %v2226
    %vm2228 = vcmp.eq.f32.partialorder %v2168, inf
    %v2229 = vsel %vm2228, %v2168, %v2227
    %vm2230 = vcmp.eq.f32.partialorder %v2168, 0.0
    %v2231 = vand.u32 %v2168, 2147483648
    %v2232 = vsel %vm2230, %v2231, %v2229
    %v2233 = vrsqrt.pop %v2171
    %v2234 = vmul.f32 %v2171, %v2233
    %vm2235 = vcmp.eq.f32.partialorder %v2171, inf
    %v2236 = vsel %vm2235, %v2171, %v2234
    %vm2237 = vcmp.eq.f32.partialorder %v2171, 0.0
    %v2238 = vand.u32 %v2171, 2147483648
    %v2239 = vsel %vm2237, %v2238, %v2236
    %v2240 = vrsqrt.pop %v2174
    %v2241 = vmul.f32 %v2174, %v2240
    %vm2242 = vcmp.eq.f32.partialorder %v2174, inf
    %v2243 = vsel %vm2242, %v2174, %v2241
    %vm2244 = vcmp.eq.f32.partialorder %v2174, 0.0
    %v2245 = vand.u32 %v2174, 2147483648
    %v2246 = vsel %vm2244, %v2245, %v2243
    %v2247 = vrsqrt.pop %v2177
    %v2248 = vmul.f32 %v2177, %v2247
    %vm2249 = vcmp.eq.f32.partialorder %v2177, inf
    %v2250 = vsel %vm2249, %v2177, %v2248
    %vm2251 = vcmp.eq.f32.partialorder %v2177, 0.0
    %v2252 = vand.u32 %v2177, 2147483648
    %v2253 = vsel %vm2251, %v2252, %v2250
    %v2254 = vrsqrt.pop %v2180
    %v2255 = vmul.f32 %v2180, %v2254
    %vm2256 = vcmp.eq.f32.partialorder %v2180, inf
    %v2257 = vsel %vm2256, %v2180, %v2255
    %vm2258 = vcmp.eq.f32.partialorder %v2180, 0.0
    %v2259 = vand.u32 %v2180, 2147483648
    %v2260 = vsel %vm2258, %v2259, %v2257
    %v2261 = vrsqrt.pop %v2183
    %v2262 = vmul.f32 %v2183, %v2261
    %vm2263 = vcmp.eq.f32.partialorder %v2183, inf
    %v2264 = vsel %vm2263, %v2183, %v2262
    %vm2265 = vcmp.eq.f32.partialorder %v2183, 0.0
    %v2266 = vand.u32 %v2183, 2147483648
    %v2267 = vsel %vm2265, %v2266, %v2264
    %v2268 = vrsqrt.pop %v2186
    %v2269 = vmul.f32 %v2186, %v2268
    %vm2270 = vcmp.eq.f32.partialorder %v2186, inf
    %v2271 = vsel %vm2270, %v2186, %v2269
    %vm2272 = vcmp.eq.f32.partialorder %v2186, 0.0
    %v2273 = vand.u32 %v2186, 2147483648
    %v2274 = vsel %vm2272, %v2273, %v2271
    %v2275 = vrsqrt.pop %v2189
    %v2276 = vmul.f32 %v2189, %v2275
    %vm2277 = vcmp.eq.f32.partialorder %v2189, inf
    %v2278 = vsel %vm2277, %v2189, %v2276
    %vm2279 = vcmp.eq.f32.partialorder %v2189, 0.0
    %v2280 = vand.u32 %v2189, 2147483648
    %v2281 = vsel %vm2279, %v2280, %v2278
    %v2282 = vrsqrt.pop %v2192
    %v2283 = vmul.f32 %v2192, %v2282
    %vm2284 = vcmp.eq.f32.partialorder %v2192, inf
    %v2285 = vsel %vm2284, %v2192, %v2283
    %vm2286 = vcmp.eq.f32.partialorder %v2192, 0.0
    %v2287 = vand.u32 %v2192, 2147483648
    %v2288 = vsel %vm2286, %v2287, %v2285
    %v2289 = vrsqrt.pop %v2195
    %v2290 = vmul.f32 %v2195, %v2289
    %vm2291 = vcmp.eq.f32.partialorder %v2195, inf
    %v2292 = vsel %vm2291, %v2195, %v2290
    %vm2293 = vcmp.eq.f32.partialorder %v2195, 0.0
    %v2294 = vand.u32 %v2195, 2147483648
    %v2295 = vsel %vm2293, %v2294, %v2292
    %v2296 = vrsqrt.pop %v2198
    %v2297 = vmul.f32 %v2198, %v2296
    %vm2298 = vcmp.eq.f32.partialorder %v2198, inf
    %v2299 = vsel %vm2298, %v2198, %v2297
    %vm2300 = vcmp.eq.f32.partialorder %v2198, 0.0
    %v2301 = vand.u32 %v2198, 2147483648
    %v2302 = vsel %vm2300, %v2301, %v2299
    %v2303 = vrsqrt.pop %v2201
    %v2304 = vmul.f32 %v2201, %v2303
    %vm2305 = vcmp.eq.f32.partialorder %v2201, inf
    %v2306 = vsel %vm2305, %v2201, %v2304
    %vm2307 = vcmp.eq.f32.partialorder %v2201, 0.0
    %v2308 = vand.u32 %v2201, 2147483648
    %v2309 = vsel %vm2307, %v2308, %v2306
    %v2310 = vrsqrt.pop %v2204
    %v2311 = vmul.f32 %v2204, %v2310
    %vm2312 = vcmp.eq.f32.partialorder %v2204, inf
    %v2313 = vsel %vm2312, %v2204, %v2311
    %vm2314 = vcmp.eq.f32.partialorder %v2204, 0.0
    %v2315 = vand.u32 %v2204, 2147483648
    %v2316 = vsel %vm2314, %v2315, %v2313
    %v2317 = vadd.f32 %v2211, 1e-09
    %v2318 = vadd.f32 %v2218, 1e-09
    %v2319 = vadd.f32 %v2225, 1e-09
    %v2320 = vadd.f32 %v2232, 1e-09
    %v2321 = vadd.f32 %v2239, 1e-09
    %v2322 = vadd.f32 %v2246, 1e-09
    %v2323 = vadd.f32 %v2253, 1e-09
    %v2324 = vadd.f32 %v2260, 1e-09
    %v2325 = vadd.f32 %v2267, 1e-09
    %v2326 = vadd.f32 %v2274, 1e-09
    %v2327 = vadd.f32 %v2281, 1e-09
    %v2328 = vadd.f32 %v2288, 1e-09
    %v2329 = vadd.f32 %v2295, 1e-09
    %v2330 = vadd.f32 %v2302, 1e-09
    %v2331 = vadd.f32 %v2309, 1e-09
    %v2332 = vadd.f32 %v2316, 1e-09
    %v2333 = vrcp.pop %v2317
    %v2334 = vrcp.pop %v2318
    %v2335 = vrcp.pop %v2319
    %v2336 = vrcp.pop %v2320
    %v2337 = vrcp.pop %v2321
    %v2338 = vrcp.pop %v2322
    %v2339 = vrcp.pop %v2323
    %v2340 = vrcp.pop %v2324
    %v2341 = vrcp.pop %v2325
    %v2342 = vrcp.pop %v2326
    %v2343 = vrcp.pop %v2327
    %v2344 = vrcp.pop %v2328
    %v2345 = vrcp.pop %v2329
    %v2346 = vrcp.pop %v2330
    %v2347 = vrcp.pop %v2331
    %v2348 = vrcp.pop %v2332
    %v2349 = vmul.f32 %v2125, %v2333
    %v2350 = vmul.f32 %v2126, %v2334
    %v2351 = vmul.f32 %v2127, %v2335
    %v2352 = vmul.f32 %v2128, %v2336
    %v2353 = vmul.f32 %v2129, %v2337
    %v2354 = vmul.f32 %v2130, %v2338
    %v2355 = vmul.f32 %v2131, %v2339
    %v2356 = vmul.f32 %v2132, %v2340
    %v2357 = vmul.f32 %v2133, %v2341
    %v2358 = vmul.f32 %v2134, %v2342
    %v2359 = vmul.f32 %v2135, %v2343
    %v2360 = vmul.f32 %v2136, %v2344
    %v2361 = vmul.f32 %v2137, %v2345
    %v2362 = vmul.f32 %v2138, %v2346
    %v2363 = vmul.f32 %v2139, %v2347
    %v2364 = vmul.f32 %v2140, %v2348
    %2381 = vrot.lane.b32.xlu0 %v2141, 112
    %v2382 = vpop.permute.xlu0 %2381
    %2383 = vrot.lane.b32.xlu0 %v2142, 112
    %v2384 = vpop.permute.xlu0 %2383
    %2385 = vrot.lane.b32.xlu0 %v2143, 112
    %v2386 = vpop.permute.xlu0 %2385
    %2387 = vrot.lane.b32.xlu0 %v2144, 112
    %v2388 = vpop.permute.xlu0 %2387
    %2389 = vrot.lane.b32.xlu0 %v2145, 112
    %v2390 = vpop.permute.xlu0 %2389
    %2391 = vrot.lane.b32.xlu0 %v2146, 112
    %v2392 = vpop.permute.xlu0 %2391
    %2393 = vrot.lane.b32.xlu0 %v2147, 112
    %v2394 = vpop.permute.xlu0 %2393
    %2395 = vrot.lane.b32.xlu0 %v2148, 112
    %v2396 = vpop.permute.xlu0 %2395
    %2397 = vrot.lane.b32.xlu0 %v2149, 112
    %v2398 = vpop.permute.xlu0 %2397
    %2399 = vrot.lane.b32.xlu0 %v2150, 112
    %v2400 = vpop.permute.xlu0 %2399
    %2401 = vrot.lane.b32.xlu0 %v2151, 112
    %v2402 = vpop.permute.xlu0 %2401
    %2403 = vrot.lane.b32.xlu0 %v2152, 112
    %v2404 = vpop.permute.xlu0 %2403
    %2405 = vrot.lane.b32.xlu0 %v2153, 112
    %v2406 = vpop.permute.xlu0 %2405
    %2407 = vrot.lane.b32.xlu0 %v2154, 112
    %v2408 = vpop.permute.xlu0 %2407
    %2409 = vrot.lane.b32.xlu0 %v2155, 112
    %v2410 = vpop.permute.xlu0 %2409
    %2411 = vrot.lane.b32.xlu0 %v2156, 112
    %v2412 = vpop.permute.xlu0 %2411
    %vm2429 = vcmask 31744
    %v2430 = vsel %vm2429, %v2382, 0.0
    %2431 = vadd.xlane.f32.xlu0 %v2430
    %v2432 = vpop.xlane.xlu0 %2431
    %v2433 = vsel %vm2429, %v2384, 0.0
    %2434 = vadd.xlane.f32.xlu0 %v2433
    %v2435 = vpop.xlane.xlu0 %2434
    %v2436 = vsel %vm2429, %v2386, 0.0
    %2437 = vadd.xlane.f32.xlu0 %v2436
    %v2438 = vpop.xlane.xlu0 %2437
    %v2439 = vsel %vm2429, %v2388, 0.0
    %2440 = vadd.xlane.f32.xlu0 %v2439
    %v2441 = vpop.xlane.xlu0 %2440
    %v2442 = vsel %vm2429, %v2390, 0.0
    %2443 = vadd.xlane.f32.xlu0 %v2442
    %v2444 = vpop.xlane.xlu0 %2443
    %v2445 = vsel %vm2429, %v2392, 0.0
    %2446 = vadd.xlane.f32.xlu0 %v2445
    %v2447 = vpop.xlane.xlu0 %2446
    %v2448 = vsel %vm2429, %v2394, 0.0
    %2449 = vadd.xlane.f32.xlu0 %v2448
    %v2450 = vpop.xlane.xlu0 %2449
    %v2451 = vsel %vm2429, %v2396, 0.0
    %2452 = vadd.xlane.f32.xlu0 %v2451
    %v2453 = vpop.xlane.xlu0 %2452
    %v2454 = vsel %vm2429, %v2398, 0.0
    %2455 = vadd.xlane.f32.xlu0 %v2454
    %v2456 = vpop.xlane.xlu0 %2455
    %v2457 = vsel %vm2429, %v2400, 0.0
    %2458 = vadd.xlane.f32.xlu0 %v2457
    %v2459 = vpop.xlane.xlu0 %2458
    %v2460 = vsel %vm2429, %v2402, 0.0
    %2461 = vadd.xlane.f32.xlu0 %v2460
    %v2462 = vpop.xlane.xlu0 %2461
    %v2463 = vsel %vm2429, %v2404, 0.0
    %2464 = vadd.xlane.f32.xlu0 %v2463
    %v2465 = vpop.xlane.xlu0 %2464
    %v2466 = vsel %vm2429, %v2406, 0.0
    %2467 = vadd.xlane.f32.xlu0 %v2466
    %v2468 = vpop.xlane.xlu0 %2467
    %v2469 = vsel %vm2429, %v2408, 0.0
    %2470 = vadd.xlane.f32.xlu0 %v2469
    %v2471 = vpop.xlane.xlu0 %2470
    %v2472 = vsel %vm2429, %v2410, 0.0
    %2473 = vadd.xlane.f32.xlu0 %v2472
    %v2474 = vpop.xlane.xlu0 %2473
    %v2475 = vsel %vm2429, %v2412, 0.0
    %2476 = vadd.xlane.f32.xlu0 %v2475
    %v2477 = vpop.xlane.xlu0 %2476
    %v2478 = vrsqrt.pop %v2432
    %v2479 = vmul.f32 %v2432, %v2478
    %vm2480 = vcmp.eq.f32.partialorder %v2432, inf
    %v2481 = vsel %vm2480, %v2432, %v2479
    %vm2482 = vcmp.eq.f32.partialorder %v2432, 0.0
    %v2483 = vand.u32 %v2432, 2147483648
    %v2484 = vsel %vm2482, %v2483, %v2481
    %v2485 = vrsqrt.pop %v2435
    %v2486 = vmul.f32 %v2435, %v2485
    %vm2487 = vcmp.eq.f32.partialorder %v2435, inf
    %v2488 = vsel %vm2487, %v2435, %v2486
    %vm2489 = vcmp.eq.f32.partialorder %v2435, 0.0
    %v2490 = vand.u32 %v2435, 2147483648
    %v2491 = vsel %vm2489, %v2490, %v2488
    %v2492 = vrsqrt.pop %v2438
    %v2493 = vmul.f32 %v2438, %v2492
    %vm2494 = vcmp.eq.f32.partialorder %v2438, inf
    %v2495 = vsel %vm2494, %v2438, %v2493
    %vm2496 = vcmp.eq.f32.partialorder %v2438, 0.0
    %v2497 = vand.u32 %v2438, 2147483648
    %v2498 = vsel %vm2496, %v2497, %v2495
    %v2499 = vrsqrt.pop %v2441
    %v2500 = vmul.f32 %v2441, %v2499
    %vm2501 = vcmp.eq.f32.partialorder %v2441, inf
    %v2502 = vsel %vm2501, %v2441, %v2500
    %vm2503 = vcmp.eq.f32.partialorder %v2441, 0.0
    %v2504 = vand.u32 %v2441, 2147483648
    %v2505 = vsel %vm2503, %v2504, %v2502
    %v2506 = vrsqrt.pop %v2444
    %v2507 = vmul.f32 %v2444, %v2506
    %vm2508 = vcmp.eq.f32.partialorder %v2444, inf
    %v2509 = vsel %vm2508, %v2444, %v2507
    %vm2510 = vcmp.eq.f32.partialorder %v2444, 0.0
    %v2511 = vand.u32 %v2444, 2147483648
    %v2512 = vsel %vm2510, %v2511, %v2509
    %v2513 = vrsqrt.pop %v2447
    %v2514 = vmul.f32 %v2447, %v2513
    %vm2515 = vcmp.eq.f32.partialorder %v2447, inf
    %v2516 = vsel %vm2515, %v2447, %v2514
    %vm2517 = vcmp.eq.f32.partialorder %v2447, 0.0
    %v2518 = vand.u32 %v2447, 2147483648
    %v2519 = vsel %vm2517, %v2518, %v2516
    %v2520 = vrsqrt.pop %v2450
    %v2521 = vmul.f32 %v2450, %v2520
    %vm2522 = vcmp.eq.f32.partialorder %v2450, inf
    %v2523 = vsel %vm2522, %v2450, %v2521
    %vm2524 = vcmp.eq.f32.partialorder %v2450, 0.0
    %v2525 = vand.u32 %v2450, 2147483648
    %v2526 = vsel %vm2524, %v2525, %v2523
    %v2527 = vrsqrt.pop %v2453
    %v2528 = vmul.f32 %v2453, %v2527
    %vm2529 = vcmp.eq.f32.partialorder %v2453, inf
    %v2530 = vsel %vm2529, %v2453, %v2528
    %vm2531 = vcmp.eq.f32.partialorder %v2453, 0.0
    %v2532 = vand.u32 %v2453, 2147483648
    %v2533 = vsel %vm2531, %v2532, %v2530
    %v2534 = vrsqrt.pop %v2456
    %v2535 = vmul.f32 %v2456, %v2534
    %vm2536 = vcmp.eq.f32.partialorder %v2456, inf
    %v2537 = vsel %vm2536, %v2456, %v2535
    %vm2538 = vcmp.eq.f32.partialorder %v2456, 0.0
    %v2539 = vand.u32 %v2456, 2147483648
    %v2540 = vsel %vm2538, %v2539, %v2537
    %v2541 = vrsqrt.pop %v2459
    %v2542 = vmul.f32 %v2459, %v2541
    %vm2543 = vcmp.eq.f32.partialorder %v2459, inf
    %v2544 = vsel %vm2543, %v2459, %v2542
    %vm2545 = vcmp.eq.f32.partialorder %v2459, 0.0
    %v2546 = vand.u32 %v2459, 2147483648
    %v2547 = vsel %vm2545, %v2546, %v2544
    %v2548 = vrsqrt.pop %v2462
    %v2549 = vmul.f32 %v2462, %v2548
    %vm2550 = vcmp.eq.f32.partialorder %v2462, inf
    %v2551 = vsel %vm2550, %v2462, %v2549
    %vm2552 = vcmp.eq.f32.partialorder %v2462, 0.0
    %v2553 = vand.u32 %v2462, 2147483648
    %v2554 = vsel %vm2552, %v2553, %v2551
    %v2555 = vrsqrt.pop %v2465
    %v2556 = vmul.f32 %v2465, %v2555
    %vm2557 = vcmp.eq.f32.partialorder %v2465, inf
    %v2558 = vsel %vm2557, %v2465, %v2556
    %vm2559 = vcmp.eq.f32.partialorder %v2465, 0.0
    %v2560 = vand.u32 %v2465, 2147483648
    %v2561 = vsel %vm2559, %v2560, %v2558
    %v2562 = vrsqrt.pop %v2468
    %v2563 = vmul.f32 %v2468, %v2562
    %vm2564 = vcmp.eq.f32.partialorder %v2468, inf
    %v2565 = vsel %vm2564, %v2468, %v2563
    %vm2566 = vcmp.eq.f32.partialorder %v2468, 0.0
    %v2567 = vand.u32 %v2468, 2147483648
    %v2568 = vsel %vm2566, %v2567, %v2565
    %v2569 = vrsqrt.pop %v2471
    %v2570 = vmul.f32 %v2471, %v2569
    %vm2571 = vcmp.eq.f32.partialorder %v2471, inf
    %v2572 = vsel %vm2571, %v2471, %v2570
    %vm2573 = vcmp.eq.f32.partialorder %v2471, 0.0
    %v2574 = vand.u32 %v2471, 2147483648
    %v2575 = vsel %vm2573, %v2574, %v2572
    %v2576 = vrsqrt.pop %v2474
    %v2577 = vmul.f32 %v2474, %v2576
    %vm2578 = vcmp.eq.f32.partialorder %v2474, inf
    %v2579 = vsel %vm2578, %v2474, %v2577
    %vm2580 = vcmp.eq.f32.partialorder %v2474, 0.0
    %v2581 = vand.u32 %v2474, 2147483648
    %v2582 = vsel %vm2580, %v2581, %v2579
    %v2583 = vrsqrt.pop %v2477
    %v2584 = vmul.f32 %v2477, %v2583
    %vm2585 = vcmp.eq.f32.partialorder %v2477, inf
    %v2586 = vsel %vm2585, %v2477, %v2584
    %vm2587 = vcmp.eq.f32.partialorder %v2477, 0.0
    %v2588 = vand.u32 %v2477, 2147483648
    %v2589 = vsel %vm2587, %v2588, %v2586
    %v2590 = vadd.f32 %v2484, 1e-09
    %v2591 = vadd.f32 %v2491, 1e-09
    %v2592 = vadd.f32 %v2498, 1e-09
    %v2593 = vadd.f32 %v2505, 1e-09
    %v2594 = vadd.f32 %v2512, 1e-09
    %v2595 = vadd.f32 %v2519, 1e-09
    %v2596 = vadd.f32 %v2526, 1e-09
    %v2597 = vadd.f32 %v2533, 1e-09
    %v2598 = vadd.f32 %v2540, 1e-09
    %v2599 = vadd.f32 %v2547, 1e-09
    %v2600 = vadd.f32 %v2554, 1e-09
    %v2601 = vadd.f32 %v2561, 1e-09
    %v2602 = vadd.f32 %v2568, 1e-09
    %v2603 = vadd.f32 %v2575, 1e-09
    %v2604 = vadd.f32 %v2582, 1e-09
    %v2605 = vadd.f32 %v2589, 1e-09
    %v2606 = vrcp.pop %v2590
    %v2607 = vrcp.pop %v2591
    %v2608 = vrcp.pop %v2592
    %v2609 = vrcp.pop %v2593
    %v2610 = vrcp.pop %v2594
    %v2611 = vrcp.pop %v2595
    %v2612 = vrcp.pop %v2596
    %v2613 = vrcp.pop %v2597
    %v2614 = vrcp.pop %v2598
    %v2615 = vrcp.pop %v2599
    %v2616 = vrcp.pop %v2600
    %v2617 = vrcp.pop %v2601
    %v2618 = vrcp.pop %v2602
    %v2619 = vrcp.pop %v2603
    %v2620 = vrcp.pop %v2604
    %v2621 = vrcp.pop %v2605
    %v2622 = vmul.f32 %v2125, %v2606
    %v2623 = vmul.f32 %v2126, %v2607
    %v2624 = vmul.f32 %v2127, %v2608
    %v2625 = vmul.f32 %v2128, %v2609
    %v2626 = vmul.f32 %v2129, %v2610
    %v2627 = vmul.f32 %v2130, %v2611
    %v2628 = vmul.f32 %v2131, %v2612
    %v2629 = vmul.f32 %v2132, %v2613
    %v2630 = vmul.f32 %v2133, %v2614
    %v2631 = vmul.f32 %v2134, %v2615
    %v2632 = vmul.f32 %v2135, %v2616
    %v2633 = vmul.f32 %v2136, %v2617
    %v2634 = vmul.f32 %v2137, %v2618
    %v2635 = vmul.f32 %v2138, %v2619
    %v2636 = vmul.f32 %v2139, %v2620
    %v2637 = vmul.f32 %v2140, %v2621
    %vm2638 = vcmask 162944
    %v2639 = vsel %vm2638, %v2622, -inf
    %2640 = vmax.xlane.f32.xlu0 %v2639
    %v2641 = vpop.xlane.xlu0 %2640
    %v2642 = vsel %vm2638, %v2623, -inf
    %2643 = vmax.xlane.f32.xlu0 %v2642
    %v2644 = vpop.xlane.xlu0 %2643
    %v2645 = vsel %vm2638, %v2624, -inf
    %2646 = vmax.xlane.f32.xlu0 %v2645
    %v2647 = vpop.xlane.xlu0 %2646
    %v2648 = vsel %vm2638, %v2625, -inf
    %2649 = vmax.xlane.f32.xlu0 %v2648
    %v2650 = vpop.xlane.xlu0 %2649
    %v2651 = vsel %vm2638, %v2626, -inf
    %2652 = vmax.xlane.f32.xlu0 %v2651
    %v2653 = vpop.xlane.xlu0 %2652
    %v2654 = vsel %vm2638, %v2627, -inf
    %2655 = vmax.xlane.f32.xlu0 %v2654
    %v2656 = vpop.xlane.xlu0 %2655
    %v2657 = vsel %vm2638, %v2628, -inf
    %2658 = vmax.xlane.f32.xlu0 %v2657
    %v2659 = vpop.xlane.xlu0 %2658
    %v2660 = vsel %vm2638, %v2629, -inf
    %2661 = vmax.xlane.f32.xlu0 %v2660
    %v2662 = vpop.xlane.xlu0 %2661
    %v2663 = vsel %vm2638, %v2630, -inf
    %2664 = vmax.xlane.f32.xlu0 %v2663
    %v2665 = vpop.xlane.xlu0 %2664
    %v2666 = vsel %vm2638, %v2631, -inf
    %2667 = vmax.xlane.f32.xlu0 %v2666
    %v2668 = vpop.xlane.xlu0 %2667
    %v2669 = vsel %vm2638, %v2632, -inf
    %2670 = vmax.xlane.f32.xlu0 %v2669
    %v2671 = vpop.xlane.xlu0 %2670
    %v2672 = vsel %vm2638, %v2633, -inf
    %2673 = vmax.xlane.f32.xlu0 %v2672
    %v2674 = vpop.xlane.xlu0 %2673
    %v2675 = vsel %vm2638, %v2634, -inf
    %2676 = vmax.xlane.f32.xlu0 %v2675
    %v2677 = vpop.xlane.xlu0 %2676
    %v2678 = vsel %vm2638, %v2635, -inf
    %2679 = vmax.xlane.f32.xlu0 %v2678
    %v2680 = vpop.xlane.xlu0 %2679
    %v2681 = vsel %vm2638, %v2636, -inf
    %2682 = vmax.xlane.f32.xlu0 %v2681
    %v2683 = vpop.xlane.xlu0 %2682
    %v2684 = vsel %vm2638, %v2637, -inf
    %2685 = vmax.xlane.f32.xlu0 %v2684
    %v2686 = vpop.xlane.xlu0 %2685
    %v2687 = vsub.f32 %v2622, %v2641
    %v2688 = vsub.f32 %v2623, %v2644
    %v2689 = vsub.f32 %v2624, %v2647
    %v2690 = vsub.f32 %v2625, %v2650
    %v2691 = vsub.f32 %v2626, %v2653
    %v2692 = vsub.f32 %v2627, %v2656
    %v2693 = vsub.f32 %v2628, %v2659
    %v2694 = vsub.f32 %v2629, %v2662
    %v2695 = vsub.f32 %v2630, %v2665
    %v2696 = vsub.f32 %v2631, %v2668
    %v2697 = vsub.f32 %v2632, %v2671
    %v2698 = vsub.f32 %v2633, %v2674
    %v2699 = vsub.f32 %v2634, %v2677
    %v2700 = vsub.f32 %v2635, %v2680
    %v2701 = vsub.f32 %v2636, %v2683
    %v2702 = vsub.f32 %v2637, %v2686
    %v2703 = vmul.f32 %v2687, 1.442695
    %v2704 = vpow.pop %v2703
    %v2705 = vmul.f32 %v2688, 1.442695
    %v2706 = vpow.pop %v2705
    %v2707 = vmul.f32 %v2689, 1.442695
    %v2708 = vpow.pop %v2707
    %v2709 = vmul.f32 %v2690, 1.442695
    %v2710 = vpow.pop %v2709
    %v2711 = vmul.f32 %v2691, 1.442695
    %v2712 = vpow.pop %v2711
    %v2713 = vmul.f32 %v2692, 1.442695
    %v2714 = vpow.pop %v2713
    %v2715 = vmul.f32 %v2693, 1.442695
    %v2716 = vpow.pop %v2715
    %v2717 = vmul.f32 %v2694, 1.442695
    %v2718 = vpow.pop %v2717
    %v2719 = vmul.f32 %v2695, 1.442695
    %v2720 = vpow.pop %v2719
    %v2721 = vmul.f32 %v2696, 1.442695
    %v2722 = vpow.pop %v2721
    %v2723 = vmul.f32 %v2697, 1.442695
    %v2724 = vpow.pop %v2723
    %v2725 = vmul.f32 %v2698, 1.442695
    %v2726 = vpow.pop %v2725
    %v2727 = vmul.f32 %v2699, 1.442695
    %v2728 = vpow.pop %v2727
    %v2729 = vmul.f32 %v2700, 1.442695
    %v2730 = vpow.pop %v2729
    %v2731 = vmul.f32 %v2701, 1.442695
    %v2732 = vpow.pop %v2731
    %v2733 = vmul.f32 %v2702, 1.442695
    %v2734 = vpow.pop %v2733
    %2751 = vrot.lane.b32.xlu0 %v2704, 112
    %v2752 = vpop.permute.xlu0 %2751
    %2753 = vrot.lane.b32.xlu0 %v2706, 112
    %v2754 = vpop.permute.xlu0 %2753
    %2755 = vrot.lane.b32.xlu0 %v2708, 112
    %v2756 = vpop.permute.xlu0 %2755
    %2757 = vrot.lane.b32.xlu0 %v2710, 112
    %v2758 = vpop.permute.xlu0 %2757
    %2759 = vrot.lane.b32.xlu0 %v2712, 112
    %v2760 = vpop.permute.xlu0 %2759
    %2761 = vrot.lane.b32.xlu0 %v2714, 112
    %v2762 = vpop.permute.xlu0 %2761
    %2763 = vrot.lane.b32.xlu0 %v2716, 112
    %v2764 = vpop.permute.xlu0 %2763
    %2765 = vrot.lane.b32.xlu0 %v2718, 112
    %v2766 = vpop.permute.xlu0 %2765
    %2767 = vrot.lane.b32.xlu0 %v2720, 112
    %v2768 = vpop.permute.xlu0 %2767
    %2769 = vrot.lane.b32.xlu0 %v2722, 112
    %v2770 = vpop.permute.xlu0 %2769
    %2771 = vrot.lane.b32.xlu0 %v2724, 112
    %v2772 = vpop.permute.xlu0 %2771
    %2773 = vrot.lane.b32.xlu0 %v2726, 112
    %v2774 = vpop.permute.xlu0 %2773
    %2775 = vrot.lane.b32.xlu0 %v2728, 112
    %v2776 = vpop.permute.xlu0 %2775
    %2777 = vrot.lane.b32.xlu0 %v2730, 112
    %v2778 = vpop.permute.xlu0 %2777
    %2779 = vrot.lane.b32.xlu0 %v2732, 112
    %v2780 = vpop.permute.xlu0 %2779
    %2781 = vrot.lane.b32.xlu0 %v2734, 112
    %v2782 = vpop.permute.xlu0 %2781
    %v2799 = vsel %vm2429, %v2752, 0.0
    %2800 = vadd.xlane.f32.xlu0 %v2799
    %v2801 = vpop.xlane.xlu0 %2800
    %v2802 = vsel %vm2429, %v2754, 0.0
    %2803 = vadd.xlane.f32.xlu0 %v2802
    %v2804 = vpop.xlane.xlu0 %2803
    %v2805 = vsel %vm2429, %v2756, 0.0
    %2806 = vadd.xlane.f32.xlu0 %v2805
    %v2807 = vpop.xlane.xlu0 %2806
    %v2808 = vsel %vm2429, %v2758, 0.0
    %2809 = vadd.xlane.f32.xlu0 %v2808
    %v2810 = vpop.xlane.xlu0 %2809
    %v2811 = vsel %vm2429, %v2760, 0.0
    %2812 = vadd.xlane.f32.xlu0 %v2811
    %v2813 = vpop.xlane.xlu0 %2812
    %v2814 = vsel %vm2429, %v2762, 0.0
    %2815 = vadd.xlane.f32.xlu0 %v2814
    %v2816 = vpop.xlane.xlu0 %2815
    %v2817 = vsel %vm2429, %v2764, 0.0
    %2818 = vadd.xlane.f32.xlu0 %v2817
    %v2819 = vpop.xlane.xlu0 %2818
    %v2820 = vsel %vm2429, %v2766, 0.0
    %2821 = vadd.xlane.f32.xlu0 %v2820
    %v2822 = vpop.xlane.xlu0 %2821
    %v2823 = vsel %vm2429, %v2768, 0.0
    %2824 = vadd.xlane.f32.xlu0 %v2823
    %v2825 = vpop.xlane.xlu0 %2824
    %v2826 = vsel %vm2429, %v2770, 0.0
    %2827 = vadd.xlane.f32.xlu0 %v2826
    %v2828 = vpop.xlane.xlu0 %2827
    %v2829 = vsel %vm2429, %v2772, 0.0
    %2830 = vadd.xlane.f32.xlu0 %v2829
    %v2831 = vpop.xlane.xlu0 %2830
    %v2832 = vsel %vm2429, %v2774, 0.0
    %2833 = vadd.xlane.f32.xlu0 %v2832
    %v2834 = vpop.xlane.xlu0 %2833
    %v2835 = vsel %vm2429, %v2776, 0.0
    %2836 = vadd.xlane.f32.xlu0 %v2835
    %v2837 = vpop.xlane.xlu0 %2836
    %v2838 = vsel %vm2429, %v2778, 0.0
    %2839 = vadd.xlane.f32.xlu0 %v2838
    %v2840 = vpop.xlane.xlu0 %2839
    %v2841 = vsel %vm2429, %v2780, 0.0
    %2842 = vadd.xlane.f32.xlu0 %v2841
    %v2843 = vpop.xlane.xlu0 %2842
    %v2844 = vsel %vm2429, %v2782, 0.0
    %2845 = vadd.xlane.f32.xlu0 %v2844
    %v2846 = vpop.xlane.xlu0 %2845
    %v2847 = vrcp.pop %v2801
    %v2848 = vrcp.pop %v2804
    %v2849 = vrcp.pop %v2807
    %v2850 = vrcp.pop %v2810
    %v2851 = vrcp.pop %v2813
    %v2852 = vrcp.pop %v2816
    %v2853 = vrcp.pop %v2819
    %v2854 = vrcp.pop %v2822
    %v2855 = vrcp.pop %v2825
    %v2856 = vrcp.pop %v2828
    %v2857 = vrcp.pop %v2831
    %v2858 = vrcp.pop %v2834
    %v2859 = vrcp.pop %v2837
    %v2860 = vrcp.pop %v2840
    %v2861 = vrcp.pop %v2843
    %v2862 = vrcp.pop %v2846
    %v2863 = vmul.f32 %v2704, %v2847
    %v2864 = vmul.f32 %v2706, %v2848
    %v2865 = vmul.f32 %v2708, %v2849
    %v2866 = vmul.f32 %v2710, %v2850
    %v2867 = vmul.f32 %v2712, %v2851
    %v2868 = vmul.f32 %v2714, %v2852
    %v2869 = vmul.f32 %v2716, %v2853
    %v2870 = vmul.f32 %v2718, %v2854
    %v2871 = vmul.f32 %v2720, %v2855
    %v2872 = vmul.f32 %v2722, %v2856
    %v2873 = vmul.f32 %v2724, %v2857
    %v2874 = vmul.f32 %v2726, %v2858
    %v2875 = vmul.f32 %v2728, %v2859
    %v2876 = vmul.f32 %v2730, %v2860
    %v2877 = vmul.f32 %v2732, %v2861
    %v2878 = vmul.f32 %v2734, %v2862
    %v2879 = vmul.f32 %v2863, 1.442695
    %v2880 = vpow.pop %v2879
    %v2881 = vmul.f32 %v2864, 1.442695
    %v2882 = vpow.pop %v2881
    %v2883 = vmul.f32 %v2865, 1.442695
    %v2884 = vpow.pop %v2883
    %v2885 = vmul.f32 %v2866, 1.442695
    %v2886 = vpow.pop %v2885
    %v2887 = vmul.f32 %v2867, 1.442695
    %v2888 = vpow.pop %v2887
    %v2889 = vmul.f32 %v2868, 1.442695
    %v2890 = vpow.pop %v2889
    %v2891 = vmul.f32 %v2869, 1.442695
    %v2892 = vpow.pop %v2891
    %v2893 = vmul.f32 %v2870, 1.442695
    %v2894 = vpow.pop %v2893
    %v2895 = vmul.f32 %v2871, 1.442695
    %v2896 = vpow.pop %v2895
    %v2897 = vmul.f32 %v2872, 1.442695
    %v2898 = vpow.pop %v2897
    %v2899 = vmul.f32 %v2873, 1.442695
    %v2900 = vpow.pop %v2899
    %v2901 = vmul.f32 %v2874, 1.442695
    %v2902 = vpow.pop %v2901
    %v2903 = vmul.f32 %v2875, 1.442695
    %v2904 = vpow.pop %v2903
    %v2905 = vmul.f32 %v2876, 1.442695
    %v2906 = vpow.pop %v2905
    %v2907 = vmul.f32 %v2877, 1.442695
    %v2908 = vpow.pop %v2907
    %v2909 = vmul.f32 %v2878, 1.442695
    %v2910 = vpow.pop %v2909
    %2927 = vrot.lane.b32.xlu0 %v2880, 112
    %v2928 = vpop.permute.xlu0 %2927
    %2929 = vrot.lane.b32.xlu0 %v2882, 112
    %v2930 = vpop.permute.xlu0 %2929
    %2931 = vrot.lane.b32.xlu0 %v2884, 112
    %v2932 = vpop.permute.xlu0 %2931
    %2933 = vrot.lane.b32.xlu0 %v2886, 112
    %v2934 = vpop.permute.xlu0 %2933
    %2935 = vrot.lane.b32.xlu0 %v2888, 112
    %v2936 = vpop.permute.xlu0 %2935
    %2937 = vrot.lane.b32.xlu0 %v2890, 112
    %v2938 = vpop.permute.xlu0 %2937
    %2939 = vrot.lane.b32.xlu0 %v2892, 112
    %v2940 = vpop.permute.xlu0 %2939
    %2941 = vrot.lane.b32.xlu0 %v2894, 112
    %v2942 = vpop.permute.xlu0 %2941
    %2943 = vrot.lane.b32.xlu0 %v2896, 112
    %v2944 = vpop.permute.xlu0 %2943
    %2945 = vrot.lane.b32.xlu0 %v2898, 112
    %v2946 = vpop.permute.xlu0 %2945
    %2947 = vrot.lane.b32.xlu0 %v2900, 112
    %v2948 = vpop.permute.xlu0 %2947
    %2949 = vrot.lane.b32.xlu0 %v2902, 112
    %v2950 = vpop.permute.xlu0 %2949
    %2951 = vrot.lane.b32.xlu0 %v2904, 112
    %v2952 = vpop.permute.xlu0 %2951
    %2953 = vrot.lane.b32.xlu0 %v2906, 112
    %v2954 = vpop.permute.xlu0 %2953
    %2955 = vrot.lane.b32.xlu0 %v2908, 112
    %v2956 = vpop.permute.xlu0 %2955
    %2957 = vrot.lane.b32.xlu0 %v2910, 112
    %v2958 = vpop.permute.xlu0 %2957
    %v2975 = vsel %vm2429, %v2928, 0.0
    %2976 = vadd.xlane.f32.xlu0 %v2975
    %v2977 = vpop.xlane.xlu0 %2976
    %v2978 = vsel %vm2429, %v2930, 0.0
    %2979 = vadd.xlane.f32.xlu0 %v2978
    %v2980 = vpop.xlane.xlu0 %2979
    %v2981 = vsel %vm2429, %v2932, 0.0
    %2982 = vadd.xlane.f32.xlu0 %v2981
    %v2983 = vpop.xlane.xlu0 %2982
    %v2984 = vsel %vm2429, %v2934, 0.0
    %2985 = vadd.xlane.f32.xlu0 %v2984
    %v2986 = vpop.xlane.xlu0 %2985
    %v2987 = vsel %vm2429, %v2936, 0.0
    %2988 = vadd.xlane.f32.xlu0 %v2987
    %v2989 = vpop.xlane.xlu0 %2988
    %v2990 = vsel %vm2429, %v2938, 0.0
    %2991 = vadd.xlane.f32.xlu0 %v2990
    %v2992 = vpop.xlane.xlu0 %2991
    %v2993 = vsel %vm2429, %v2940, 0.0
    %2994 = vadd.xlane.f32.xlu0 %v2993
    %v2995 = vpop.xlane.xlu0 %2994
    %v2996 = vsel %vm2429, %v2942, 0.0
    %2997 = vadd.xlane.f32.xlu0 %v2996
    %v2998 = vpop.xlane.xlu0 %2997
    %v2999 = vsel %vm2429, %v2944, 0.0
    %3000 = vadd.xlane.f32.xlu0 %v2999
    %v3001 = vpop.xlane.xlu0 %3000
    %v3002 = vsel %vm2429, %v2946, 0.0
    %3003 = vadd.xlane.f32.xlu0 %v3002
    %v3004 = vpop.xlane.xlu0 %3003
    %v3005 = vsel %vm2429, %v2948, 0.0
    %3006 = vadd.xlane.f32.xlu0 %v3005
    %v3007 = vpop.xlane.xlu0 %3006
    %v3008 = vsel %vm2429, %v2950, 0.0
    %3009 = vadd.xlane.f32.xlu0 %v3008
    %v3010 = vpop.xlane.xlu0 %3009
    %v3011 = vsel %vm2429, %v2952, 0.0
    %3012 = vadd.xlane.f32.xlu0 %v3011
    %v3013 = vpop.xlane.xlu0 %3012
    %v3014 = vsel %vm2429, %v2954, 0.0
    %3015 = vadd.xlane.f32.xlu0 %v3014
    %v3016 = vpop.xlane.xlu0 %3015
    %v3017 = vsel %vm2429, %v2956, 0.0
    %3018 = vadd.xlane.f32.xlu0 %v3017
    %v3019 = vpop.xlane.xlu0 %3018
    %v3020 = vsel %vm2429, %v2958, 0.0
    %3021 = vadd.xlane.f32.xlu0 %v3020
    %v3022 = vpop.xlane.xlu0 %3021
    %v3023 = vrcp.pop %v2977
    %v3024 = vrcp.pop %v2980
    %v3025 = vrcp.pop %v2983
    %v3026 = vrcp.pop %v2986
    %v3027 = vrcp.pop %v2989
    %v3028 = vrcp.pop %v2992
    %v3029 = vrcp.pop %v2995
    %v3030 = vrcp.pop %v2998
    %v3031 = vrcp.pop %v3001
    %v3032 = vrcp.pop %v3004
    %v3033 = vrcp.pop %v3007
    %v3034 = vrcp.pop %v3010
    %v3035 = vrcp.pop %v3013
    %v3036 = vrcp.pop %v3016
    %v3037 = vrcp.pop %v3019
    %v3038 = vrcp.pop %v3022
    %v3039 = vmul.f32 %v2880, %v3023
    %v3040 = vmul.f32 %v2882, %v3024
    %v3041 = vmul.f32 %v2884, %v3025
    %v3042 = vmul.f32 %v2886, %v3026
    %v3043 = vmul.f32 %v2888, %v3027
    %v3044 = vmul.f32 %v2890, %v3028
    %v3045 = vmul.f32 %v2892, %v3029
    %v3046 = vmul.f32 %v2894, %v3030
    %v3047 = vmul.f32 %v2896, %v3031
    %v3048 = vmul.f32 %v2898, %v3032
    %v3049 = vmul.f32 %v2900, %v3033
    %v3050 = vmul.f32 %v2902, %v3034
    %v3051 = vmul.f32 %v2904, %v3035
    %v3052 = vmul.f32 %v2906, %v3036
    %v3053 = vmul.f32 %v2908, %v3037
    %v3054 = vmul.f32 %v2910, %v3038
    %3057 = vrot.lane.b32.xlu0 %v3039, 112
    %v3058 = vpop.permute.xlu0 %3057
    %3059 = vrot.lane.b32.xlu0 %v3040, 112
    %v3060 = vpop.permute.xlu0 %3059
    %3063 = vxpose.xlu0.b32.start [1/16] %v3058, 128
    %3064 = vxpose.xlu0.b32.cont [2/16] %v3060, 128
    %3065 = vxpose.xlu0.b32.cont [3/16] 0.0, 128
    %3066 = vxpose.xlu0.b32.cont [4/16] 0.0, 128
    %3067 = vxpose.xlu0.b32.cont [5/16] 0.0, 128
    %3068 = vxpose.xlu0.b32.cont [6/16] 0.0, 128
    %3069 = vxpose.xlu0.b32.cont [7/16] 0.0, 128
    %3070 = vxpose.xlu0.b32.cont [8/16] 0.0, 128
    %3071 = vxpose.xlu0.b32.cont [9/16] 0.0, 128
    %3072 = vxpose.xlu0.b32.cont [10/16] 0.0, 128
    %3073 = vxpose.xlu0.b32.cont [11/16] 0.0, 128
    %3074 = vxpose.xlu0.b32.cont [12/16] 0.0, 128
    %3075 = vxpose.xlu0.b32.cont [13/16] 0.0, 128
    %3076 = vxpose.xlu0.b32.cont [14/16] 0.0, 128
    %3077 = vxpose.xlu0.b32.cont [15/16] 0.0, 128
    %3078 = vxpose.xlu0.b32.end [16/16] 0.0, 128
    %v3079 = vpop.trf.xlu0
    %v3080 = vpop.trf.xlu0
    %v3081 = vpop.trf.xlu0
    %v3082 = vpop.trf.xlu0
    %v3083 = vpop.trf.xlu0
    %v3084 = vpop.trf.xlu0
    %v3085 = vpop.trf.xlu0
    %v3086 = vpop.trf.xlu0
    %v3087 = vpop.trf.xlu0
    %v3088 = vpop.trf.xlu0
    %v3089 = vpop.trf.xlu0
    %v3090 = vpop.trf.xlu0
    %v3091 = vpop.trf.xlu0
    %v3092 = vpop.trf.xlu0
    %v3093 = vpop.trf.xlu0
    %v3094 = vpop.trf.xlu0
    %v3096 = vsel %vm101, %v3079, 0
    %3098 = vmatprep.subr.mxu0 0.0
    %3099 = vmatpush1.msra.mxu0 0.0
    %3100 = vmatprep.subr.mxu0 0.0
    %3101 = vmatpush1.msra.mxu0 0.0
    %3102 = vmatprep.subr.mxu0 0.0
    %3103 = vmatpush1.msra.mxu0 0.0
    %3104 = vmatprep.subr.mxu0 0.0
    %3105 = vmatpush1.msra.mxu0 0.0
    %3106 = vmatprep.subr.mxu0 0.0
    %3107 = vmatpush1.msra.mxu0 0.0
    %3108 = vmatprep.subr.mxu0 0.0
    %3109 = vmatpush1.msra.mxu0 0.0
    %3110 = vmatprep.subr.mxu0 0.0
    %3111 = vmatpush1.msra.mxu0 0.0
    %3112 = vmatprep.subr.mxu0 0.0
    %3113 = vmatpush1.msra.mxu0 0.0
    %3114 = vmatprep.subr.mxu0 0.0
    %3115 = vmatpush1.msra.mxu0 0.0
    %3116 = vmatprep.subr.mxu0 0.0
    %3117 = vmatpush1.msra.mxu0 0.0
    %3118 = vmatprep.subr.mxu0 0.0
    %3119 = vmatpush1.msra.mxu0 0.0
    %3120 = vmatprep.subr.mxu0 0.0
    %3121 = vmatpush1.msra.mxu0 0.0
    %3122 = vmatprep.subr.mxu0 0.0
    %3123 = vmatpush1.msra.mxu0 0.0
    %3124 = vmatprep.subr.mxu0 0.0
    %3125 = vmatpush1.msra.mxu0 0.0
    %3126 = vmatprep.subr.mxu0 0.0
    %3127 = vmatpush1.msra.mxu0 %v2350
    %3128 = vmatprep.subr.mxu0 0.0
    %3129 = vmatpush1.msra.mxu0 %v2349
    %3130 = vmatprep.subr.mxu0 0.0
    %3131 = vmatpush2.msra.mxu0 0.0
    %3132 = vmatprep.subr.mxu0 0.0
    %3133 = vmatpush2.msra.mxu0 0.0
    %3134 = vmatprep.subr.mxu0 0.0
    %3135 = vmatpush2.msra.mxu0 0.0
    %3136 = vmatprep.subr.mxu0 0.0
    %3137 = vmatpush2.msra.mxu0 0.0
    %3138 = vmatprep.subr.mxu0 0.0
    %3139 = vmatpush2.msra.mxu0 0.0
    %3140 = vmatprep.subr.mxu0 0.0
    %3141 = vmatpush2.msra.mxu0 0.0
    %3142 = vmatprep.subr.mxu0 0.0
    %3143 = vmatpush2.msra.mxu0 0.0
    %3144 = vmatprep.subr.mxu0 0.0
    %3145 = vmatpush2.msra.mxu0 0.0
    %3146 = vmatprep.subr.mxu0 0.0
    %3147 = vmatpush2.msra.mxu0 0.0
    %3148 = vmatprep.subr.mxu0 0.0
    %3149 = vmatpush2.msra.mxu0 0.0
    %3150 = vmatprep.subr.mxu0 0.0
    %3151 = vmatpush2.msra.mxu0 0.0
    %3152 = vmatprep.subr.mxu0 0.0
    %3153 = vmatpush2.msra.mxu0 0.0
    %3154 = vmatprep.subr.mxu0 0.0
    %3155 = vmatpush2.msra.mxu0 0.0
    %3156 = vmatprep.subr.mxu0 0.0
    %3157 = vmatpush2.msra.mxu0 0.0
    %3158 = vmatprep.subr.mxu0 0.0
    %3159 = vmatpush2.msra.mxu0 0.0
    %3160 = vmatprep.subr.mxu0 0.0
    %3161 = vmatpush2.msra.mxu0 0.0
    %3162 = vmatprep.mubr.f32.mxu0 0.0
    %3163 = vmatmul.mubr.f32.gmra.mxu0 %v3096
    %v3164 = vpop.f32.mrf.mxu0
    %v3165 = vadd.f32 0.0, %v3164
    %v3166 = vpop.f32.mrf.mxu0
    %3167 = vdwg.mxu0
    %3170 = vrot.lane.b32.xlu0 %v3041, 112
    %v3171 = vpop.permute.xlu0 %3170
    %3172 = vrot.lane.b32.xlu0 %v3042, 112
    %v3173 = vpop.permute.xlu0 %3172
    %3176 = vxpose.xlu0.b32.start [1/16] %v3171, 128
    %3177 = vxpose.xlu0.b32.cont [2/16] %v3173, 128
    %3178 = vxpose.xlu0.b32.cont [3/16] 0.0, 128
    %3179 = vxpose.xlu0.b32.cont [4/16] 0.0, 128
    %3180 = vxpose.xlu0.b32.cont [5/16] 0.0, 128
    %3181 = vxpose.xlu0.b32.cont [6/16] 0.0, 128
    %3182 = vxpose.xlu0.b32.cont [7/16] 0.0, 128
    %3183 = vxpose.xlu0.b32.cont [8/16] 0.0, 128
    %3184 = vxpose.xlu0.b32.cont [9/16] 0.0, 128
    %3185 = vxpose.xlu0.b32.cont [10/16] 0.0, 128
    %3186 = vxpose.xlu0.b32.cont [11/16] 0.0, 128
    %3187 = vxpose.xlu0.b32.cont [12/16] 0.0, 128
    %3188 = vxpose.xlu0.b32.cont [13/16] 0.0, 128
    %3189 = vxpose.xlu0.b32.cont [14/16] 0.0, 128
    %3190 = vxpose.xlu0.b32.cont [15/16] 0.0, 128
    %3191 = vxpose.xlu0.b32.end [16/16] 0.0, 128
    %v3192 = vpop.trf.xlu0
    %v3193 = vpop.trf.xlu0
    %v3194 = vpop.trf.xlu0
    %v3195 = vpop.trf.xlu0
    %v3196 = vpop.trf.xlu0
    %v3197 = vpop.trf.xlu0
    %v3198 = vpop.trf.xlu0
    %v3199 = vpop.trf.xlu0
    %v3200 = vpop.trf.xlu0
    %v3201 = vpop.trf.xlu0
    %v3202 = vpop.trf.xlu0
    %v3203 = vpop.trf.xlu0
    %v3204 = vpop.trf.xlu0
    %v3205 = vpop.trf.xlu0
    %v3206 = vpop.trf.xlu0
    %v3207 = vpop.trf.xlu0
    %v3209 = vsel %vm101, %v3192, 0
    %3211 = vmatprep.subr.mxu0 0.0
    %3212 = vmatpush1.msra.mxu0 0.0
    %3213 = vmatprep.subr.mxu0 0.0
    %3214 = vmatpush1.msra.mxu0 0.0
    %3215 = vmatprep.subr.mxu0 0.0
    %3216 = vmatpush1.msra.mxu0 0.0
    %3217 = vmatprep.subr.mxu0 0.0
    %3218 = vmatpush1.msra.mxu0 0.0
    %3219 = vmatprep.subr.mxu0 0.0
    %3220 = vmatpush1.msra.mxu0 0.0
    %3221 = vmatprep.subr.mxu0 0.0
    %3222 = vmatpush1.msra.mxu0 0.0
    %3223 = vmatprep.subr.mxu0 0.0
    %3224 = vmatpush1.msra.mxu0 0.0
    %3225 = vmatprep.subr.mxu0 0.0
    %3226 = vmatpush1.msra.mxu0 0.0
    %3227 = vmatprep.subr.mxu0 0.0
    %3228 = vmatpush1.msra.mxu0 0.0
    %3229 = vmatprep.subr.mxu0 0.0
    %3230 = vmatpush1.msra.mxu0 0.0
    %3231 = vmatprep.subr.mxu0 0.0
    %3232 = vmatpush1.msra.mxu0 0.0
    %3233 = vmatprep.subr.mxu0 0.0
    %3234 = vmatpush1.msra.mxu0 0.0
    %3235 = vmatprep.subr.mxu0 0.0
    %3236 = vmatpush1.msra.mxu0 0.0
    %3237 = vmatprep.subr.mxu0 0.0
    %3238 = vmatpush1.msra.mxu0 0.0
    %3239 = vmatprep.subr.mxu0 0.0
    %3240 = vmatpush1.msra.mxu0 %v2352
    %3241 = vmatprep.subr.mxu0 0.0
    %3242 = vmatpush1.msra.mxu0 %v2351
    %3243 = vmatprep.subr.mxu0 0.0
    %3244 = vmatpush2.msra.mxu0 0.0
    %3245 = vmatprep.subr.mxu0 0.0
    %3246 = vmatpush2.msra.mxu0 0.0
    %3247 = vmatprep.subr.mxu0 0.0
    %3248 = vmatpush2.msra.mxu0 0.0
    %3249 = vmatprep.subr.mxu0 0.0
    %3250 = vmatpush2.msra.mxu0 0.0
    %3251 = vmatprep.subr.mxu0 0.0
    %3252 = vmatpush2.msra.mxu0 0.0
    %3253 = vmatprep.subr.mxu0 0.0
    %3254 = vmatpush2.msra.mxu0 0.0
    %3255 = vmatprep.subr.mxu0 0.0
    %3256 = vmatpush2.msra.mxu0 0.0
    %3257 = vmatprep.subr.mxu0 0.0
    %3258 = vmatpush2.msra.mxu0 0.0
    %3259 = vmatprep.subr.mxu0 0.0
    %3260 = vmatpush2.msra.mxu0 0.0
    %3261 = vmatprep.subr.mxu0 0.0
    %3262 = vmatpush2.msra.mxu0 0.0
    %3263 = vmatprep.subr.mxu0 0.0
    %3264 = vmatpush2.msra.mxu0 0.0
    %3265 = vmatprep.subr.mxu0 0.0
    %3266 = vmatpush2.msra.mxu0 0.0
    %3267 = vmatprep.subr.mxu0 0.0
    %3268 = vmatpush2.msra.mxu0 0.0
    %3269 = vmatprep.subr.mxu0 0.0
    %3270 = vmatpush2.msra.mxu0 0.0
    %3271 = vmatprep.subr.mxu0 0.0
    %3272 = vmatpush2.msra.mxu0 0.0
    %3273 = vmatprep.subr.mxu0 0.0
    %3274 = vmatpush2.msra.mxu0 0.0
    %3275 = vmatprep.mubr.f32.mxu0 0.0
    %3276 = vmatmul.mubr.f32.gmra.mxu0 %v3209
    %v3277 = vpop.f32.mrf.mxu0
    %v3278 = vadd.f32 0.0, %v3277
    %v3279 = vpop.f32.mrf.mxu0
    %3280 = vdwg.mxu0
    %3283 = vrot.lane.b32.xlu0 %v3043, 112
    %v3284 = vpop.permute.xlu0 %3283
    %3285 = vrot.lane.b32.xlu0 %v3044, 112
    %v3286 = vpop.permute.xlu0 %3285
    %3289 = vxpose.xlu0.b32.start [1/16] %v3284, 128
    %3290 = vxpose.xlu0.b32.cont [2/16] %v3286, 128
    %3291 = vxpose.xlu0.b32.cont [3/16] 0.0, 128
    %3292 = vxpose.xlu0.b32.cont [4/16] 0.0, 128
    %3293 = vxpose.xlu0.b32.cont [5/16] 0.0, 128
    %3294 = vxpose.xlu0.b32.cont [6/16] 0.0, 128
    %3295 = vxpose.xlu0.b32.cont [7/16] 0.0, 128
    %3296 = vxpose.xlu0.b32.cont [8/16] 0.0, 128
    %3297 = vxpose.xlu0.b32.cont [9/16] 0.0, 128
    %3298 = vxpose.xlu0.b32.cont [10/16] 0.0, 128
    %3299 = vxpose.xlu0.b32.cont [11/16] 0.0, 128
    %3300 = vxpose.xlu0.b32.cont [12/16] 0.0, 128
    %3301 = vxpose.xlu0.b32.cont [13/16] 0.0, 128
    %3302 = vxpose.xlu0.b32.cont [14/16] 0.0, 128
    %3303 = vxpose.xlu0.b32.cont [15/16] 0.0, 128
    %3304 = vxpose.xlu0.b32.end [16/16] 0.0, 128
    %v3305 = vpop.trf.xlu0
    %v3306 = vpop.trf.xlu0
    %v3307 = vpop.trf.xlu0
    %v3308 = vpop.trf.xlu0
    %v3309 = vpop.trf.xlu0
    %v3310 = vpop.trf.xlu0
    %v3311 = vpop.trf.xlu0
    %v3312 = vpop.trf.xlu0
    %v3313 = vpop.trf.xlu0
    %v3314 = vpop.trf.xlu0
    %v3315 = vpop.trf.xlu0
    %v3316 = vpop.trf.xlu0
    %v3317 = vpop.trf.xlu0
    %v3318 = vpop.trf.xlu0
    %v3319 = vpop.trf.xlu0
    %v3320 = vpop.trf.xlu0
    %v3322 = vsel %vm101, %v3305, 0
    %3324 = vmatprep.subr.mxu0 0.0
    %3325 = vmatpush1.msra.mxu0 0.0
    %3326 = vmatprep.subr.mxu0 0.0
    %3327 = vmatpush1.msra.mxu0 0.0
    %3328 = vmatprep.subr.mxu0 0.0
    %3329 = vmatpush1.msra.mxu0 0.0
    %3330 = vmatprep.subr.mxu0 0.0
    %3331 = vmatpush1.msra.mxu0 0.0
    %3332 = vmatprep.subr.mxu0 0.0
    %3333 = vmatpush1.msra.mxu0 0.0
    %3334 = vmatprep.subr.mxu0 0.0
    %3335 = vmatpush1.msra.mxu0 0.0
    %3336 = vmatprep.subr.mxu0 0.0
    %3337 = vmatpush1.msra.mxu0 0.0
    %3338 = vmatprep.subr.mxu0 0.0
    %3339 = vmatpush1.msra.mxu0 0.0
    %3340 = vmatprep.subr.mxu0 0.0
    %3341 = vmatpush1.msra.mxu0 0.0
    %3342 = vmatprep.subr.mxu0 0.0
    %3343 = vmatpush1.msra.mxu0 0.0
    %3344 = vmatprep.subr.mxu0 0.0
    %3345 = vmatpush1.msra.mxu0 0.0
    %3346 = vmatprep.subr.mxu0 0.0
    %3347 = vmatpush1.msra.mxu0 0.0
    %3348 = vmatprep.subr.mxu0 0.0
    %3349 = vmatpush1.msra.mxu0 0.0
    %3350 = vmatprep.subr.mxu0 0.0
    %3351 = vmatpush1.msra.mxu0 0.0
    %3352 = vmatprep.subr.mxu0 0.0
    %3353 = vmatpush1.msra.mxu0 %v2354
    %3354 = vmatprep.subr.mxu0 0.0
    %3355 = vmatpush1.msra.mxu0 %v2353
    %3356 = vmatprep.subr.mxu0 0.0
    %3357 = vmatpush2.msra.mxu0 0.0
    %3358 = vmatprep.subr.mxu0 0.0
    %3359 = vmatpush2.msra.mxu0 0.0
    %3360 = vmatprep.subr.mxu0 0.0
    %3361 = vmatpush2.msra.mxu0 0.0
    %3362 = vmatprep.subr.mxu0 0.0
    %3363 = vmatpush2.msra.mxu0 0.0
    %3364 = vmatprep.subr.mxu0 0.0
    %3365 = vmatpush2.msra.mxu0 0.0
    %3366 = vmatprep.subr.mxu0 0.0
    %3367 = vmatpush2.msra.mxu0 0.0
    %3368 = vmatprep.subr.mxu0 0.0
    %3369 = vmatpush2.msra.mxu0 0.0
    %3370 = vmatprep.subr.mxu0 0.0
    %3371 = vmatpush2.msra.mxu0 0.0
    %3372 = vmatprep.subr.mxu0 0.0
    %3373 = vmatpush2.msra.mxu0 0.0
    %3374 = vmatprep.subr.mxu0 0.0
    %3375 = vmatpush2.msra.mxu0 0.0
    %3376 = vmatprep.subr.mxu0 0.0
    %3377 = vmatpush2.msra.mxu0 0.0
    %3378 = vmatprep.subr.mxu0 0.0
    %3379 = vmatpush2.msra.mxu0 0.0
    %3380 = vmatprep.subr.mxu0 0.0
    %3381 = vmatpush2.msra.mxu0 0.0
    %3382 = vmatprep.subr.mxu0 0.0
    %3383 = vmatpush2.msra.mxu0 0.0
    %3384 = vmatprep.subr.mxu0 0.0
    %3385 = vmatpush2.msra.mxu0 0.0
    %3386 = vmatprep.subr.mxu0 0.0
    %3387 = vmatpush2.msra.mxu0 0.0
    %3388 = vmatprep.mubr.f32.mxu0 0.0
    %3389 = vmatmul.mubr.f32.gmra.mxu0 %v3322
    %v3390 = vpop.f32.mrf.mxu0
    %v3391 = vadd.f32 0.0, %v3390
    %v3392 = vpop.f32.mrf.mxu0
    %3393 = vdwg.mxu0
    %3396 = vrot.lane.b32.xlu0 %v3045, 112
    %v3397 = vpop.permute.xlu0 %3396
    %3398 = vrot.lane.b32.xlu0 %v3046, 112
    %v3399 = vpop.permute.xlu0 %3398
    %3402 = vxpose.xlu0.b32.start [1/16] %v3397, 128
    %3403 = vxpose.xlu0.b32.cont [2/16] %v3399, 128
    %3404 = vxpose.xlu0.b32.cont [3/16] 0.0, 128
    %3405 = vxpose.xlu0.b32.cont [4/16] 0.0, 128
    %3406 = vxpose.xlu0.b32.cont [5/16] 0.0, 128
    %3407 = vxpose.xlu0.b32.cont [6/16] 0.0, 128
    %3408 = vxpose.xlu0.b32.cont [7/16] 0.0, 128
    %3409 = vxpose.xlu0.b32.cont [8/16] 0.0, 128
    %3410 = vxpose.xlu0.b32.cont [9/16] 0.0, 128
    %3411 = vxpose.xlu0.b32.cont [10/16] 0.0, 128
    %3412 = vxpose.xlu0.b32.cont [11/16] 0.0, 128
    %3413 = vxpose.xlu0.b32.cont [12/16] 0.0, 128
    %3414 = vxpose.xlu0.b32.cont [13/16] 0.0, 128
    %3415 = vxpose.xlu0.b32.cont [14/16] 0.0, 128
    %3416 = vxpose.xlu0.b32.cont [15/16] 0.0, 128
    %3417 = vxpose.xlu0.b32.end [16/16] 0.0, 128
    %v3418 = vpop.trf.xlu0
    %v3419 = vpop.trf.xlu0
    %v3420 = vpop.trf.xlu0
    %v3421 = vpop.trf.xlu0
    %v3422 = vpop.trf.xlu0
    %v3423 = vpop.trf.xlu0
    %v3424 = vpop.trf.xlu0
    %v3425 = vpop.trf.xlu0
    %v3426 = vpop.trf.xlu0
    %v3427 = vpop.trf.xlu0
    %v3428 = vpop.trf.xlu0
    %v3429 = vpop.trf.xlu0
    %v3430 = vpop.trf.xlu0
    %v3431 = vpop.trf.xlu0
    %v3432 = vpop.trf.xlu0
    %v3433 = vpop.trf.xlu0
    %v3435 = vsel %vm101, %v3418, 0
    %3437 = vmatprep.subr.mxu0 0.0
    %3438 = vmatpush1.msra.mxu0 0.0
    %3439 = vmatprep.subr.mxu0 0.0
    %3440 = vmatpush1.msra.mxu0 0.0
    %3441 = vmatprep.subr.mxu0 0.0
    %3442 = vmatpush1.msra.mxu0 0.0
    %3443 = vmatprep.subr.mxu0 0.0
    %3444 = vmatpush1.msra.mxu0 0.0
    %3445 = vmatprep.subr.mxu0 0.0
    %3446 = vmatpush1.msra.mxu0 0.0
    %3447 = vmatprep.subr.mxu0 0.0
    %3448 = vmatpush1.msra.mxu0 0.0
    %3449 = vmatprep.subr.mxu0 0.0
    %3450 = vmatpush1.msra.mxu0 0.0
    %3451 = vmatprep.subr.mxu0 0.0
    %3452 = vmatpush1.msra.mxu0 0.0
    %3453 = vmatprep.subr.mxu0 0.0
    %3454 = vmatpush1.msra.mxu0 0.0
    %3455 = vmatprep.subr.mxu0 0.0
    %3456 = vmatpush1.msra.mxu0 0.0
    %3457 = vmatprep.subr.mxu0 0.0
    %3458 = vmatpush1.msra.mxu0 0.0
    %3459 = vmatprep.subr.mxu0 0.0
    %3460 = vmatpush1.msra.mxu0 0.0
    %3461 = vmatprep.subr.mxu0 0.0
    %3462 = vmatpush1.msra.mxu0 0.0
    %3463 = vmatprep.subr.mxu0 0.0
    %3464 = vmatpush1.msra.mxu0 0.0
    %3465 = vmatprep.subr.mxu0 0.0
    %3466 = vmatpush1.msra.mxu0 %v2356
    %3467 = vmatprep.subr.mxu0 0.0
    %3468 = vmatpush1.msra.mxu0 %v2355
    %3469 = vmatprep.subr.mxu0 0.0
    %3470 = vmatpush2.msra.mxu0 0.0
    %3471 = vmatprep.subr.mxu0 0.0
    %3472 = vmatpush2.msra.mxu0 0.0
    %3473 = vmatprep.subr.mxu0 0.0
    %3474 = vmatpush2.msra.mxu0 0.0
    %3475 = vmatprep.subr.mxu0 0.0
    %3476 = vmatpush2.msra.mxu0 0.0
    %3477 = vmatprep.subr.mxu0 0.0
    %3478 = vmatpush2.msra.mxu0 0.0
    %3479 = vmatprep.subr.mxu0 0.0
    %3480 = vmatpush2.msra.mxu0 0.0
    %3481 = vmatprep.subr.mxu0 0.0
    %3482 = vmatpush2.msra.mxu0 0.0
    %3483 = vmatprep.subr.mxu0 0.0
    %3484 = vmatpush2.msra.mxu0 0.0
    %3485 = vmatprep.subr.mxu0 0.0
    %3486 = vmatpush2.msra.mxu0 0.0
    %3487 = vmatprep.subr.mxu0 0.0
    %3488 = vmatpush2.msra.mxu0 0.0
    %3489 = vmatprep.subr.mxu0 0.0
    %3490 = vmatpush2.msra.mxu0 0.0
    %3491 = vmatprep.subr.mxu0 0.0
    %3492 = vmatpush2.msra.mxu0 0.0
    %3493 = vmatprep.subr.mxu0 0.0
    %3494 = vmatpush2.msra.mxu0 0.0
    %3495 = vmatprep.subr.mxu0 0.0
    %3496 = vmatpush2.msra.mxu0 0.0
    %3497 = vmatprep.subr.mxu0 0.0
    %3498 = vmatpush2.msra.mxu0 0.0
    %3499 = vmatprep.subr.mxu0 0.0
    %3500 = vmatpush2.msra.mxu0 0.0
    %3501 = vmatprep.mubr.f32.mxu0 0.0
    %3502 = vmatmul.mubr.f32.gmra.mxu0 %v3435
    %v3503 = vpop.f32.mrf.mxu0
    %v3504 = vadd.f32 0.0, %v3503
    %v3505 = vpop.f32.mrf.mxu0
    %3506 = vdwg.mxu0
    %3509 = vrot.lane.b32.xlu0 %v3047, 112
    %v3510 = vpop.permute.xlu0 %3509
    %3511 = vrot.lane.b32.xlu0 %v3048, 112
    %v3512 = vpop.permute.xlu0 %3511
    %3515 = vxpose.xlu0.b32.start [1/16] %v3510, 128
    %3516 = vxpose.xlu0.b32.cont [2/16] %v3512, 128
    %3517 = vxpose.xlu0.b32.cont [3/16] 0.0, 128
    %3518 = vxpose.xlu0.b32.cont [4/16] 0.0, 128
    %3519 = vxpose.xlu0.b32.cont [5/16] 0.0, 128
    %3520 = vxpose.xlu0.b32.cont [6/16] 0.0, 128
    %3521 = vxpose.xlu0.b32.cont [7/16] 0.0, 128
    %3522 = vxpose.xlu0.b32.cont [8/16] 0.0, 128
    %3523 = vxpose.xlu0.b32.cont [9/16] 0.0, 128
    %3524 = vxpose.xlu0.b32.cont [10/16] 0.0, 128
    %3525 = vxpose.xlu0.b32.cont [11/16] 0.0, 128
    %3526 = vxpose.xlu0.b32.cont [12/16] 0.0, 128
    %3527 = vxpose.xlu0.b32.cont [13/16] 0.0, 128
    %3528 = vxpose.xlu0.b32.cont [14/16] 0.0, 128
    %3529 = vxpose.xlu0.b32.cont [15/16] 0.0, 128
    %3530 = vxpose.xlu0.b32.end [16/16] 0.0, 128
    %v3531 = vpop.trf.xlu0
    %v3532 = vpop.trf.xlu0
    %v3533 = vpop.trf.xlu0
    %v3534 = vpop.trf.xlu0
    %v3535 = vpop.trf.xlu0
    %v3536 = vpop.trf.xlu0
    %v3537 = vpop.trf.xlu0
    %v3538 = vpop.trf.xlu0
    %v3539 = vpop.trf.xlu0
    %v3540 = vpop.trf.xlu0
    %v3541 = vpop.trf.xlu0
    %v3542 = vpop.trf.xlu0
    %v3543 = vpop.trf.xlu0
    %v3544 = vpop.trf.xlu0
    %v3545 = vpop.trf.xlu0
    %v3546 = vpop.trf.xlu0
    %v3548 = vsel %vm101, %v3531, 0
    %3550 = vmatprep.subr.mxu0 0.0
    %3551 = vmatpush1.msra.mxu0 0.0
    %3552 = vmatprep.subr.mxu0 0.0
    %3553 = vmatpush1.msra.mxu0 0.0
    %3554 = vmatprep.subr.mxu0 0.0
    %3555 = vmatpush1.msra.mxu0 0.0
    %3556 = vmatprep.subr.mxu0 0.0
    %3557 = vmatpush1.msra.mxu0 0.0
    %3558 = vmatprep.subr.mxu0 0.0
    %3559 = vmatpush1.msra.mxu0 0.0
    %3560 = vmatprep.subr.mxu0 0.0
    %3561 = vmatpush1.msra.mxu0 0.0
    %3562 = vmatprep.subr.mxu0 0.0
    %3563 = vmatpush1.msra.mxu0 0.0
    %3564 = vmatprep.subr.mxu0 0.0
    %3565 = vmatpush1.msra.mxu0 0.0
    %3566 = vmatprep.subr.mxu0 0.0
    %3567 = vmatpush1.msra.mxu0 0.0
    %3568 = vmatprep.subr.mxu0 0.0
    %3569 = vmatpush1.msra.mxu0 0.0
    %3570 = vmatprep.subr.mxu0 0.0
    %3571 = vmatpush1.msra.mxu0 0.0
    %3572 = vmatprep.subr.mxu0 0.0
    %3573 = vmatpush1.msra.mxu0 0.0
    %3574 = vmatprep.subr.mxu0 0.0
    %3575 = vmatpush1.msra.mxu0 0.0
    %3576 = vmatprep.subr.mxu0 0.0
    %3577 = vmatpush1.msra.mxu0 0.0
    %3578 = vmatprep.subr.mxu0 0.0
    %3579 = vmatpush1.msra.mxu0 %v2358
    %3580 = vmatprep.subr.mxu0 0.0
    %3581 = vmatpush1.msra.mxu0 %v2357
    %3582 = vmatprep.subr.mxu0 0.0
    %3583 = vmatpush2.msra.mxu0 0.0
    %3584 = vmatprep.subr.mxu0 0.0
    %3585 = vmatpush2.msra.mxu0 0.0
    %3586 = vmatprep.subr.mxu0 0.0
    %3587 = vmatpush2.msra.mxu0 0.0
    %3588 = vmatprep.subr.mxu0 0.0
    %3589 = vmatpush2.msra.mxu0 0.0
    %3590 = vmatprep.subr.mxu0 0.0
    %3591 = vmatpush2.msra.mxu0 0.0
    %3592 = vmatprep.subr.mxu0 0.0
    %3593 = vmatpush2.msra.mxu0 0.0
    %3594 = vmatprep.subr.mxu0 0.0
    %3595 = vmatpush2.msra.mxu0 0.0
    %3596 = vmatprep.subr.mxu0 0.0
    %3597 = vmatpush2.msra.mxu0 0.0
    %3598 = vmatprep.subr.mxu0 0.0
    %3599 = vmatpush2.msra.mxu0 0.0
    %3600 = vmatprep.subr.mxu0 0.0
    %3601 = vmatpush2.msra.mxu0 0.0
    %3602 = vmatprep.subr.mxu0 0.0
    %3603 = vmatpush2.msra.mxu0 0.0
    %3604 = vmatprep.subr.mxu0 0.0
    %3605 = vmatpush2.msra.mxu0 0.0
    %3606 = vmatprep.subr.mxu0 0.0
    %3607 = vmatpush2.msra.mxu0 0.0
    %3608 = vmatprep.subr.mxu0 0.0
    %3609 = vmatpush2.msra.mxu0 0.0
    %3610 = vmatprep.subr.mxu0 0.0
    %3611 = vmatpush2.msra.mxu0 0.0
    %3612 = vmatprep.subr.mxu0 0.0
    %3613 = vmatpush2.msra.mxu0 0.0
    %3614 = vmatprep.mubr.f32.mxu0 0.0
    %3615 = vmatmul.mubr.f32.gmra.mxu0 %v3548
    %v3616 = vpop.f32.mrf.mxu0
    %v3617 = vadd.f32 0.0, %v3616
    %v3618 = vpop.f32.mrf.mxu0
    %3619 = vdwg.mxu0
    %3622 = vrot.lane.b32.xlu0 %v3049, 112
    %v3623 = vpop.permute.xlu0 %3622
    %3624 = vrot.lane.b32.xlu0 %v3050, 112
    %v3625 = vpop.permute.xlu0 %3624
    %3628 = vxpose.xlu0.b32.start [1/16] %v3623, 128
    %3629 = vxpose.xlu0.b32.cont [2/16] %v3625, 128
    %3630 = vxpose.xlu0.b32.cont [3/16] 0.0, 128
    %3631 = vxpose.xlu0.b32.cont [4/16] 0.0, 128
    %3632 = vxpose.xlu0.b32.cont [5/16] 0.0, 128
    %3633 = vxpose.xlu0.b32.cont [6/16] 0.0, 128
    %3634 = vxpose.xlu0.b32.cont [7/16] 0.0, 128
    %3635 = vxpose.xlu0.b32.cont [8/16] 0.0, 128
    %3636 = vxpose.xlu0.b32.cont [9/16] 0.0, 128
    %3637 = vxpose.xlu0.b32.cont [10/16] 0.0, 128
    %3638 = vxpose.xlu0.b32.cont [11/16] 0.0, 128
    %3639 = vxpose.xlu0.b32.cont [12/16] 0.0, 128
    %3640 = vxpose.xlu0.b32.cont [13/16] 0.0, 128
    %3641 = vxpose.xlu0.b32.cont [14/16] 0.0, 128
    %3642 = vxpose.xlu0.b32.cont [15/16] 0.0, 128
    %3643 = vxpose.xlu0.b32.end [16/16] 0.0, 128
    %v3644 = vpop.trf.xlu0
    %v3645 = vpop.trf.xlu0
    %v3646 = vpop.trf.xlu0
    %v3647 = vpop.trf.xlu0
    %v3648 = vpop.trf.xlu0
    %v3649 = vpop.trf.xlu0
    %v3650 = vpop.trf.xlu0
    %v3651 = vpop.trf.xlu0
    %v3652 = vpop.trf.xlu0
    %v3653 = vpop.trf.xlu0
    %v3654 = vpop.trf.xlu0
    %v3655 = vpop.trf.xlu0
    %v3656 = vpop.trf.xlu0
    %v3657 = vpop.trf.xlu0
    %v3658 = vpop.trf.xlu0
    %v3659 = vpop.trf.xlu0
    %v3661 = vsel %vm101, %v3644, 0
    %3663 = vmatprep.subr.mxu0 0.0
    %3664 = vmatpush1.msra.mxu0 0.0
    %3665 = vmatprep.subr.mxu0 0.0
    %3666 = vmatpush1.msra.mxu0 0.0
    %3667 = vmatprep.subr.mxu0 0.0
    %3668 = vmatpush1.msra.mxu0 0.0
    %3669 = vmatprep.subr.mxu0 0.0
    %3670 = vmatpush1.msra.mxu0 0.0
    %3671 = vmatprep.subr.mxu0 0.0
    %3672 = vmatpush1.msra.mxu0 0.0
    %3673 = vmatprep.subr.mxu0 0.0
    %3674 = vmatpush1.msra.mxu0 0.0
    %3675 = vmatprep.subr.mxu0 0.0
    %3676 = vmatpush1.msra.mxu0 0.0
    %3677 = vmatprep.subr.mxu0 0.0
    %3678 = vmatpush1.msra.mxu0 0.0
    %3679 = vmatprep.subr.mxu0 0.0
    %3680 = vmatpush1.msra.mxu0 0.0
    %3681 = vmatprep.subr.mxu0 0.0
    %3682 = vmatpush1.msra.mxu0 0.0
    %3683 = vmatprep.subr.mxu0 0.0
    %3684 = vmatpush1.msra.mxu0 0.0
    %3685 = vmatprep.subr.mxu0 0.0
    %3686 = vmatpush1.msra.mxu0 0.0
    %3687 = vmatprep.subr.mxu0 0.0
    %3688 = vmatpush1.msra.mxu0 0.0
    %3689 = vmatprep.subr.mxu0 0.0
    %3690 = vmatpush1.msra.mxu0 0.0
    %3691 = vmatprep.subr.mxu0 0.0
    %3692 = vmatpush1.msra.mxu0 %v2360
    %3693 = vmatprep.subr.mxu0 0.0
    %3694 = vmatpush1.msra.mxu0 %v2359
    %3695 = vmatprep.subr.mxu0 0.0
    %3696 = vmatpush2.msra.mxu0 0.0
    %3697 = vmatprep.subr.mxu0 0.0
    %3698 = vmatpush2.msra.mxu0 0.0
    %3699 = vmatprep.subr.mxu0 0.0
    %3700 = vmatpush2.msra.mxu0 0.0
    %3701 = vmatprep.subr.mxu0 0.0
    %3702 = vmatpush2.msra.mxu0 0.0
    %3703 = vmatprep.subr.mxu0 0.0
    %3704 = vmatpush2.msra.mxu0 0.0
    %3705 = vmatprep.subr.mxu0 0.0
    %3706 = vmatpush2.msra.mxu0 0.0
    %3707 = vmatprep.subr.mxu0 0.0
    %3708 = vmatpush2.msra.mxu0 0.0
    %3709 = vmatprep.subr.mxu0 0.0
    %3710 = vmatpush2.msra.mxu0 0.0
    %3711 = vmatprep.subr.mxu0 0.0
    %3712 = vmatpush2.msra.mxu0 0.0
    %3713 = vmatprep.subr.mxu0 0.0
    %3714 = vmatpush2.msra.mxu0 0.0
    %3715 = vmatprep.subr.mxu0 0.0
    %3716 = vmatpush2.msra.mxu0 0.0
    %3717 = vmatprep.subr.mxu0 0.0
    %3718 = vmatpush2.msra.mxu0 0.0
    %3719 = vmatprep.subr.mxu0 0.0
    %3720 = vmatpush2.msra.mxu0 0.0
    %3721 = vmatprep.subr.mxu0 0.0
    %3722 = vmatpush2.msra.mxu0 0.0
    %3723 = vmatprep.subr.mxu0 0.0
    %3724 = vmatpush2.msra.mxu0 0.0
    %3725 = vmatprep.subr.mxu0 0.0
    %3726 = vmatpush2.msra.mxu0 0.0
    %3727 = vmatprep.mubr.f32.mxu0 0.0
    %3728 = vmatmul.mubr.f32.gmra.mxu0 %v3661
    %v3729 = vpop.f32.mrf.mxu0
    %v3730 = vadd.f32 0.0, %v3729
    %v3731 = vpop.f32.mrf.mxu0
    %3732 = vdwg.mxu0
    %3735 = vrot.lane.b32.xlu0 %v3051, 112
    %v3736 = vpop.permute.xlu0 %3735
    %3737 = vrot.lane.b32.xlu0 %v3052, 112
    %v3738 = vpop.permute.xlu0 %3737
    %3741 = vxpose.xlu0.b32.start [1/16] %v3736, 128
    %3742 = vxpose.xlu0.b32.cont [2/16] %v3738, 128
    %3743 = vxpose.xlu0.b32.cont [3/16] 0.0, 128
    %3744 = vxpose.xlu0.b32.cont [4/16] 0.0, 128
    %3745 = vxpose.xlu0.b32.cont [5/16] 0.0, 128
    %3746 = vxpose.xlu0.b32.cont [6/16] 0.0, 128
    %3747 = vxpose.xlu0.b32.cont [7/16] 0.0, 128
    %3748 = vxpose.xlu0.b32.cont [8/16] 0.0, 128
    %3749 = vxpose.xlu0.b32.cont [9/16] 0.0, 128
    %3750 = vxpose.xlu0.b32.cont [10/16] 0.0, 128
    %3751 = vxpose.xlu0.b32.cont [11/16] 0.0, 128
    %3752 = vxpose.xlu0.b32.cont [12/16] 0.0, 128
    %3753 = vxpose.xlu0.b32.cont [13/16] 0.0, 128
    %3754 = vxpose.xlu0.b32.cont [14/16] 0.0, 128
    %3755 = vxpose.xlu0.b32.cont [15/16] 0.0, 128
    %3756 = vxpose.xlu0.b32.end [16/16] 0.0, 128
    %v3757 = vpop.trf.xlu0
    %v3758 = vpop.trf.xlu0
    %v3759 = vpop.trf.xlu0
    %v3760 = vpop.trf.xlu0
    %v3761 = vpop.trf.xlu0
    %v3762 = vpop.trf.xlu0
    %v3763 = vpop.trf.xlu0
    %v3764 = vpop.trf.xlu0
    %v3765 = vpop.trf.xlu0
    %v3766 = vpop.trf.xlu0
    %v3767 = vpop.trf.xlu0
    %v3768 = vpop.trf.xlu0
    %v3769 = vpop.trf.xlu0
    %v3770 = vpop.trf.xlu0
    %v3771 = vpop.trf.xlu0
    %v3772 = vpop.trf.xlu0
    %v3774 = vsel %vm101, %v3757, 0
    %3776 = vmatprep.subr.mxu0 0.0
    %3777 = vmatpush1.msra.mxu0 0.0
    %3778 = vmatprep.subr.mxu0 0.0
    %3779 = vmatpush1.msra.mxu0 0.0
    %3780 = vmatprep.subr.mxu0 0.0
    %3781 = vmatpush1.msra.mxu0 0.0
    %3782 = vmatprep.subr.mxu0 0.0
    %3783 = vmatpush1.msra.mxu0 0.0
    %3784 = vmatprep.subr.mxu0 0.0
    %3785 = vmatpush1.msra.mxu0 0.0
    %3786 = vmatprep.subr.mxu0 0.0
    %3787 = vmatpush1.msra.mxu0 0.0
    %3788 = vmatprep.subr.mxu0 0.0
    %3789 = vmatpush1.msra.mxu0 0.0
    %3790 = vmatprep.subr.mxu0 0.0
    %3791 = vmatpush1.msra.mxu0 0.0
    %3792 = vmatprep.subr.mxu0 0.0
    %3793 = vmatpush1.msra.mxu0 0.0
    %3794 = vmatprep.subr.mxu0 0.0
    %3795 = vmatpush1.msra.mxu0 0.0
    %3796 = vmatprep.subr.mxu0 0.0
    %3797 = vmatpush1.msra.mxu0 0.0
    %3798 = vmatprep.subr.mxu0 0.0
    %3799 = vmatpush1.msra.mxu0 0.0
    %3800 = vmatprep.subr.mxu0 0.0
    %3801 = vmatpush1.msra.mxu0 0.0
    %3802 = vmatprep.subr.mxu0 0.0
    %3803 = vmatpush1.msra.mxu0 0.0
    %3804 = vmatprep.subr.mxu0 0.0
    %3805 = vmatpush1.msra.mxu0 %v2362
    %3806 = vmatprep.subr.mxu0 0.0
    %3807 = vmatpush1.msra.mxu0 %v2361
    %3808 = vmatprep.subr.mxu0 0.0
    %3809 = vmatpush2.msra.mxu0 0.0
    %3810 = vmatprep.subr.mxu0 0.0
    %3811 = vmatpush2.msra.mxu0 0.0
    %3812 = vmatprep.subr.mxu0 0.0
    %3813 = vmatpush2.msra.mxu0 0.0
    %3814 = vmatprep.subr.mxu0 0.0
    %3815 = vmatpush2.msra.mxu0 0.0
    %3816 = vmatprep.subr.mxu0 0.0
    %3817 = vmatpush2.msra.mxu0 0.0
    %3818 = vmatprep.subr.mxu0 0.0
    %3819 = vmatpush2.msra.mxu0 0.0
    %3820 = vmatprep.subr.mxu0 0.0
    %3821 = vmatpush2.msra.mxu0 0.0
    %3822 = vmatprep.subr.mxu0 0.0
    %3823 = vmatpush2.msra.mxu0 0.0
    %3824 = vmatprep.subr.mxu0 0.0
    %3825 = vmatpush2.msra.mxu0 0.0
    %3826 = vmatprep.subr.mxu0 0.0
    %3827 = vmatpush2.msra.mxu0 0.0
    %3828 = vmatprep.subr.mxu0 0.0
    %3829 = vmatpush2.msra.mxu0 0.0
    %3830 = vmatprep.subr.mxu0 0.0
    %3831 = vmatpush2.msra.mxu0 0.0
    %3832 = vmatprep.subr.mxu0 0.0
    %3833 = vmatpush2.msra.mxu0 0.0
    %3834 = vmatprep.subr.mxu0 0.0
    %3835 = vmatpush2.msra.mxu0 0.0
    %3836 = vmatprep.subr.mxu0 0.0
    %3837 = vmatpush2.msra.mxu0 0.0
    %3838 = vmatprep.subr.mxu0 0.0
    %3839 = vmatpush2.msra.mxu0 0.0
    %3840 = vmatprep.mubr.f32.mxu0 0.0
    %3841 = vmatmul.mubr.f32.gmra.mxu0 %v3774
    %v3842 = vpop.f32.mrf.mxu0
    %v3843 = vadd.f32 0.0, %v3842
    %v3844 = vpop.f32.mrf.mxu0
    %3845 = vdwg.mxu0
    %3848 = vrot.lane.b32.xlu0 %v3053, 112
    %v3849 = vpop.permute.xlu0 %3848
    %3850 = vrot.lane.b32.xlu0 %v3054, 112
    %v3851 = vpop.permute.xlu0 %3850
    %3854 = vxpose.xlu0.b32.start [1/16] %v3849, 128
    %3855 = vxpose.xlu0.b32.cont [2/16] %v3851, 128
    %3856 = vxpose.xlu0.b32.cont [3/16] 0.0, 128
    %3857 = vxpose.xlu0.b32.cont [4/16] 0.0, 128
    %3858 = vxpose.xlu0.b32.cont [5/16] 0.0, 128
    %3859 = vxpose.xlu0.b32.cont [6/16] 0.0, 128
    %3860 = vxpose.xlu0.b32.cont [7/16] 0.0, 128
    %3861 = vxpose.xlu0.b32.cont [8/16] 0.0, 128
    %3862 = vxpose.xlu0.b32.cont [9/16] 0.0, 128
    %3863 = vxpose.xlu0.b32.cont [10/16] 0.0, 128
    %3864 = vxpose.xlu0.b32.cont [11/16] 0.0, 128
    %3865 = vxpose.xlu0.b32.cont [12/16] 0.0, 128
    %3866 = vxpose.xlu0.b32.cont [13/16] 0.0, 128
    %3867 = vxpose.xlu0.b32.cont [14/16] 0.0, 128
    %3868 = vxpose.xlu0.b32.cont [15/16] 0.0, 128
    %3869 = vxpose.xlu0.b32.end [16/16] 0.0, 128
    %v3870 = vpop.trf.xlu0
    %v3871 = vpop.trf.xlu0
    %v3872 = vpop.trf.xlu0
    %v3873 = vpop.trf.xlu0
    %v3874 = vpop.trf.xlu0
    %v3875 = vpop.trf.xlu0
    %v3876 = vpop.trf.xlu0
    %v3877 = vpop.trf.xlu0
    %v3878 = vpop.trf.xlu0
    %v3879 = vpop.trf.xlu0
    %v3880 = vpop.trf.xlu0
    %v3881 = vpop.trf.xlu0
    %v3882 = vpop.trf.xlu0
    %v3883 = vpop.trf.xlu0
    %v3884 = vpop.trf.xlu0
    %v3885 = vpop.trf.xlu0
    %v3887 = vsel %vm101, %v3870, 0
    %3889 = vmatprep.subr.mxu0 0.0
    %3890 = vmatpush1.msra.mxu0 0.0
    %3891 = vmatprep.subr.mxu0 0.0
    %3892 = vmatpush1.msra.mxu0 0.0
    %3893 = vmatprep.subr.mxu0 0.0
    %3894 = vmatpush1.msra.mxu0 0.0
    %3895 = vmatprep.subr.mxu0 0.0
    %3896 = vmatpush1.msra.mxu0 0.0
    %3897 = vmatprep.subr.mxu0 0.0
    %3898 = vmatpush1.msra.mxu0 0.0
    %3899 = vmatprep.subr.mxu0 0.0
    %3900 = vmatpush1.msra.mxu0 0.0
    %3901 = vmatprep.subr.mxu0 0.0
    %3902 = vmatpush1.msra.mxu0 0.0
    %3903 = vmatprep.subr.mxu0 0.0
    %3904 = vmatpush1.msra.mxu0 0.0
    %3905 = vmatprep.subr.mxu0 0.0
    %3906 = vmatpush1.msra.mxu0 0.0
    %3907 = vmatprep.subr.mxu0 0.0
    %3908 = vmatpush1.msra.mxu0 0.0
    %3909 = vmatprep.subr.mxu0 0.0
    %3910 = vmatpush1.msra.mxu0 0.0
    %3911 = vmatprep.subr.mxu0 0.0
    %3912 = vmatpush1.msra.mxu0 0.0
    %3913 = vmatprep.subr.mxu0 0.0
    %3914 = vmatpush1.msra.mxu0 0.0
    %3915 = vmatprep.subr.mxu0 0.0
    %3916 = vmatpush1.msra.mxu0 0.0
    %3917 = vmatprep.subr.mxu0 0.0
    %3918 = vmatpush1.msra.mxu0 %v2364
    %3919 = vmatprep.subr.mxu0 0.0
    %3920 = vmatpush1.msra.mxu0 %v2363
    %3921 = vmatprep.subr.mxu0 0.0
    %3922 = vmatpush2.msra.mxu0 0.0
    %3923 = vmatprep.subr.mxu0 0.0
    %3924 = vmatpush2.msra.mxu0 0.0
    %3925 = vmatprep.subr.mxu0 0.0
    %3926 = vmatpush2.msra.mxu0 0.0
    %3927 = vmatprep.subr.mxu0 0.0
    %3928 = vmatpush2.msra.mxu0 0.0
    %3929 = vmatprep.subr.mxu0 0.0
    %3930 = vmatpush2.msra.mxu0 0.0
    %3931 = vmatprep.subr.mxu0 0.0
    %3932 = vmatpush2.msra.mxu0 0.0
    %3933 = vmatprep.subr.mxu0 0.0
    %3934 = vmatpush2.msra.mxu0 0.0
    %3935 = vmatprep.subr.mxu0 0.0
    %3936 = vmatpush2.msra.mxu0 0.0
    %3937 = vmatprep.subr.mxu0 0.0
    %3938 = vmatpush2.msra.mxu0 0.0
    %3939 = vmatprep.subr.mxu0 0.0
    %3940 = vmatpush2.msra.mxu0 0.0
    %3941 = vmatprep.subr.mxu0 0.0
    %3942 = vmatpush2.msra.mxu0 0.0
    %3943 = vmatprep.subr.mxu0 0.0
    %3944 = vmatpush2.msra.mxu0 0.0
    %3945 = vmatprep.subr.mxu0 0.0
    %3946 = vmatpush2.msra.mxu0 0.0
    %3947 = vmatprep.subr.mxu0 0.0
    %3948 = vmatpush2.msra.mxu0 0.0
    %3949 = vmatprep.subr.mxu0 0.0
    %3950 = vmatpush2.msra.mxu0 0.0
    %3951 = vmatprep.subr.mxu0 0.0
    %3952 = vmatpush2.msra.mxu0 0.0
    %3953 = vmatprep.mubr.f32.mxu0 0.0
    %3954 = vmatmul.mubr.f32.gmra.mxu0 %v3887
    %v3955 = vpop.f32.mrf.mxu0
    %v3956 = vadd.f32 0.0, %v3955
    %v3957 = vpop.f32.mrf.mxu0
    %3958 = vdwg.mxu0
    %3959 = vmatprep.subr.mxu0 0.0
    %3960 = vmatpush1.msra.mxu0 0.0
    %3961 = vmatprep.subr.mxu0 0.0
    %3962 = vmatpush1.msra.mxu0 0.0
    %3963 = vmatprep.subr.mxu0 0.0
    %3964 = vmatpush1.msra.mxu0 0.0
    %3965 = vmatprep.subr.mxu0 0.0
    %3966 = vmatpush1.msra.mxu0 0.0
    %3967 = vmatprep.subr.mxu0 0.0
    %3968 = vmatpush1.msra.mxu0 0.0
    %3969 = vmatprep.subr.mxu0 0.0
    %3970 = vmatpush1.msra.mxu0 0.0
    %3971 = vmatprep.subr.mxu0 0.0
    %3972 = vmatpush1.msra.mxu0 0.0
    %3973 = vmatprep.subr.mxu0 0.0
    %3974 = vmatpush1.msra.mxu0 0.0
    %3975 = vmatprep.subr.mxu0 0.0
    %3976 = vmatpush1.msra.mxu0 0.0
    %3977 = vmatprep.subr.mxu0 0.0
    %3978 = vmatpush1.msra.mxu0 0.0
    %3979 = vmatprep.subr.mxu0 0.0
    %3980 = vmatpush1.msra.mxu0 0.0
    %3981 = vmatprep.subr.mxu0 0.0
    %3982 = vmatpush1.msra.mxu0 0.0
    %3983 = vmatprep.subr.mxu0 0.0
    %3984 = vmatpush1.msra.mxu0 0.0
    %3985 = vmatprep.subr.mxu0 0.0
    %3986 = vmatpush1.msra.mxu0 0.0
    %3987 = vmatprep.subr.mxu0 0.0
    %3988 = vmatpush1.msra.mxu0 %v38
    %3989 = vmatprep.subr.mxu0 0.0
    %3990 = vmatpush1.msra.mxu0 %v37
    %3991 = vmatprep.subr.mxu0 0.0
    %3992 = vmatpush2.msra.mxu0 0.0
    %3993 = vmatprep.subr.mxu0 0.0
    %3994 = vmatpush2.msra.mxu0 0.0
    %3995 = vmatprep.subr.mxu0 0.0
    %3996 = vmatpush2.msra.mxu0 0.0
    %3997 = vmatprep.subr.mxu0 0.0
    %3998 = vmatpush2.msra.mxu0 0.0
    %3999 = vmatprep.subr.mxu0 0.0
    %4000 = vmatpush2.msra.mxu0 0.0
    %4001 = vmatprep.subr.mxu0 0.0
    %4002 = vmatpush2.msra.mxu0 0.0
    %4003 = vmatprep.subr.mxu0 0.0
    %4004 = vmatpush2.msra.mxu0 0.0
    %4005 = vmatprep.subr.mxu0 0.0
    %4006 = vmatpush2.msra.mxu0 0.0
    %4007 = vmatprep.subr.mxu0 0.0
    %4008 = vmatpush2.msra.mxu0 0.0
    %4009 = vmatprep.subr.mxu0 0.0
    %4010 = vmatpush2.msra.mxu0 0.0
    %4011 = vmatprep.subr.mxu0 0.0
    %4012 = vmatpush2.msra.mxu0 0.0
    %4013 = vmatprep.subr.mxu0 0.0
    %4014 = vmatpush2.msra.mxu0 0.0
    %4015 = vmatprep.subr.mxu0 0.0
    %4016 = vmatpush2.msra.mxu0 0.0
    %4017 = vmatprep.subr.mxu0 0.0
    %4018 = vmatpush2.msra.mxu0 0.0
    %4019 = vmatprep.subr.mxu0 0.0
    %4020 = vmatpush2.msra.mxu0 0.0
    %4021 = vmatprep.subr.mxu0 0.0
    %4022 = vmatpush2.msra.mxu0 0.0
    %4023 = vmatprep.mubr.f32.mxu0 0.0
    %4024 = vmatmul.mubr.f32.gmra.mxu0 %v3096
    %v4025 = vpop.f32.mrf.mxu0
    %v4026 = vadd.f32 0.0, %v4025
    %v4027 = vpop.f32.mrf.mxu0
    %4028 = vdwg.mxu0
    %4029 = vmatprep.subr.mxu0 0.0
    %4030 = vmatpush1.msra.mxu0 0.0
    %4031 = vmatprep.subr.mxu0 0.0
    %4032 = vmatpush1.msra.mxu0 0.0
    %4033 = vmatprep.subr.mxu0 0.0
    %4034 = vmatpush1.msra.mxu0 0.0
    %4035 = vmatprep.subr.mxu0 0.0
    %4036 = vmatpush1.msra.mxu0 0.0
    %4037 = vmatprep.subr.mxu0 0.0
    %4038 = vmatpush1.msra.mxu0 0.0
    %4039 = vmatprep.subr.mxu0 0.0
    %4040 = vmatpush1.msra.mxu0 0.0
    %4041 = vmatprep.subr.mxu0 0.0
    %4042 = vmatpush1.msra.mxu0 0.0
    %4043 = vmatprep.subr.mxu0 0.0
    %4044 = vmatpush1.msra.mxu0 0.0
    %4045 = vmatprep.subr.mxu0 0.0
    %4046 = vmatpush1.msra.mxu0 0.0
    %4047 = vmatprep.subr.mxu0 0.0
    %4048 = vmatpush1.msra.mxu0 0.0
    %4049 = vmatprep.subr.mxu0 0.0
    %4050 = vmatpush1.msra.mxu0 0.0
    %4051 = vmatprep.subr.mxu0 0.0
    %4052 = vmatpush1.msra.mxu0 0.0
    %4053 = vmatprep.subr.mxu0 0.0
    %4054 = vmatpush1.msra.mxu0 0.0
    %4055 = vmatprep.subr.mxu0 0.0
    %4056 = vmatpush1.msra.mxu0 0.0
    %4057 = vmatprep.subr.mxu0 0.0
    %4058 = vmatpush1.msra.mxu0 %v40
    %4059 = vmatprep.subr.mxu0 0.0
    %4060 = vmatpush1.msra.mxu0 %v39
    %4061 = vmatprep.subr.mxu0 0.0
    %4062 = vmatpush2.msra.mxu0 0.0
    %4063 = vmatprep.subr.mxu0 0.0
    %4064 = vmatpush2.msra.mxu0 0.0
    %4065 = vmatprep.subr.mxu0 0.0
    %4066 = vmatpush2.msra.mxu0 0.0
    %4067 = vmatprep.subr.mxu0 0.0
    %4068 = vmatpush2.msra.mxu0 0.0
    %4069 = vmatprep.subr.mxu0 0.0
    %4070 = vmatpush2.msra.mxu0 0.0
    %4071 = vmatprep.subr.mxu0 0.0
    %4072 = vmatpush2.msra.mxu0 0.0
    %4073 = vmatprep.subr.mxu0 0.0
    %4074 = vmatpush2.msra.mxu0 0.0
    %4075 = vmatprep.subr.mxu0 0.0
    %4076 = vmatpush2.msra.mxu0 0.0
    %4077 = vmatprep.subr.mxu0 0.0
    %4078 = vmatpush2.msra.mxu0 0.0
    %4079 = vmatprep.subr.mxu0 0.0
    %4080 = vmatpush2.msra.mxu0 0.0
    %4081 = vmatprep.subr.mxu0 0.0
    %4082 = vmatpush2.msra.mxu0 0.0
    %4083 = vmatprep.subr.mxu0 0.0
    %4084 = vmatpush2.msra.mxu0 0.0
    %4085 = vmatprep.subr.mxu0 0.0
    %4086 = vmatpush2.msra.mxu0 0.0
    %4087 = vmatprep.subr.mxu0 0.0
    %4088 = vmatpush2.msra.mxu0 0.0
    %4089 = vmatprep.subr.mxu0 0.0
    %4090 = vmatpush2.msra.mxu0 0.0
    %4091 = vmatprep.subr.mxu0 0.0
    %4092 = vmatpush2.msra.mxu0 0.0
    %4093 = vmatprep.mubr.f32.mxu0 0.0
    %4094 = vmatmul.mubr.f32.gmra.mxu0 %v3209
    %v4095 = vpop.f32.mrf.mxu0
    %v4096 = vadd.f32 0.0, %v4095
    %v4097 = vpop.f32.mrf.mxu0
    %4098 = vdwg.mxu0
    %4099 = vmatprep.subr.mxu0 0.0
    %4100 = vmatpush1.msra.mxu0 0.0
    %4101 = vmatprep.subr.mxu0 0.0
    %4102 = vmatpush1.msra.mxu0 0.0
    %4103 = vmatprep.subr.mxu0 0.0
    %4104 = vmatpush1.msra.mxu0 0.0
    %4105 = vmatprep.subr.mxu0 0.0
    %4106 = vmatpush1.msra.mxu0 0.0
    %4107 = vmatprep.subr.mxu0 0.0
    %4108 = vmatpush1.msra.mxu0 0.0
    %4109 = vmatprep.subr.mxu0 0.0
    %4110 = vmatpush1.msra.mxu0 0.0
    %4111 = vmatprep.subr.mxu0 0.0
    %4112 = vmatpush1.msra.mxu0 0.0
    %4113 = vmatprep.subr.mxu0 0.0
    %4114 = vmatpush1.msra.mxu0 0.0
    %4115 = vmatprep.subr.mxu0 0.0
    %4116 = vmatpush1.msra.mxu0 0.0
    %4117 = vmatprep.subr.mxu0 0.0
    %4118 = vmatpush1.msra.mxu0 0.0
    %4119 = vmatprep.subr.mxu0 0.0
    %4120 = vmatpush1.msra.mxu0 0.0
    %4121 = vmatprep.subr.mxu0 0.0
    %4122 = vmatpush1.msra.mxu0 0.0
    %4123 = vmatprep.subr.mxu0 0.0
    %4124 = vmatpush1.msra.mxu0 0.0
    %4125 = vmatprep.subr.mxu0 0.0
    %4126 = vmatpush1.msra.mxu0 0.0
    %4127 = vmatprep.subr.mxu0 0.0
    %4128 = vmatpush1.msra.mxu0 %v42
    %4129 = vmatprep.subr.mxu0 0.0
    %4130 = vmatpush1.msra.mxu0 %v41
    %4131 = vmatprep.subr.mxu0 0.0
    %4132 = vmatpush2.msra.mxu0 0.0
    %4133 = vmatprep.subr.mxu0 0.0
    %4134 = vmatpush2.msra.mxu0 0.0
    %4135 = vmatprep.subr.mxu0 0.0
    %4136 = vmatpush2.msra.mxu0 0.0
    %4137 = vmatprep.subr.mxu0 0.0
    %4138 = vmatpush2.msra.mxu0 0.0
    %4139 = vmatprep.subr.mxu0 0.0
    %4140 = vmatpush2.msra.mxu0 0.0
    %4141 = vmatprep.subr.mxu0 0.0
    %4142 = vmatpush2.msra.mxu0 0.0
    %4143 = vmatprep.subr.mxu0 0.0
    %4144 = vmatpush2.msra.mxu0 0.0
    %4145 = vmatprep.subr.mxu0 0.0
    %4146 = vmatpush2.msra.mxu0 0.0
    %4147 = vmatprep.subr.mxu0 0.0
    %4148 = vmatpush2.msra.mxu0 0.0
    %4149 = vmatprep.subr.mxu0 0.0
    %4150 = vmatpush2.msra.mxu0 0.0
    %4151 = vmatprep.subr.mxu0 0.0
    %4152 = vmatpush2.msra.mxu0 0.0
    %4153 = vmatprep.subr.mxu0 0.0
    %4154 = vmatpush2.msra.mxu0 0.0
    %4155 = vmatprep.subr.mxu0 0.0
    %4156 = vmatpush2.msra.mxu0 0.0
    %4157 = vmatprep.subr.mxu0 0.0
    %4158 = vmatpush2.msra.mxu0 0.0
    %4159 = vmatprep.subr.mxu0 0.0
    %4160 = vmatpush2.msra.mxu0 0.0
    %4161 = vmatprep.subr.mxu0 0.0
    %4162 = vmatpush2.msra.mxu0 0.0
    %4163 = vmatprep.mubr.f32.mxu0 0.0
    %4164 = vmatmul.mubr.f32.gmra.mxu0 %v3322
    %v4165 = vpop.f32.mrf.mxu0
    %v4166 = vadd.f32 0.0, %v4165
    %v4167 = vpop.f32.mrf.mxu0
    %4168 = vdwg.mxu0
    %4169 = vmatprep.subr.mxu0 0.0
    %4170 = vmatpush1.msra.mxu0 0.0
    %4171 = vmatprep.subr.mxu0 0.0
    %4172 = vmatpush1.msra.mxu0 0.0
    %4173 = vmatprep.subr.mxu0 0.0
    %4174 = vmatpush1.msra.mxu0 0.0
    %4175 = vmatprep.subr.mxu0 0.0
    %4176 = vmatpush1.msra.mxu0 0.0
    %4177 = vmatprep.subr.mxu0 0.0
    %4178 = vmatpush1.msra.mxu0 0.0
    %4179 = vmatprep.subr.mxu0 0.0
    %4180 = vmatpush1.msra.mxu0 0.0
    %4181 = vmatprep.subr.mxu0 0.0
    %4182 = vmatpush1.msra.mxu0 0.0
    %4183 = vmatprep.subr.mxu0 0.0
    %4184 = vmatpush1.msra.mxu0 0.0
    %4185 = vmatprep.subr.mxu0 0.0
    %4186 = vmatpush1.msra.mxu0 0.0
    %4187 = vmatprep.subr.mxu0 0.0
    %4188 = vmatpush1.msra.mxu0 0.0
    %4189 = vmatprep.subr.mxu0 0.0
    %4190 = vmatpush1.msra.mxu0 0.0
    %4191 = vmatprep.subr.mxu0 0.0
    %4192 = vmatpush1.msra.mxu0 0.0
    %4193 = vmatprep.subr.mxu0 0.0
    %4194 = vmatpush1.msra.mxu0 0.0
    %4195 = vmatprep.subr.mxu0 0.0
    %4196 = vmatpush1.msra.mxu0 0.0
    %4197 = vmatprep.subr.mxu0 0.0
    %4198 = vmatpush1.msra.mxu0 %v44
    %4199 = vmatprep.subr.mxu0 0.0
    %4200 = vmatpush1.msra.mxu0 %v43
    %4201 = vmatprep.subr.mxu0 0.0
    %4202 = vmatpush2.msra.mxu0 0.0
    %4203 = vmatprep.subr.mxu0 0.0
    %4204 = vmatpush2.msra.mxu0 0.0
    %4205 = vmatprep.subr.mxu0 0.0
    %4206 = vmatpush2.msra.mxu0 0.0
    %4207 = vmatprep.subr.mxu0 0.0
    %4208 = vmatpush2.msra.mxu0 0.0
    %4209 = vmatprep.subr.mxu0 0.0
    %4210 = vmatpush2.msra.mxu0 0.0
    %4211 = vmatprep.subr.mxu0 0.0
    %4212 = vmatpush2.msra.mxu0 0.0
    %4213 = vmatprep.subr.mxu0 0.0
    %4214 = vmatpush2.msra.mxu0 0.0
    %4215 = vmatprep.subr.mxu0 0.0
    %4216 = vmatpush2.msra.mxu0 0.0
    %4217 = vmatprep.subr.mxu0 0.0
    %4218 = vmatpush2.msra.mxu0 0.0
    %4219 = vmatprep.subr.mxu0 0.0
    %4220 = vmatpush2.msra.mxu0 0.0
    %4221 = vmatprep.subr.mxu0 0.0
    %4222 = vmatpush2.msra.mxu0 0.0
    %4223 = vmatprep.subr.mxu0 0.0
    %4224 = vmatpush2.msra.mxu0 0.0
    %4225 = vmatprep.subr.mxu0 0.0
    %4226 = vmatpush2.msra.mxu0 0.0
    %4227 = vmatprep.subr.mxu0 0.0
    %4228 = vmatpush2.msra.mxu0 0.0
    %4229 = vmatprep.subr.mxu0 0.0
    %4230 = vmatpush2.msra.mxu0 0.0
    %4231 = vmatprep.subr.mxu0 0.0
    %4232 = vmatpush2.msra.mxu0 0.0
    %4233 = vmatprep.mubr.f32.mxu0 0.0
    %4234 = vmatmul.mubr.f32.gmra.mxu0 %v3435
    %v4235 = vpop.f32.mrf.mxu0
    %v4236 = vadd.f32 0.0, %v4235
    %v4237 = vpop.f32.mrf.mxu0
    %4238 = vdwg.mxu0
    %4239 = vmatprep.subr.mxu0 0.0
    %4240 = vmatpush1.msra.mxu0 0.0
    %4241 = vmatprep.subr.mxu0 0.0
    %4242 = vmatpush1.msra.mxu0 0.0
    %4243 = vmatprep.subr.mxu0 0.0
    %4244 = vmatpush1.msra.mxu0 0.0
    %4245 = vmatprep.subr.mxu0 0.0
    %4246 = vmatpush1.msra.mxu0 0.0
    %4247 = vmatprep.subr.mxu0 0.0
    %4248 = vmatpush1.msra.mxu0 0.0
    %4249 = vmatprep.subr.mxu0 0.0
    %4250 = vmatpush1.msra.mxu0 0.0
    %4251 = vmatprep.subr.mxu0 0.0
    %4252 = vmatpush1.msra.mxu0 0.0
    %4253 = vmatprep.subr.mxu0 0.0
    %4254 = vmatpush1.msra.mxu0 0.0
    %4255 = vmatprep.subr.mxu0 0.0
    %4256 = vmatpush1.msra.mxu0 0.0
    %4257 = vmatprep.subr.mxu0 0.0
    %4258 = vmatpush1.msra.mxu0 0.0
    %4259 = vmatprep.subr.mxu0 0.0
    %4260 = vmatpush1.msra.mxu0 0.0
    %4261 = vmatprep.subr.mxu0 0.0
    %4262 = vmatpush1.msra.mxu0 0.0
    %4263 = vmatprep.subr.mxu0 0.0
    %4264 = vmatpush1.msra.mxu0 0.0
    %4265 = vmatprep.subr.mxu0 0.0
    %4266 = vmatpush1.msra.mxu0 0.0
    %4267 = vmatprep.subr.mxu0 0.0
    %4268 = vmatpush1.msra.mxu0 %v46
    %4269 = vmatprep.subr.mxu0 0.0
    %4270 = vmatpush1.msra.mxu0 %v45
    %4271 = vmatprep.subr.mxu0 0.0
    %4272 = vmatpush2.msra.mxu0 0.0
    %4273 = vmatprep.subr.mxu0 0.0
    %4274 = vmatpush2.msra.mxu0 0.0
    %4275 = vmatprep.subr.mxu0 0.0
    %4276 = vmatpush2.msra.mxu0 0.0
    %4277 = vmatprep.subr.mxu0 0.0
    %4278 = vmatpush2.msra.mxu0 0.0
    %4279 = vmatprep.subr.mxu0 0.0
    %4280 = vmatpush2.msra.mxu0 0.0
    %4281 = vmatprep.subr.mxu0 0.0
    %4282 = vmatpush2.msra.mxu0 0.0
    %4283 = vmatprep.subr.mxu0 0.0
    %4284 = vmatpush2.msra.mxu0 0.0
    %4285 = vmatprep.subr.mxu0 0.0
    %4286 = vmatpush2.msra.mxu0 0.0
    %4287 = vmatprep.subr.mxu0 0.0
    %4288 = vmatpush2.msra.mxu0 0.0
    %4289 = vmatprep.subr.mxu0 0.0
    %4290 = vmatpush2.msra.mxu0 0.0
    %4291 = vmatprep.subr.mxu0 0.0
    %4292 = vmatpush2.msra.mxu0 0.0
    %4293 = vmatprep.subr.mxu0 0.0
    %4294 = vmatpush2.msra.mxu0 0.0
    %4295 = vmatprep.subr.mxu0 0.0
    %4296 = vmatpush2.msra.mxu0 0.0
    %4297 = vmatprep.subr.mxu0 0.0
    %4298 = vmatpush2.msra.mxu0 0.0
    %4299 = vmatprep.subr.mxu0 0.0
    %4300 = vmatpush2.msra.mxu0 0.0
    %4301 = vmatprep.subr.mxu0 0.0
    %4302 = vmatpush2.msra.mxu0 0.0
    %4303 = vmatprep.mubr.f32.mxu0 0.0
    %4304 = vmatmul.mubr.f32.gmra.mxu0 %v3548
    %v4305 = vpop.f32.mrf.mxu0
    %v4306 = vadd.f32 0.0, %v4305
    %v4307 = vpop.f32.mrf.mxu0
    %4308 = vdwg.mxu0
    %4309 = vmatprep.subr.mxu0 0.0
    %4310 = vmatpush1.msra.mxu0 0.0
    %4311 = vmatprep.subr.mxu0 0.0
    %4312 = vmatpush1.msra.mxu0 0.0
    %4313 = vmatprep.subr.mxu0 0.0
    %4314 = vmatpush1.msra.mxu0 0.0
    %4315 = vmatprep.subr.mxu0 0.0
    %4316 = vmatpush1.msra.mxu0 0.0
    %4317 = vmatprep.subr.mxu0 0.0
    %4318 = vmatpush1.msra.mxu0 0.0
    %4319 = vmatprep.subr.mxu0 0.0
    %4320 = vmatpush1.msra.mxu0 0.0
    %4321 = vmatprep.subr.mxu0 0.0
    %4322 = vmatpush1.msra.mxu0 0.0
    %4323 = vmatprep.subr.mxu0 0.0
    %4324 = vmatpush1.msra.mxu0 0.0
    %4325 = vmatprep.subr.mxu0 0.0
    %4326 = vmatpush1.msra.mxu0 0.0
    %4327 = vmatprep.subr.mxu0 0.0
    %4328 = vmatpush1.msra.mxu0 0.0
    %4329 = vmatprep.subr.mxu0 0.0
    %4330 = vmatpush1.msra.mxu0 0.0
    %4331 = vmatprep.subr.mxu0 0.0
    %4332 = vmatpush1.msra.mxu0 0.0
    %4333 = vmatprep.subr.mxu0 0.0
    %4334 = vmatpush1.msra.mxu0 0.0
    %4335 = vmatprep.subr.mxu0 0.0
    %4336 = vmatpush1.msra.mxu0 0.0
    %4337 = vmatprep.subr.mxu0 0.0
    %4338 = vmatpush1.msra.mxu0 %v48
    %4339 = vmatprep.subr.mxu0 0.0
    %4340 = vmatpush1.msra.mxu0 %v47
    %4341 = vmatprep.subr.mxu0 0.0
    %4342 = vmatpush2.msra.mxu0 0.0
    %4343 = vmatprep.subr.mxu0 0.0
    %4344 = vmatpush2.msra.mxu0 0.0
    %4345 = vmatprep.subr.mxu0 0.0
    %4346 = vmatpush2.msra.mxu0 0.0
    %4347 = vmatprep.subr.mxu0 0.0
    %4348 = vmatpush2.msra.mxu0 0.0
    %4349 = vmatprep.subr.mxu0 0.0
    %4350 = vmatpush2.msra.mxu0 0.0
    %4351 = vmatprep.subr.mxu0 0.0
    %4352 = vmatpush2.msra.mxu0 0.0
    %4353 = vmatprep.subr.mxu0 0.0
    %4354 = vmatpush2.msra.mxu0 0.0
    %4355 = vmatprep.subr.mxu0 0.0
    %4356 = vmatpush2.msra.mxu0 0.0
    %4357 = vmatprep.subr.mxu0 0.0
    %4358 = vmatpush2.msra.mxu0 0.0
    %4359 = vmatprep.subr.mxu0 0.0
    %4360 = vmatpush2.msra.mxu0 0.0
    %4361 = vmatprep.subr.mxu0 0.0
    %4362 = vmatpush2.msra.mxu0 0.0
    %4363 = vmatprep.subr.mxu0 0.0
    %4364 = vmatpush2.msra.mxu0 0.0
    %4365 = vmatprep.subr.mxu0 0.0
    %4366 = vmatpush2.msra.mxu0 0.0
    %4367 = vmatprep.subr.mxu0 0.0
    %4368 = vmatpush2.msra.mxu0 0.0
    %4369 = vmatprep.subr.mxu0 0.0
    %4370 = vmatpush2.msra.mxu0 0.0
    %4371 = vmatprep.subr.mxu0 0.0
    %4372 = vmatpush2.msra.mxu0 0.0
    %4373 = vmatprep.mubr.f32.mxu0 0.0
    %4374 = vmatmul.mubr.f32.gmra.mxu0 %v3661
    %v4375 = vpop.f32.mrf.mxu0
    %v4376 = vadd.f32 0.0, %v4375
    %v4377 = vpop.f32.mrf.mxu0
    %4378 = vdwg.mxu0
    %4379 = vmatprep.subr.mxu0 0.0
    %4380 = vmatpush1.msra.mxu0 0.0
    %4381 = vmatprep.subr.mxu0 0.0
    %4382 = vmatpush1.msra.mxu0 0.0
    %4383 = vmatprep.subr.mxu0 0.0
    %4384 = vmatpush1.msra.mxu0 0.0
    %4385 = vmatprep.subr.mxu0 0.0
    %4386 = vmatpush1.msra.mxu0 0.0
    %4387 = vmatprep.subr.mxu0 0.0
    %4388 = vmatpush1.msra.mxu0 0.0
    %4389 = vmatprep.subr.mxu0 0.0
    %4390 = vmatpush1.msra.mxu0 0.0
    %4391 = vmatprep.subr.mxu0 0.0
    %4392 = vmatpush1.msra.mxu0 0.0
    %4393 = vmatprep.subr.mxu0 0.0
    %4394 = vmatpush1.msra.mxu0 0.0
    %4395 = vmatprep.subr.mxu0 0.0
    %4396 = vmatpush1.msra.mxu0 0.0
    %4397 = vmatprep.subr.mxu0 0.0
    %4398 = vmatpush1.msra.mxu0 0.0
    %4399 = vmatprep.subr.mxu0 0.0
    %4400 = vmatpush1.msra.mxu0 0.0
    %4401 = vmatprep.subr.mxu0 0.0
    %4402 = vmatpush1.msra.mxu0 0.0
    %4403 = vmatprep.subr.mxu0 0.0
    %4404 = vmatpush1.msra.mxu0 0.0
    %4405 = vmatprep.subr.mxu0 0.0
    %4406 = vmatpush1.msra.mxu0 0.0
    %4407 = vmatprep.subr.mxu0 0.0
    %4408 = vmatpush1.msra.mxu0 %v50
    %4409 = vmatprep.subr.mxu0 0.0
    %4410 = vmatpush1.msra.mxu0 %v49
    %4411 = vmatprep.subr.mxu0 0.0
    %4412 = vmatpush2.msra.mxu0 0.0
    %4413 = vmatprep.subr.mxu0 0.0
    %4414 = vmatpush2.msra.mxu0 0.0
    %4415 = vmatprep.subr.mxu0 0.0
    %4416 = vmatpush2.msra.mxu0 0.0
    %4417 = vmatprep.subr.mxu0 0.0
    %4418 = vmatpush2.msra.mxu0 0.0
    %4419 = vmatprep.subr.mxu0 0.0
    %4420 = vmatpush2.msra.mxu0 0.0
    %4421 = vmatprep.subr.mxu0 0.0
    %4422 = vmatpush2.msra.mxu0 0.0
    %4423 = vmatprep.subr.mxu0 0.0
    %4424 = vmatpush2.msra.mxu0 0.0
    %4425 = vmatprep.subr.mxu0 0.0
    %4426 = vmatpush2.msra.mxu0 0.0
    %4427 = vmatprep.subr.mxu0 0.0
    %4428 = vmatpush2.msra.mxu0 0.0
    %4429 = vmatprep.subr.mxu0 0.0
    %4430 = vmatpush2.msra.mxu0 0.0
    %4431 = vmatprep.subr.mxu0 0.0
    %4432 = vmatpush2.msra.mxu0 0.0
    %4433 = vmatprep.subr.mxu0 0.0
    %4434 = vmatpush2.msra.mxu0 0.0
    %4435 = vmatprep.subr.mxu0 0.0
    %4436 = vmatpush2.msra.mxu0 0.0
    %4437 = vmatprep.subr.mxu0 0.0
    %4438 = vmatpush2.msra.mxu0 0.0
    %4439 = vmatprep.subr.mxu0 0.0
    %4440 = vmatpush2.msra.mxu0 0.0
    %4441 = vmatprep.subr.mxu0 0.0
    %4442 = vmatpush2.msra.mxu0 0.0
    %4443 = vmatprep.mubr.f32.mxu0 0.0
    %4444 = vmatmul.mubr.f32.gmra.mxu0 %v3774
    %v4445 = vpop.f32.mrf.mxu0
    %v4446 = vadd.f32 0.0, %v4445
    %v4447 = vpop.f32.mrf.mxu0
    %4448 = vdwg.mxu0
    %4449 = vmatprep.subr.mxu0 0.0
    %4450 = vmatpush1.msra.mxu0 0.0
    %4451 = vmatprep.subr.mxu0 0.0
    %4452 = vmatpush1.msra.mxu0 0.0
    %4453 = vmatprep.subr.mxu0 0.0
    %4454 = vmatpush1.msra.mxu0 0.0
    %4455 = vmatprep.subr.mxu0 0.0
    %4456 = vmatpush1.msra.mxu0 0.0
    %4457 = vmatprep.subr.mxu0 0.0
    %4458 = vmatpush1.msra.mxu0 0.0
    %4459 = vmatprep.subr.mxu0 0.0
    %4460 = vmatpush1.msra.mxu0 0.0
    %4461 = vmatprep.subr.mxu0 0.0
    %4462 = vmatpush1.msra.mxu0 0.0
    %4463 = vmatprep.subr.mxu0 0.0
    %4464 = vmatpush1.msra.mxu0 0.0
    %4465 = vmatprep.subr.mxu0 0.0
    %4466 = vmatpush1.msra.mxu0 0.0
    %4467 = vmatprep.subr.mxu0 0.0
    %4468 = vmatpush1.msra.mxu0 0.0
    %4469 = vmatprep.subr.mxu0 0.0
    %4470 = vmatpush1.msra.mxu0 0.0
    %4471 = vmatprep.subr.mxu0 0.0
    %4472 = vmatpush1.msra.mxu0 0.0
    %4473 = vmatprep.subr.mxu0 0.0
    %4474 = vmatpush1.msra.mxu0 0.0
    %4475 = vmatprep.subr.mxu0 0.0
    %4476 = vmatpush1.msra.mxu0 0.0
    %4477 = vmatprep.subr.mxu0 0.0
    %4478 = vmatpush1.msra.mxu0 %v52
    %4479 = vmatprep.subr.mxu0 0.0
    %4480 = vmatpush1.msra.mxu0 %v51
    %4481 = vmatprep.subr.mxu0 0.0
    %4482 = vmatpush2.msra.mxu0 0.0
    %4483 = vmatprep.subr.mxu0 0.0
    %4484 = vmatpush2.msra.mxu0 0.0
    %4485 = vmatprep.subr.mxu0 0.0
    %4486 = vmatpush2.msra.mxu0 0.0
    %4487 = vmatprep.subr.mxu0 0.0
    %4488 = vmatpush2.msra.mxu0 0.0
    %4489 = vmatprep.subr.mxu0 0.0
    %4490 = vmatpush2.msra.mxu0 0.0
    %4491 = vmatprep.subr.mxu0 0.0
    %4492 = vmatpush2.msra.mxu0 0.0
    %4493 = vmatprep.subr.mxu0 0.0
    %4494 = vmatpush2.msra.mxu0 0.0
    %4495 = vmatprep.subr.mxu0 0.0
    %4496 = vmatpush2.msra.mxu0 0.0
    %4497 = vmatprep.subr.mxu0 0.0
    %4498 = vmatpush2.msra.mxu0 0.0
    %4499 = vmatprep.subr.mxu0 0.0
    %4500 = vmatpush2.msra.mxu0 0.0
    %4501 = vmatprep.subr.mxu0 0.0
    %4502 = vmatpush2.msra.mxu0 0.0
    %4503 = vmatprep.subr.mxu0 0.0
    %4504 = vmatpush2.msra.mxu0 0.0
    %4505 = vmatprep.subr.mxu0 0.0
    %4506 = vmatpush2.msra.mxu0 0.0
    %4507 = vmatprep.subr.mxu0 0.0
    %4508 = vmatpush2.msra.mxu0 0.0
    %4509 = vmatprep.subr.mxu0 0.0
    %4510 = vmatpush2.msra.mxu0 0.0
    %4511 = vmatprep.subr.mxu0 0.0
    %4512 = vmatpush2.msra.mxu0 0.0
    %4513 = vmatprep.mubr.f32.mxu0 0.0
    %4514 = vmatmul.mubr.f32.gmra.mxu0 %v3887
    %v4515 = vpop.f32.mrf.mxu0
    %v4516 = vadd.f32 0.0, %v4515
    %v4517 = vpop.f32.mrf.mxu0
    %4518 = vdwg.mxu0
    %v4520 = vsel %vm101, %v4026, 0
    %4522 = vmatprep.subr.mxu0 0.0
    %4523 = vmatpush1.msra.mxu0 0.0
    %4524 = vmatprep.subr.mxu0 0.0
    %4525 = vmatpush1.msra.mxu0 0.0
    %4526 = vmatprep.subr.mxu0 0.0
    %4527 = vmatpush1.msra.mxu0 0.0
    %4528 = vmatprep.subr.mxu0 0.0
    %4529 = vmatpush1.msra.mxu0 0.0
    %4530 = vmatprep.subr.mxu0 0.0
    %4531 = vmatpush1.msra.mxu0 0.0
    %4532 = vmatprep.subr.mxu0 0.0
    %4533 = vmatpush1.msra.mxu0 0.0
    %4534 = vmatprep.subr.mxu0 0.0
    %4535 = vmatpush1.msra.mxu0 0.0
    %4536 = vmatprep.subr.mxu0 0.0
    %4537 = vmatpush1.msra.mxu0 0.0
    %4538 = vmatprep.subr.mxu0 0.0
    %4539 = vmatpush1.msra.mxu0 0.0
    %4540 = vmatprep.subr.mxu0 0.0
    %4541 = vmatpush1.msra.mxu0 0.0
    %4542 = vmatprep.subr.mxu0 0.0
    %4543 = vmatpush1.msra.mxu0 0.0
    %4544 = vmatprep.subr.mxu0 0.0
    %4545 = vmatpush1.msra.mxu0 0.0
    %4546 = vmatprep.subr.mxu0 0.0
    %4547 = vmatpush1.msra.mxu0 0.0
    %4548 = vmatprep.subr.mxu0 0.0
    %4549 = vmatpush1.msra.mxu0 0.0
    %4550 = vmatprep.subr.mxu0 0.0
    %4551 = vmatpush1.msra.mxu0 %v3060
    %4552 = vmatprep.subr.mxu0 0.0
    %4553 = vmatpush1.msra.mxu0 %v3058
    %4554 = vmatprep.subr.mxu0 0.0
    %4555 = vmatpush2.msra.mxu0 0.0
    %4556 = vmatprep.subr.mxu0 0.0
    %4557 = vmatpush2.msra.mxu0 0.0
    %4558 = vmatprep.subr.mxu0 0.0
    %4559 = vmatpush2.msra.mxu0 0.0
    %4560 = vmatprep.subr.mxu0 0.0
    %4561 = vmatpush2.msra.mxu0 0.0
    %4562 = vmatprep.subr.mxu0 0.0
    %4563 = vmatpush2.msra.mxu0 0.0
    %4564 = vmatprep.subr.mxu0 0.0
    %4565 = vmatpush2.msra.mxu0 0.0
    %4566 = vmatprep.subr.mxu0 0.0
    %4567 = vmatpush2.msra.mxu0 0.0
    %4568 = vmatprep.subr.mxu0 0.0
    %4569 = vmatpush2.msra.mxu0 0.0
    %4570 = vmatprep.subr.mxu0 0.0
    %4571 = vmatpush2.msra.mxu0 0.0
    %4572 = vmatprep.subr.mxu0 0.0
    %4573 = vmatpush2.msra.mxu0 0.0
    %4574 = vmatprep.subr.mxu0 0.0
    %4575 = vmatpush2.msra.mxu0 0.0
    %4576 = vmatprep.subr.mxu0 0.0
    %4577 = vmatpush2.msra.mxu0 0.0
    %4578 = vmatprep.subr.mxu0 0.0
    %4579 = vmatpush2.msra.mxu0 0.0
    %4580 = vmatprep.subr.mxu0 0.0
    %4581 = vmatpush2.msra.mxu0 0.0
    %4582 = vmatprep.subr.mxu0 0.0
    %4583 = vmatpush2.msra.mxu0 0.0
    %4584 = vmatprep.subr.mxu0 0.0
    %4585 = vmatpush2.msra.mxu0 0.0
    %4586 = vmatprep.mubr.f32.mxu0 0.0
    %4587 = vmatmul.mubr.f32.gmra.mxu0 %v4520
    %v4588 = vpop.f32.mrf.mxu0
    %v4589 = vadd.f32 0.0, %v4588
    %v4590 = vpop.f32.mrf.mxu0
    %4591 = vdwg.mxu0
    %v4593 = vsel %vm101, %v4096, 0
    %4595 = vmatprep.subr.mxu0 0.0
    %4596 = vmatpush1.msra.mxu0 0.0
    %4597 = vmatprep.subr.mxu0 0.0
    %4598 = vmatpush1.msra.mxu0 0.0
    %4599 = vmatprep.subr.mxu0 0.0
    %4600 = vmatpush1.msra.mxu0 0.0
    %4601 = vmatprep.subr.mxu0 0.0
    %4602 = vmatpush1.msra.mxu0 0.0
    %4603 = vmatprep.subr.mxu0 0.0
    %4604 = vmatpush1.msra.mxu0 0.0
    %4605 = vmatprep.subr.mxu0 0.0
    %4606 = vmatpush1.msra.mxu0 0.0
    %4607 = vmatprep.subr.mxu0 0.0
    %4608 = vmatpush1.msra.mxu0 0.0
    %4609 = vmatprep.subr.mxu0 0.0
    %4610 = vmatpush1.msra.mxu0 0.0
    %4611 = vmatprep.subr.mxu0 0.0
    %4612 = vmatpush1.msra.mxu0 0.0
    %4613 = vmatprep.subr.mxu0 0.0
    %4614 = vmatpush1.msra.mxu0 0.0
    %4615 = vmatprep.subr.mxu0 0.0
    %4616 = vmatpush1.msra.mxu0 0.0
    %4617 = vmatprep.subr.mxu0 0.0
    %4618 = vmatpush1.msra.mxu0 0.0
    %4619 = vmatprep.subr.mxu0 0.0
    %4620 = vmatpush1.msra.mxu0 0.0
    %4621 = vmatprep.subr.mxu0 0.0
    %4622 = vmatpush1.msra.mxu0 0.0
    %4623 = vmatprep.subr.mxu0 0.0
    %4624 = vmatpush1.msra.mxu0 %v3173
    %4625 = vmatprep.subr.mxu0 0.0
    %4626 = vmatpush1.msra.mxu0 %v3171
    %4627 = vmatprep.subr.mxu0 0.0
    %4628 = vmatpush2.msra.mxu0 0.0
    %4629 = vmatprep.subr.mxu0 0.0
    %4630 = vmatpush2.msra.mxu0 0.0
    %4631 = vmatprep.subr.mxu0 0.0
    %4632 = vmatpush2.msra.mxu0 0.0
    %4633 = vmatprep.subr.mxu0 0.0
    %4634 = vmatpush2.msra.mxu0 0.0
    %4635 = vmatprep.subr.mxu0 0.0
    %4636 = vmatpush2.msra.mxu0 0.0
    %4637 = vmatprep.subr.mxu0 0.0
    %4638 = vmatpush2.msra.mxu0 0.0
    %4639 = vmatprep.subr.mxu0 0.0
    %4640 = vmatpush2.msra.mxu0 0.0
    %4641 = vmatprep.subr.mxu0 0.0
    %4642 = vmatpush2.msra.mxu0 0.0
    %4643 = vmatprep.subr.mxu0 0.0
    %4644 = vmatpush2.msra.mxu0 0.0
    %4645 = vmatprep.subr.mxu0 0.0
    %4646 = vmatpush2.msra.mxu0 0.0
    %4647 = vmatprep.subr.mxu0 0.0
    %4648 = vmatpush2.msra.mxu0 0.0
    %4649 = vmatprep.subr.mxu0 0.0
    %4650 = vmatpush2.msra.mxu0 0.0
    %4651 = vmatprep.subr.mxu0 0.0
    %4652 = vmatpush2.msra.mxu0 0.0
    %4653 = vmatprep.subr.mxu0 0.0
    %4654 = vmatpush2.msra.mxu0 0.0
    %4655 = vmatprep.subr.mxu0 0.0
    %4656 = vmatpush2.msra.mxu0 0.0
    %4657 = vmatprep.subr.mxu0 0.0
    %4658 = vmatpush2.msra.mxu0 0.0
    %4659 = vmatprep.mubr.f32.mxu0 0.0
    %4660 = vmatmul.mubr.f32.gmra.mxu0 %v4593
    %v4661 = vpop.f32.mrf.mxu0
    %v4662 = vadd.f32 0.0, %v4661
    %v4663 = vpop.f32.mrf.mxu0
    %4664 = vdwg.mxu0
    %v4666 = vsel %vm101, %v4166, 0
    %4668 = vmatprep.subr.mxu0 0.0
    %4669 = vmatpush1.msra.mxu0 0.0
    %4670 = vmatprep.subr.mxu0 0.0
    %4671 = vmatpush1.msra.mxu0 0.0
    %4672 = vmatprep.subr.mxu0 0.0
    %4673 = vmatpush1.msra.mxu0 0.0
    %4674 = vmatprep.subr.mxu0 0.0
    %4675 = vmatpush1.msra.mxu0 0.0
    %4676 = vmatprep.subr.mxu0 0.0
    %4677 = vmatpush1.msra.mxu0 0.0
    %4678 = vmatprep.subr.mxu0 0.0
    %4679 = vmatpush1.msra.mxu0 0.0
    %4680 = vmatprep.subr.mxu0 0.0
    %4681 = vmatpush1.msra.mxu0 0.0
    %4682 = vmatprep.subr.mxu0 0.0
    %4683 = vmatpush1.msra.mxu0 0.0
    %4684 = vmatprep.subr.mxu0 0.0
    %4685 = vmatpush1.msra.mxu0 0.0
    %4686 = vmatprep.subr.mxu0 0.0
    %4687 = vmatpush1.msra.mxu0 0.0
    %4688 = vmatprep.subr.mxu0 0.0
    %4689 = vmatpush1.msra.mxu0 0.0
    %4690 = vmatprep.subr.mxu0 0.0
    %4691 = vmatpush1.msra.mxu0 0.0
    %4692 = vmatprep.subr.mxu0 0.0
    %4693 = vmatpush1.msra.mxu0 0.0
    %4694 = vmatprep.subr.mxu0 0.0
    %4695 = vmatpush1.msra.mxu0 0.0
    %4696 = vmatprep.subr.mxu0 0.0
    %4697 = vmatpush1.msra.mxu0 %v3286
    %4698 = vmatprep.subr.mxu0 0.0
    %4699 = vmatpush1.msra.mxu0 %v3284
    %4700 = vmatprep.subr.mxu0 0.0
    %4701 = vmatpush2.msra.mxu0 0.0
    %4702 = vmatprep.subr.mxu0 0.0
    %4703 = vmatpush2.msra.mxu0 0.0
    %4704 = vmatprep.subr.mxu0 0.0
    %4705 = vmatpush2.msra.mxu0 0.0
    %4706 = vmatprep.subr.mxu0 0.0
    %4707 = vmatpush2.msra.mxu0 0.0
    %4708 = vmatprep.subr.mxu0 0.0
    %4709 = vmatpush2.msra.mxu0 0.0
    %4710 = vmatprep.subr.mxu0 0.0
    %4711 = vmatpush2.msra.mxu0 0.0
    %4712 = vmatprep.subr.mxu0 0.0
    %4713 = vmatpush2.msra.mxu0 0.0
    %4714 = vmatprep.subr.mxu0 0.0
    %4715 = vmatpush2.msra.mxu0 0.0
    %4716 = vmatprep.subr.mxu0 0.0
    %4717 = vmatpush2.msra.mxu0 0.0
    %4718 = vmatprep.subr.mxu0 0.0
    %4719 = vmatpush2.msra.mxu0 0.0
    %4720 = vmatprep.subr.mxu0 0.0
    %4721 = vmatpush2.msra.mxu0 0.0
    %4722 = vmatprep.subr.mxu0 0.0
    %4723 = vmatpush2.msra.mxu0 0.0
    %4724 = vmatprep.subr.mxu0 0.0
    %4725 = vmatpush2.msra.mxu0 0.0
    %4726 = vmatprep.subr.mxu0 0.0
    %4727 = vmatpush2.msra.mxu0 0.0
    %4728 = vmatprep.subr.mxu0 0.0
    %4729 = vmatpush2.msra.mxu0 0.0
    %4730 = vmatprep.subr.mxu0 0.0
    %4731 = vmatpush2.msra.mxu0 0.0
    %4732 = vmatprep.mubr.f32.mxu0 0.0
    %4733 = vmatmul.mubr.f32.gmra.mxu0 %v4666
    %v4734 = vpop.f32.mrf.mxu0
    %v4735 = vadd.f32 0.0, %v4734
    %v4736 = vpop.f32.mrf.mxu0
    %4737 = vdwg.mxu0
    %v4739 = vsel %vm101, %v4236, 0
    %4741 = vmatprep.subr.mxu0 0.0
    %4742 = vmatpush1.msra.mxu0 0.0
    %4743 = vmatprep.subr.mxu0 0.0
    %4744 = vmatpush1.msra.mxu0 0.0
    %4745 = vmatprep.subr.mxu0 0.0
    %4746 = vmatpush1.msra.mxu0 0.0
    %4747 = vmatprep.subr.mxu0 0.0
    %4748 = vmatpush1.msra.mxu0 0.0
    %4749 = vmatprep.subr.mxu0 0.0
    %4750 = vmatpush1.msra.mxu0 0.0
    %4751 = vmatprep.subr.mxu0 0.0
    %4752 = vmatpush1.msra.mxu0 0.0
    %4753 = vmatprep.subr.mxu0 0.0
    %4754 = vmatpush1.msra.mxu0 0.0
    %4755 = vmatprep.subr.mxu0 0.0
    %4756 = vmatpush1.msra.mxu0 0.0
    %4757 = vmatprep.subr.mxu0 0.0
    %4758 = vmatpush1.msra.mxu0 0.0
    %4759 = vmatprep.subr.mxu0 0.0
    %4760 = vmatpush1.msra.mxu0 0.0
    %4761 = vmatprep.subr.mxu0 0.0
    %4762 = vmatpush1.msra.mxu0 0.0
    %4763 = vmatprep.subr.mxu0 0.0
    %4764 = vmatpush1.msra.mxu0 0.0
    %4765 = vmatprep.subr.mxu0 0.0
    %4766 = vmatpush1.msra.mxu0 0.0
    %4767 = vmatprep.subr.mxu0 0.0
    %4768 = vmatpush1.msra.mxu0 0.0
    %4769 = vmatprep.subr.mxu0 0.0
    %4770 = vmatpush1.msra.mxu0 %v3399
    %4771 = vmatprep.subr.mxu0 0.0
    %4772 = vmatpush1.msra.mxu0 %v3397
    %4773 = vmatprep.subr.mxu0 0.0
    %4774 = vmatpush2.msra.mxu0 0.0
    %4775 = vmatprep.subr.mxu0 0.0
    %4776 = vmatpush2.msra.mxu0 0.0
    %4777 = vmatprep.subr.mxu0 0.0
    %4778 = vmatpush2.msra.mxu0 0.0
    %4779 = vmatprep.subr.mxu0 0.0
    %4780 = vmatpush2.msra.mxu0 0.0
    %4781 = vmatprep.subr.mxu0 0.0
    %4782 = vmatpush2.msra.mxu0 0.0
    %4783 = vmatprep.subr.mxu0 0.0
    %4784 = vmatpush2.msra.mxu0 0.0
    %4785 = vmatprep.subr.mxu0 0.0
    %4786 = vmatpush2.msra.mxu0 0.0
    %4787 = vmatprep.subr.mxu0 0.0
    %4788 = vmatpush2.msra.mxu0 0.0
    %4789 = vmatprep.subr.mxu0 0.0
    %4790 = vmatpush2.msra.mxu0 0.0
    %4791 = vmatprep.subr.mxu0 0.0
    %4792 = vmatpush2.msra.mxu0 0.0
    %4793 = vmatprep.subr.mxu0 0.0
    %4794 = vmatpush2.msra.mxu0 0.0
    %4795 = vmatprep.subr.mxu0 0.0
    %4796 = vmatpush2.msra.mxu0 0.0
    %4797 = vmatprep.subr.mxu0 0.0
    %4798 = vmatpush2.msra.mxu0 0.0
    %4799 = vmatprep.subr.mxu0 0.0
    %4800 = vmatpush2.msra.mxu0 0.0
    %4801 = vmatprep.subr.mxu0 0.0
    %4802 = vmatpush2.msra.mxu0 0.0
    %4803 = vmatprep.subr.mxu0 0.0
    %4804 = vmatpush2.msra.mxu0 0.0
    %4805 = vmatprep.mubr.f32.mxu0 0.0
    %4806 = vmatmul.mubr.f32.gmra.mxu0 %v4739
    %v4807 = vpop.f32.mrf.mxu0
    %v4808 = vadd.f32 0.0, %v4807
    %v4809 = vpop.f32.mrf.mxu0
    %4810 = vdwg.mxu0
    %v4812 = vsel %vm101, %v4306, 0
    %4814 = vmatprep.subr.mxu0 0.0
    %4815 = vmatpush1.msra.mxu0 0.0
    %4816 = vmatprep.subr.mxu0 0.0
    %4817 = vmatpush1.msra.mxu0 0.0
    %4818 = vmatprep.subr.mxu0 0.0
    %4819 = vmatpush1.msra.mxu0 0.0
    %4820 = vmatprep.subr.mxu0 0.0
    %4821 = vmatpush1.msra.mxu0 0.0
    %4822 = vmatprep.subr.mxu0 0.0
    %4823 = vmatpush1.msra.mxu0 0.0
    %4824 = vmatprep.subr.mxu0 0.0
    %4825 = vmatpush1.msra.mxu0 0.0
    %4826 = vmatprep.subr.mxu0 0.0
    %4827 = vmatpush1.msra.mxu0 0.0
    %4828 = vmatprep.subr.mxu0 0.0
    %4829 = vmatpush1.msra.mxu0 0.0
    %4830 = vmatprep.subr.mxu0 0.0
    %4831 = vmatpush1.msra.mxu0 0.0
    %4832 = vmatprep.subr.mxu0 0.0
    %4833 = vmatpush1.msra.mxu0 0.0
    %4834 = vmatprep.subr.mxu0 0.0
    %4835 = vmatpush1.msra.mxu0 0.0
    %4836 = vmatprep.subr.mxu0 0.0
    %4837 = vmatpush1.msra.mxu0 0.0
    %4838 = vmatprep.subr.mxu0 0.0
    %4839 = vmatpush1.msra.mxu0 0.0
    %4840 = vmatprep.subr.mxu0 0.0
    %4841 = vmatpush1.msra.mxu0 0.0
    %4842 = vmatprep.subr.mxu0 0.0
    %4843 = vmatpush1.msra.mxu0 %v3512
    %4844 = vmatprep.subr.mxu0 0.0
    %4845 = vmatpush1.msra.mxu0 %v3510
    %4846 = vmatprep.subr.mxu0 0.0
    %4847 = vmatpush2.msra.mxu0 0.0
    %4848 = vmatprep.subr.mxu0 0.0
    %4849 = vmatpush2.msra.mxu0 0.0
    %4850 = vmatprep.subr.mxu0 0.0
    %4851 = vmatpush2.msra.mxu0 0.0
    %4852 = vmatprep.subr.mxu0 0.0
    %4853 = vmatpush2.msra.mxu0 0.0
    %4854 = vmatprep.subr.mxu0 0.0
    %4855 = vmatpush2.msra.mxu0 0.0
    %4856 = vmatprep.subr.mxu0 0.0
    %4857 = vmatpush2.msra.mxu0 0.0
    %4858 = vmatprep.subr.mxu0 0.0
    %4859 = vmatpush2.msra.mxu0 0.0
    %4860 = vmatprep.subr.mxu0 0.0
    %4861 = vmatpush2.msra.mxu0 0.0
    %4862 = vmatprep.subr.mxu0 0.0
    %4863 = vmatpush2.msra.mxu0 0.0
    %4864 = vmatprep.subr.mxu0 0.0
    %4865 = vmatpush2.msra.mxu0 0.0
    %4866 = vmatprep.subr.mxu0 0.0
    %4867 = vmatpush2.msra.mxu0 0.0
    %4868 = vmatprep.subr.mxu0 0.0
    %4869 = vmatpush2.msra.mxu0 0.0
    %4870 = vmatprep.subr.mxu0 0.0
    %4871 = vmatpush2.msra.mxu0 0.0
    %4872 = vmatprep.subr.mxu0 0.0
    %4873 = vmatpush2.msra.mxu0 0.0
    %4874 = vmatprep.subr.mxu0 0.0
    %4875 = vmatpush2.msra.mxu0 0.0
    %4876 = vmatprep.subr.mxu0 0.0
    %4877 = vmatpush2.msra.mxu0 0.0
    %4878 = vmatprep.mubr.f32.mxu0 0.0
    %4879 = vmatmul.mubr.f32.gmra.mxu0 %v4812
    %v4880 = vpop.f32.mrf.mxu0
    %v4881 = vadd.f32 0.0, %v4880
    %v4882 = vpop.f32.mrf.mxu0
    %4883 = vdwg.mxu0
    %v4885 = vsel %vm101, %v4376, 0
    %4887 = vmatprep.subr.mxu0 0.0
    %4888 = vmatpush1.msra.mxu0 0.0
    %4889 = vmatprep.subr.mxu0 0.0
    %4890 = vmatpush1.msra.mxu0 0.0
    %4891 = vmatprep.subr.mxu0 0.0
    %4892 = vmatpush1.msra.mxu0 0.0
    %4893 = vmatprep.subr.mxu0 0.0
    %4894 = vmatpush1.msra.mxu0 0.0
    %4895 = vmatprep.subr.mxu0 0.0
    %4896 = vmatpush1.msra.mxu0 0.0
    %4897 = vmatprep.subr.mxu0 0.0
    %4898 = vmatpush1.msra.mxu0 0.0
    %4899 = vmatprep.subr.mxu0 0.0
    %4900 = vmatpush1.msra.mxu0 0.0
    %4901 = vmatprep.subr.mxu0 0.0
    %4902 = vmatpush1.msra.mxu0 0.0
    %4903 = vmatprep.subr.mxu0 0.0
    %4904 = vmatpush1.msra.mxu0 0.0
    %4905 = vmatprep.subr.mxu0 0.0
    %4906 = vmatpush1.msra.mxu0 0.0
    %4907 = vmatprep.subr.mxu0 0.0
    %4908 = vmatpush1.msra.mxu0 0.0
    %4909 = vmatprep.subr.mxu0 0.0
    %4910 = vmatpush1.msra.mxu0 0.0
    %4911 = vmatprep.subr.mxu0 0.0
    %4912 = vmatpush1.msra.mxu0 0.0
    %4913 = vmatprep.subr.mxu0 0.0
    %4914 = vmatpush1.msra.mxu0 0.0
    %4915 = vmatprep.subr.mxu0 0.0
    %4916 = vmatpush1.msra.mxu0 %v3625
    %4917 = vmatprep.subr.mxu0 0.0
    %4918 = vmatpush1.msra.mxu0 %v3623
    %4919 = vmatprep.subr.mxu0 0.0
    %4920 = vmatpush2.msra.mxu0 0.0
    %4921 = vmatprep.subr.mxu0 0.0
    %4922 = vmatpush2.msra.mxu0 0.0
    %4923 = vmatprep.subr.mxu0 0.0
    %4924 = vmatpush2.msra.mxu0 0.0
    %4925 = vmatprep.subr.mxu0 0.0
    %4926 = vmatpush2.msra.mxu0 0.0
    %4927 = vmatprep.subr.mxu0 0.0
    %4928 = vmatpush2.msra.mxu0 0.0
    %4929 = vmatprep.subr.mxu0 0.0
    %4930 = vmatpush2.msra.mxu0 0.0
    %4931 = vmatprep.subr.mxu0 0.0
    %4932 = vmatpush2.msra.mxu0 0.0
    %4933 = vmatprep.subr.mxu0 0.0
    %4934 = vmatpush2.msra.mxu0 0.0
    %4935 = vmatprep.subr.mxu0 0.0
    %4936 = vmatpush2.msra.mxu0 0.0
    %4937 = vmatprep.subr.mxu0 0.0
    %4938 = vmatpush2.msra.mxu0 0.0
    %4939 = vmatprep.subr.mxu0 0.0
    %4940 = vmatpush2.msra.mxu0 0.0
    %4941 = vmatprep.subr.mxu0 0.0
    %4942 = vmatpush2.msra.mxu0 0.0
    %4943 = vmatprep.subr.mxu0 0.0
    %4944 = vmatpush2.msra.mxu0 0.0
    %4945 = vmatprep.subr.mxu0 0.0
    %4946 = vmatpush2.msra.mxu0 0.0
    %4947 = vmatprep.subr.mxu0 0.0
    %4948 = vmatpush2.msra.mxu0 0.0
    %4949 = vmatprep.subr.mxu0 0.0
    %4950 = vmatpush2.msra.mxu0 0.0
    %4951 = vmatprep.mubr.f32.mxu0 0.0
    %4952 = vmatmul.mubr.f32.gmra.mxu0 %v4885
    %v4953 = vpop.f32.mrf.mxu0
    %v4954 = vadd.f32 0.0, %v4953
    %v4955 = vpop.f32.mrf.mxu0
    %4956 = vdwg.mxu0
    %v4958 = vsel %vm101, %v4446, 0
    %4960 = vmatprep.subr.mxu0 0.0
    %4961 = vmatpush1.msra.mxu0 0.0
    %4962 = vmatprep.subr.mxu0 0.0
    %4963 = vmatpush1.msra.mxu0 0.0
    %4964 = vmatprep.subr.mxu0 0.0
    %4965 = vmatpush1.msra.mxu0 0.0
    %4966 = vmatprep.subr.mxu0 0.0
    %4967 = vmatpush1.msra.mxu0 0.0
    %4968 = vmatprep.subr.mxu0 0.0
    %4969 = vmatpush1.msra.mxu0 0.0
    %4970 = vmatprep.subr.mxu0 0.0
    %4971 = vmatpush1.msra.mxu0 0.0
    %4972 = vmatprep.subr.mxu0 0.0
    %4973 = vmatpush1.msra.mxu0 0.0
    %4974 = vmatprep.subr.mxu0 0.0
    %4975 = vmatpush1.msra.mxu0 0.0
    %4976 = vmatprep.subr.mxu0 0.0
    %4977 = vmatpush1.msra.mxu0 0.0
    %4978 = vmatprep.subr.mxu0 0.0
    %4979 = vmatpush1.msra.mxu0 0.0
    %4980 = vmatprep.subr.mxu0 0.0
    %4981 = vmatpush1.msra.mxu0 0.0
    %4982 = vmatprep.subr.mxu0 0.0
    %4983 = vmatpush1.msra.mxu0 0.0
    %4984 = vmatprep.subr.mxu0 0.0
    %4985 = vmatpush1.msra.mxu0 0.0
    %4986 = vmatprep.subr.mxu0 0.0
    %4987 = vmatpush1.msra.mxu0 0.0
    %4988 = vmatprep.subr.mxu0 0.0
    %4989 = vmatpush1.msra.mxu0 %v3738
    %4990 = vmatprep.subr.mxu0 0.0
    %4991 = vmatpush1.msra.mxu0 %v3736
    %4992 = vmatprep.subr.mxu0 0.0
    %4993 = vmatpush2.msra.mxu0 0.0
    %4994 = vmatprep.subr.mxu0 0.0
    %4995 = vmatpush2.msra.mxu0 0.0
    %4996 = vmatprep.subr.mxu0 0.0
    %4997 = vmatpush2.msra.mxu0 0.0
    %4998 = vmatprep.subr.mxu0 0.0
    %4999 = vmatpush2.msra.mxu0 0.0
    %5000 = vmatprep.subr.mxu0 0.0
    %5001 = vmatpush2.msra.mxu0 0.0
    %5002 = vmatprep.subr.mxu0 0.0
    %5003 = vmatpush2.msra.mxu0 0.0
    %5004 = vmatprep.subr.mxu0 0.0
    %5005 = vmatpush2.msra.mxu0 0.0
    %5006 = vmatprep.subr.mxu0 0.0
    %5007 = vmatpush2.msra.mxu0 0.0
    %5008 = vmatprep.subr.mxu0 0.0
    %5009 = vmatpush2.msra.mxu0 0.0
    %5010 = vmatprep.subr.mxu0 0.0
    %5011 = vmatpush2.msra.mxu0 0.0
    %5012 = vmatprep.subr.mxu0 0.0
    %5013 = vmatpush2.msra.mxu0 0.0
    %5014 = vmatprep.subr.mxu0 0.0
    %5015 = vmatpush2.msra.mxu0 0.0
    %5016 = vmatprep.subr.mxu0 0.0
    %5017 = vmatpush2.msra.mxu0 0.0
    %5018 = vmatprep.subr.mxu0 0.0
    %5019 = vmatpush2.msra.mxu0 0.0
    %5020 = vmatprep.subr.mxu0 0.0
    %5021 = vmatpush2.msra.mxu0 0.0
    %5022 = vmatprep.subr.mxu0 0.0
    %5023 = vmatpush2.msra.mxu0 0.0
    %5024 = vmatprep.mubr.f32.mxu0 0.0
    %5025 = vmatmul.mubr.f32.gmra.mxu0 %v4958
    %v5026 = vpop.f32.mrf.mxu0
    %v5027 = vadd.f32 0.0, %v5026
    %v5028 = vpop.f32.mrf.mxu0
    %5029 = vdwg.mxu0
    %v5031 = vsel %vm101, %v4516, 0
    %5033 = vmatprep.subr.mxu0 0.0
    %5034 = vmatpush1.msra.mxu0 0.0
    %5035 = vmatprep.subr.mxu0 0.0
    %5036 = vmatpush1.msra.mxu0 0.0
    %5037 = vmatprep.subr.mxu0 0.0
    %5038 = vmatpush1.msra.mxu0 0.0
    %5039 = vmatprep.subr.mxu0 0.0
    %5040 = vmatpush1.msra.mxu0 0.0
    %5041 = vmatprep.subr.mxu0 0.0
    %5042 = vmatpush1.msra.mxu0 0.0
    %5043 = vmatprep.subr.mxu0 0.0
    %5044 = vmatpush1.msra.mxu0 0.0
    %5045 = vmatprep.subr.mxu0 0.0
    %5046 = vmatpush1.msra.mxu0 0.0
    %5047 = vmatprep.subr.mxu0 0.0
    %5048 = vmatpush1.msra.mxu0 0.0
    %5049 = vmatprep.subr.mxu0 0.0
    %5050 = vmatpush1.msra.mxu0 0.0
    %5051 = vmatprep.subr.mxu0 0.0
    %5052 = vmatpush1.msra.mxu0 0.0
    %5053 = vmatprep.subr.mxu0 0.0
    %5054 = vmatpush1.msra.mxu0 0.0
    %5055 = vmatprep.subr.mxu0 0.0
    %5056 = vmatpush1.msra.mxu0 0.0
    %5057 = vmatprep.subr.mxu0 0.0
    %5058 = vmatpush1.msra.mxu0 0.0
    %5059 = vmatprep.subr.mxu0 0.0
    %5060 = vmatpush1.msra.mxu0 0.0
    %5061 = vmatprep.subr.mxu0 0.0
    %5062 = vmatpush1.msra.mxu0 %v3851
    %5063 = vmatprep.subr.mxu0 0.0
    %5064 = vmatpush1.msra.mxu0 %v3849
    %5065 = vmatprep.subr.mxu0 0.0
    %5066 = vmatpush2.msra.mxu0 0.0
    %5067 = vmatprep.subr.mxu0 0.0
    %5068 = vmatpush2.msra.mxu0 0.0
    %5069 = vmatprep.subr.mxu0 0.0
    %5070 = vmatpush2.msra.mxu0 0.0
    %5071 = vmatprep.subr.mxu0 0.0
    %5072 = vmatpush2.msra.mxu0 0.0
    %5073 = vmatprep.subr.mxu0 0.0
    %5074 = vmatpush2.msra.mxu0 0.0
    %5075 = vmatprep.subr.mxu0 0.0
    %5076 = vmatpush2.msra.mxu0 0.0
    %5077 = vmatprep.subr.mxu0 0.0
    %5078 = vmatpush2.msra.mxu0 0.0
    %5079 = vmatprep.subr.mxu0 0.0
    %5080 = vmatpush2.msra.mxu0 0.0
    %5081 = vmatprep.subr.mxu0 0.0
    %5082 = vmatpush2.msra.mxu0 0.0
    %5083 = vmatprep.subr.mxu0 0.0
    %5084 = vmatpush2.msra.mxu0 0.0
    %5085 = vmatprep.subr.mxu0 0.0
    %5086 = vmatpush2.msra.mxu0 0.0
    %5087 = vmatprep.subr.mxu0 0.0
    %5088 = vmatpush2.msra.mxu0 0.0
    %5089 = vmatprep.subr.mxu0 0.0
    %5090 = vmatpush2.msra.mxu0 0.0
    %5091 = vmatprep.subr.mxu0 0.0
    %5092 = vmatpush2.msra.mxu0 0.0
    %5093 = vmatprep.subr.mxu0 0.0
    %5094 = vmatpush2.msra.mxu0 0.0
    %5095 = vmatprep.subr.mxu0 0.0
    %5096 = vmatpush2.msra.mxu0 0.0
    %5097 = vmatprep.mubr.f32.mxu0 0.0
    %5098 = vmatmul.mubr.f32.gmra.mxu0 %v5031
    %v5099 = vpop.f32.mrf.mxu0
    %v5100 = vadd.f32 0.0, %v5099
    %v5101 = vpop.f32.mrf.mxu0
    %5102 = vdwg.mxu0
    %5103 = vmatprep.subr.mxu0 0.0
    %5104 = vmatpush1.msra.mxu0 0.0
    %5105 = vmatprep.subr.mxu0 0.0
    %5106 = vmatpush1.msra.mxu0 0.0
    %5107 = vmatprep.subr.mxu0 0.0
    %5108 = vmatpush1.msra.mxu0 0.0
    %5109 = vmatprep.subr.mxu0 0.0
    %5110 = vmatpush1.msra.mxu0 0.0
    %5111 = vmatprep.subr.mxu0 0.0
    %5112 = vmatpush1.msra.mxu0 0.0
    %5113 = vmatprep.subr.mxu0 0.0
    %5114 = vmatpush1.msra.mxu0 0.0
    %5115 = vmatprep.subr.mxu0 0.0
    %5116 = vmatpush1.msra.mxu0 0.0
    %5117 = vmatprep.subr.mxu0 0.0
    %5118 = vmatpush1.msra.mxu0 0.0
    %5119 = vmatprep.subr.mxu0 0.0
    %5120 = vmatpush1.msra.mxu0 0.0
    %5121 = vmatprep.subr.mxu0 0.0
    %5122 = vmatpush1.msra.mxu0 0.0
    %5123 = vmatprep.subr.mxu0 0.0
    %5124 = vmatpush1.msra.mxu0 0.0
    %5125 = vmatprep.subr.mxu0 0.0
    %5126 = vmatpush1.msra.mxu0 0.0
    %5127 = vmatprep.subr.mxu0 0.0
    %5128 = vmatpush1.msra.mxu0 0.0
    %5129 = vmatprep.subr.mxu0 0.0
    %5130 = vmatpush1.msra.mxu0 0.0
    %5131 = vmatprep.subr.mxu0 0.0
    %5132 = vmatpush1.msra.mxu0 %v3060
    %5133 = vmatprep.subr.mxu0 0.0
    %5134 = vmatpush1.msra.mxu0 %v3058
    %5135 = vmatprep.subr.mxu0 0.0
    %5136 = vmatpush2.msra.mxu0 0.0
    %5137 = vmatprep.subr.mxu0 0.0
    %5138 = vmatpush2.msra.mxu0 0.0
    %5139 = vmatprep.subr.mxu0 0.0
    %5140 = vmatpush2.msra.mxu0 0.0
    %5141 = vmatprep.subr.mxu0 0.0
    %5142 = vmatpush2.msra.mxu0 0.0
    %5143 = vmatprep.subr.mxu0 0.0
    %5144 = vmatpush2.msra.mxu0 0.0
    %5145 = vmatprep.subr.mxu0 0.0
    %5146 = vmatpush2.msra.mxu0 0.0
    %5147 = vmatprep.subr.mxu0 0.0
    %5148 = vmatpush2.msra.mxu0 0.0
    %5149 = vmatprep.subr.mxu0 0.0
    %5150 = vmatpush2.msra.mxu0 0.0
    %5151 = vmatprep.subr.mxu0 0.0
    %5152 = vmatpush2.msra.mxu0 0.0
    %5153 = vmatprep.subr.mxu0 0.0
    %5154 = vmatpush2.msra.mxu0 0.0
    %5155 = vmatprep.subr.mxu0 0.0
    %5156 = vmatpush2.msra.mxu0 0.0
    %5157 = vmatprep.subr.mxu0 0.0
    %5158 = vmatpush2.msra.mxu0 0.0
    %5159 = vmatprep.subr.mxu0 0.0
    %5160 = vmatpush2.msra.mxu0 0.0
    %5161 = vmatprep.subr.mxu0 0.0
    %5162 = vmatpush2.msra.mxu0 0.0
    %5163 = vmatprep.subr.mxu0 0.0
    %5164 = vmatpush2.msra.mxu0 0.0
    %5165 = vmatprep.subr.mxu0 0.0
    %5166 = vmatpush2.msra.mxu0 0.0
    %5167 = vmatprep.mubr.f32.mxu0 0.0
    %5168 = vmatmul.mubr.f32.gmra.mxu0 %v3096
    %v5169 = vpop.f32.mrf.mxu0
    %v5170 = vadd.f32 0.0, %v5169
    %v5171 = vpop.f32.mrf.mxu0
    %5172 = vdwg.mxu0
    %5173 = vmatprep.subr.mxu0 0.0
    %5174 = vmatpush1.msra.mxu0 0.0
    %5175 = vmatprep.subr.mxu0 0.0
    %5176 = vmatpush1.msra.mxu0 0.0
    %5177 = vmatprep.subr.mxu0 0.0
    %5178 = vmatpush1.msra.mxu0 0.0
    %5179 = vmatprep.subr.mxu0 0.0
    %5180 = vmatpush1.msra.mxu0 0.0
    %5181 = vmatprep.subr.mxu0 0.0
    %5182 = vmatpush1.msra.mxu0 0.0
    %5183 = vmatprep.subr.mxu0 0.0
    %5184 = vmatpush1.msra.mxu0 0.0
    %5185 = vmatprep.subr.mxu0 0.0
    %5186 = vmatpush1.msra.mxu0 0.0
    %5187 = vmatprep.subr.mxu0 0.0
    %5188 = vmatpush1.msra.mxu0 0.0
    %5189 = vmatprep.subr.mxu0 0.0
    %5190 = vmatpush1.msra.mxu0 0.0
    %5191 = vmatprep.subr.mxu0 0.0
    %5192 = vmatpush1.msra.mxu0 0.0
    %5193 = vmatprep.subr.mxu0 0.0
    %5194 = vmatpush1.msra.mxu0 0.0
    %5195 = vmatprep.subr.mxu0 0.0
    %5196 = vmatpush1.msra.mxu0 0.0
    %5197 = vmatprep.subr.mxu0 0.0
    %5198 = vmatpush1.msra.mxu0 0.0
    %5199 = vmatprep.subr.mxu0 0.0
    %5200 = vmatpush1.msra.mxu0 0.0
    %5201 = vmatprep.subr.mxu0 0.0
    %5202 = vmatpush1.msra.mxu0 %v3173
    %5203 = vmatprep.subr.mxu0 0.0
    %5204 = vmatpush1.msra.mxu0 %v3171
    %5205 = vmatprep.subr.mxu0 0.0
    %5206 = vmatpush2.msra.mxu0 0.0
    %5207 = vmatprep.subr.mxu0 0.0
    %5208 = vmatpush2.msra.mxu0 0.0
    %5209 = vmatprep.subr.mxu0 0.0
    %5210 = vmatpush2.msra.mxu0 0.0
    %5211 = vmatprep.subr.mxu0 0.0
    %5212 = vmatpush2.msra.mxu0 0.0
    %5213 = vmatprep.subr.mxu0 0.0
    %5214 = vmatpush2.msra.mxu0 0.0
    %5215 = vmatprep.subr.mxu0 0.0
    %5216 = vmatpush2.msra.mxu0 0.0
    %5217 = vmatprep.subr.mxu0 0.0
    %5218 = vmatpush2.msra.mxu0 0.0
    %5219 = vmatprep.subr.mxu0 0.0
    %5220 = vmatpush2.msra.mxu0 0.0
    %5221 = vmatprep.subr.mxu0 0.0
    %5222 = vmatpush2.msra.mxu0 0.0
    %5223 = vmatprep.subr.mxu0 0.0
    %5224 = vmatpush2.msra.mxu0 0.0
    %5225 = vmatprep.subr.mxu0 0.0
    %5226 = vmatpush2.msra.mxu0 0.0
    %5227 = vmatprep.subr.mxu0 0.0
    %5228 = vmatpush2.msra.mxu0 0.0
    %5229 = vmatprep.subr.mxu0 0.0
    %5230 = vmatpush2.msra.mxu0 0.0
    %5231 = vmatprep.subr.mxu0 0.0
    %5232 = vmatpush2.msra.mxu0 0.0
    %5233 = vmatprep.subr.mxu0 0.0
    %5234 = vmatpush2.msra.mxu0 0.0
    %5235 = vmatprep.subr.mxu0 0.0
    %5236 = vmatpush2.msra.mxu0 0.0
    %5237 = vmatprep.mubr.f32.mxu0 0.0
    %5238 = vmatmul.mubr.f32.gmra.mxu0 %v3209
    %v5239 = vpop.f32.mrf.mxu0
    %v5240 = vadd.f32 0.0, %v5239
    %v5241 = vpop.f32.mrf.mxu0
    %5242 = vdwg.mxu0
    %5243 = vmatprep.subr.mxu0 0.0
    %5244 = vmatpush1.msra.mxu0 0.0
    %5245 = vmatprep.subr.mxu0 0.0
    %5246 = vmatpush1.msra.mxu0 0.0
    %5247 = vmatprep.subr.mxu0 0.0
    %5248 = vmatpush1.msra.mxu0 0.0
    %5249 = vmatprep.subr.mxu0 0.0
    %5250 = vmatpush1.msra.mxu0 0.0
    %5251 = vmatprep.subr.mxu0 0.0
    %5252 = vmatpush1.msra.mxu0 0.0
    %5253 = vmatprep.subr.mxu0 0.0
    %5254 = vmatpush1.msra.mxu0 0.0
    %5255 = vmatprep.subr.mxu0 0.0
    %5256 = vmatpush1.msra.mxu0 0.0
    %5257 = vmatprep.subr.mxu0 0.0
    %5258 = vmatpush1.msra.mxu0 0.0
    %5259 = vmatprep.subr.mxu0 0.0
    %5260 = vmatpush1.msra.mxu0 0.0
    %5261 = vmatprep.subr.mxu0 0.0
    %5262 = vmatpush1.msra.mxu0 0.0
    %5263 = vmatprep.subr.mxu0 0.0
    %5264 = vmatpush1.msra.mxu0 0.0
    %5265 = vmatprep.subr.mxu0 0.0
    %5266 = vmatpush1.msra.mxu0 0.0
    %5267 = vmatprep.subr.mxu0 0.0
    %5268 = vmatpush1.msra.mxu0 0.0
    %5269 = vmatprep.subr.mxu0 0.0
    %5270 = vmatpush1.msra.mxu0 0.0
    %5271 = vmatprep.subr.mxu0 0.0
    %5272 = vmatpush1.msra.mxu0 %v3286
    %5273 = vmatprep.subr.mxu0 0.0
    %5274 = vmatpush1.msra.mxu0 %v3284
    %5275 = vmatprep.subr.mxu0 0.0
    %5276 = vmatpush2.msra.mxu0 0.0
    %5277 = vmatprep.subr.mxu0 0.0
    %5278 = vmatpush2.msra.mxu0 0.0
    %5279 = vmatprep.subr.mxu0 0.0
    %5280 = vmatpush2.msra.mxu0 0.0
    %5281 = vmatprep.subr.mxu0 0.0
    %5282 = vmatpush2.msra.mxu0 0.0
    %5283 = vmatprep.subr.mxu0 0.0
    %5284 = vmatpush2.msra.mxu0 0.0
    %5285 = vmatprep.subr.mxu0 0.0
    %5286 = vmatpush2.msra.mxu0 0.0
    %5287 = vmatprep.subr.mxu0 0.0
    %5288 = vmatpush2.msra.mxu0 0.0
    %5289 = vmatprep.subr.mxu0 0.0
    %5290 = vmatpush2.msra.mxu0 0.0
    %5291 = vmatprep.subr.mxu0 0.0
    %5292 = vmatpush2.msra.mxu0 0.0
    %5293 = vmatprep.subr.mxu0 0.0
    %5294 = vmatpush2.msra.mxu0 0.0
    %5295 = vmatprep.subr.mxu0 0.0
    %5296 = vmatpush2.msra.mxu0 0.0
    %5297 = vmatprep.subr.mxu0 0.0
    %5298 = vmatpush2.msra.mxu0 0.0
    %5299 = vmatprep.subr.mxu0 0.0
    %5300 = vmatpush2.msra.mxu0 0.0
    %5301 = vmatprep.subr.mxu0 0.0
    %5302 = vmatpush2.msra.mxu0 0.0
    %5303 = vmatprep.subr.mxu0 0.0
    %5304 = vmatpush2.msra.mxu0 0.0
    %5305 = vmatprep.subr.mxu0 0.0
    %5306 = vmatpush2.msra.mxu0 0.0
    %5307 = vmatprep.mubr.f32.mxu0 0.0
    %5308 = vmatmul.mubr.f32.gmra.mxu0 %v3322
    %v5309 = vpop.f32.mrf.mxu0
    %v5310 = vadd.f32 0.0, %v5309
    %v5311 = vpop.f32.mrf.mxu0
    %5312 = vdwg.mxu0
    %5313 = vmatprep.subr.mxu0 0.0
    %5314 = vmatpush1.msra.mxu0 0.0
    %5315 = vmatprep.subr.mxu0 0.0
    %5316 = vmatpush1.msra.mxu0 0.0
    %5317 = vmatprep.subr.mxu0 0.0
    %5318 = vmatpush1.msra.mxu0 0.0
    %5319 = vmatprep.subr.mxu0 0.0
    %5320 = vmatpush1.msra.mxu0 0.0
    %5321 = vmatprep.subr.mxu0 0.0
    %5322 = vmatpush1.msra.mxu0 0.0
    %5323 = vmatprep.subr.mxu0 0.0
    %5324 = vmatpush1.msra.mxu0 0.0
    %5325 = vmatprep.subr.mxu0 0.0
    %5326 = vmatpush1.msra.mxu0 0.0
    %5327 = vmatprep.subr.mxu0 0.0
    %5328 = vmatpush1.msra.mxu0 0.0
    %5329 = vmatprep.subr.mxu0 0.0
    %5330 = vmatpush1.msra.mxu0 0.0
    %5331 = vmatprep.subr.mxu0 0.0
    %5332 = vmatpush1.msra.mxu0 0.0
    %5333 = vmatprep.subr.mxu0 0.0
    %5334 = vmatpush1.msra.mxu0 0.0
    %5335 = vmatprep.subr.mxu0 0.0
    %5336 = vmatpush1.msra.mxu0 0.0
    %5337 = vmatprep.subr.mxu0 0.0
    %5338 = vmatpush1.msra.mxu0 0.0
    %5339 = vmatprep.subr.mxu0 0.0
    %5340 = vmatpush1.msra.mxu0 0.0
    %5341 = vmatprep.subr.mxu0 0.0
    %5342 = vmatpush1.msra.mxu0 %v3399
    %5343 = vmatprep.subr.mxu0 0.0
    %5344 = vmatpush1.msra.mxu0 %v3397
    %5345 = vmatprep.subr.mxu0 0.0
    %5346 = vmatpush2.msra.mxu0 0.0
    %5347 = vmatprep.subr.mxu0 0.0
    %5348 = vmatpush2.msra.mxu0 0.0
    %5349 = vmatprep.subr.mxu0 0.0
    %5350 = vmatpush2.msra.mxu0 0.0
    %5351 = vmatprep.subr.mxu0 0.0
    %5352 = vmatpush2.msra.mxu0 0.0
    %5353 = vmatprep.subr.mxu0 0.0
    %5354 = vmatpush2.msra.mxu0 0.0
    %5355 = vmatprep.subr.mxu0 0.0
    %5356 = vmatpush2.msra.mxu0 0.0
    %5357 = vmatprep.subr.mxu0 0.0
    %5358 = vmatpush2.msra.mxu0 0.0
    %5359 = vmatprep.subr.mxu0 0.0
    %5360 = vmatpush2.msra.mxu0 0.0
    %5361 = vmatprep.subr.mxu0 0.0
    %5362 = vmatpush2.msra.mxu0 0.0
    %5363 = vmatprep.subr.mxu0 0.0
    %5364 = vmatpush2.msra.mxu0 0.0
    %5365 = vmatprep.subr.mxu0 0.0
    %5366 = vmatpush2.msra.mxu0 0.0
    %5367 = vmatprep.subr.mxu0 0.0
    %5368 = vmatpush2.msra.mxu0 0.0
    %5369 = vmatprep.subr.mxu0 0.0
    %5370 = vmatpush2.msra.mxu0 0.0
    %5371 = vmatprep.subr.mxu0 0.0
    %5372 = vmatpush2.msra.mxu0 0.0
    %5373 = vmatprep.subr.mxu0 0.0
    %5374 = vmatpush2.msra.mxu0 0.0
    %5375 = vmatprep.subr.mxu0 0.0
    %5376 = vmatpush2.msra.mxu0 0.0
    %5377 = vmatprep.mubr.f32.mxu0 0.0
    %5378 = vmatmul.mubr.f32.gmra.mxu0 %v3435
    %v5379 = vpop.f32.mrf.mxu0
    %v5380 = vadd.f32 0.0, %v5379
    %v5381 = vpop.f32.mrf.mxu0
    %5382 = vdwg.mxu0
    %5383 = vmatprep.subr.mxu0 0.0
    %5384 = vmatpush1.msra.mxu0 0.0
    %5385 = vmatprep.subr.mxu0 0.0
    %5386 = vmatpush1.msra.mxu0 0.0
    %5387 = vmatprep.subr.mxu0 0.0
    %5388 = vmatpush1.msra.mxu0 0.0
    %5389 = vmatprep.subr.mxu0 0.0
    %5390 = vmatpush1.msra.mxu0 0.0
    %5391 = vmatprep.subr.mxu0 0.0
    %5392 = vmatpush1.msra.mxu0 0.0
    %5393 = vmatprep.subr.mxu0 0.0
    %5394 = vmatpush1.msra.mxu0 0.0
    %5395 = vmatprep.subr.mxu0 0.0
    %5396 = vmatpush1.msra.mxu0 0.0
    %5397 = vmatprep.subr.mxu0 0.0
    %5398 = vmatpush1.msra.mxu0 0.0
    %5399 = vmatprep.subr.mxu0 0.0
    %5400 = vmatpush1.msra.mxu0 0.0
    %5401 = vmatprep.subr.mxu0 0.0
    %5402 = vmatpush1.msra.mxu0 0.0
    %5403 = vmatprep.subr.mxu0 0.0
    %5404 = vmatpush1.msra.mxu0 0.0
    %5405 = vmatprep.subr.mxu0 0.0
    %5406 = vmatpush1.msra.mxu0 0.0
    %5407 = vmatprep.subr.mxu0 0.0
    %5408 = vmatpush1.msra.mxu0 0.0
    %5409 = vmatprep.subr.mxu0 0.0
    %5410 = vmatpush1.msra.mxu0 0.0
    %5411 = vmatprep.subr.mxu0 0.0
    %5412 = vmatpush1.msra.mxu0 %v3512
    %5413 = vmatprep.subr.mxu0 0.0
    %5414 = vmatpush1.msra.mxu0 %v3510
    %5415 = vmatprep.subr.mxu0 0.0
    %5416 = vmatpush2.msra.mxu0 0.0
    %5417 = vmatprep.subr.mxu0 0.0
    %5418 = vmatpush2.msra.mxu0 0.0
    %5419 = vmatprep.subr.mxu0 0.0
    %5420 = vmatpush2.msra.mxu0 0.0
    %5421 = vmatprep.subr.mxu0 0.0
    %5422 = vmatpush2.msra.mxu0 0.0
    %5423 = vmatprep.subr.mxu0 0.0
    %5424 = vmatpush2.msra.mxu0 0.0
    %5425 = vmatprep.subr.mxu0 0.0
    %5426 = vmatpush2.msra.mxu0 0.0
    %5427 = vmatprep.subr.mxu0 0.0
    %5428 = vmatpush2.msra.mxu0 0.0
    %5429 = vmatprep.subr.mxu0 0.0
    %5430 = vmatpush2.msra.mxu0 0.0
    %5431 = vmatprep.subr.mxu0 0.0
    %5432 = vmatpush2.msra.mxu0 0.0
    %5433 = vmatprep.subr.mxu0 0.0
    %5434 = vmatpush2.msra.mxu0 0.0
    %5435 = vmatprep.subr.mxu0 0.0
    %5436 = vmatpush2.msra.mxu0 0.0
    %5437 = vmatprep.subr.mxu0 0.0
    %5438 = vmatpush2.msra.mxu0 0.0
    %5439 = vmatprep.subr.mxu0 0.0
    %5440 = vmatpush2.msra.mxu0 0.0
    %5441 = vmatprep.subr.mxu0 0.0
    %5442 = vmatpush2.msra.mxu0 0.0
    %5443 = vmatprep.subr.mxu0 0.0
    %5444 = vmatpush2.msra.mxu0 0.0
    %5445 = vmatprep.subr.mxu0 0.0
    %5446 = vmatpush2.msra.mxu0 0.0
    %5447 = vmatprep.mubr.f32.mxu0 0.0
    %5448 = vmatmul.mubr.f32.gmra.mxu0 %v3548
    %v5449 = vpop.f32.mrf.mxu0
    %v5450 = vadd.f32 0.0, %v5449
    %v5451 = vpop.f32.mrf.mxu0
    %5452 = vdwg.mxu0
    %5453 = vmatprep.subr.mxu0 0.0
    %5454 = vmatpush1.msra.mxu0 0.0
    %5455 = vmatprep.subr.mxu0 0.0
    %5456 = vmatpush1.msra.mxu0 0.0
    %5457 = vmatprep.subr.mxu0 0.0
    %5458 = vmatpush1.msra.mxu0 0.0
    %5459 = vmatprep.subr.mxu0 0.0
    %5460 = vmatpush1.msra.mxu0 0.0
    %5461 = vmatprep.subr.mxu0 0.0
    %5462 = vmatpush1.msra.mxu0 0.0
    %5463 = vmatprep.subr.mxu0 0.0
    %5464 = vmatpush1.msra.mxu0 0.0
    %5465 = vmatprep.subr.mxu0 0.0
    %5466 = vmatpush1.msra.mxu0 0.0
    %5467 = vmatprep.subr.mxu0 0.0
    %5468 = vmatpush1.msra.mxu0 0.0
    %5469 = vmatprep.subr.mxu0 0.0
    %5470 = vmatpush1.msra.mxu0 0.0
    %5471 = vmatprep.subr.mxu0 0.0
    %5472 = vmatpush1.msra.mxu0 0.0
    %5473 = vmatprep.subr.mxu0 0.0
    %5474 = vmatpush1.msra.mxu0 0.0
    %5475 = vmatprep.subr.mxu0 0.0
    %5476 = vmatpush1.msra.mxu0 0.0
    %5477 = vmatprep.subr.mxu0 0.0
    %5478 = vmatpush1.msra.mxu0 0.0
    %5479 = vmatprep.subr.mxu0 0.0
    %5480 = vmatpush1.msra.mxu0 0.0
    %5481 = vmatprep.subr.mxu0 0.0
    %5482 = vmatpush1.msra.mxu0 %v3625
    %5483 = vmatprep.subr.mxu0 0.0
    %5484 = vmatpush1.msra.mxu0 %v3623
    %5485 = vmatprep.subr.mxu0 0.0
    %5486 = vmatpush2.msra.mxu0 0.0
    %5487 = vmatprep.subr.mxu0 0.0
    %5488 = vmatpush2.msra.mxu0 0.0
    %5489 = vmatprep.subr.mxu0 0.0
    %5490 = vmatpush2.msra.mxu0 0.0
    %5491 = vmatprep.subr.mxu0 0.0
    %5492 = vmatpush2.msra.mxu0 0.0
    %5493 = vmatprep.subr.mxu0 0.0
    %5494 = vmatpush2.msra.mxu0 0.0
    %5495 = vmatprep.subr.mxu0 0.0
    %5496 = vmatpush2.msra.mxu0 0.0
    %5497 = vmatprep.subr.mxu0 0.0
    %5498 = vmatpush2.msra.mxu0 0.0
    %5499 = vmatprep.subr.mxu0 0.0
    %5500 = vmatpush2.msra.mxu0 0.0
    %5501 = vmatprep.subr.mxu0 0.0
    %5502 = vmatpush2.msra.mxu0 0.0
    %5503 = vmatprep.subr.mxu0 0.0
    %5504 = vmatpush2.msra.mxu0 0.0
    %5505 = vmatprep.subr.mxu0 0.0
    %5506 = vmatpush2.msra.mxu0 0.0
    %5507 = vmatprep.subr.mxu0 0.0
    %5508 = vmatpush2.msra.mxu0 0.0
    %5509 = vmatprep.subr.mxu0 0.0
    %5510 = vmatpush2.msra.mxu0 0.0
    %5511 = vmatprep.subr.mxu0 0.0
    %5512 = vmatpush2.msra.mxu0 0.0
    %5513 = vmatprep.subr.mxu0 0.0
    %5514 = vmatpush2.msra.mxu0 0.0
    %5515 = vmatprep.subr.mxu0 0.0
    %5516 = vmatpush2.msra.mxu0 0.0
    %5517 = vmatprep.mubr.f32.mxu0 0.0
    %5518 = vmatmul.mubr.f32.gmra.mxu0 %v3661
    %v5519 = vpop.f32.mrf.mxu0
    %v5520 = vadd.f32 0.0, %v5519
    %v5521 = vpop.f32.mrf.mxu0
    %5522 = vdwg.mxu0
    %5523 = vmatprep.subr.mxu0 0.0
    %5524 = vmatpush1.msra.mxu0 0.0
    %5525 = vmatprep.subr.mxu0 0.0
    %5526 = vmatpush1.msra.mxu0 0.0
    %5527 = vmatprep.subr.mxu0 0.0
    %5528 = vmatpush1.msra.mxu0 0.0
    %5529 = vmatprep.subr.mxu0 0.0
    %5530 = vmatpush1.msra.mxu0 0.0
    %5531 = vmatprep.subr.mxu0 0.0
    %5532 = vmatpush1.msra.mxu0 0.0
    %5533 = vmatprep.subr.mxu0 0.0
    %5534 = vmatpush1.msra.mxu0 0.0
    %5535 = vmatprep.subr.mxu0 0.0
    %5536 = vmatpush1.msra.mxu0 0.0
    %5537 = vmatprep.subr.mxu0 0.0
    %5538 = vmatpush1.msra.mxu0 0.0
    %5539 = vmatprep.subr.mxu0 0.0
    %5540 = vmatpush1.msra.mxu0 0.0
    %5541 = vmatprep.subr.mxu0 0.0
    %5542 = vmatpush1.msra.mxu0 0.0
    %5543 = vmatprep.subr.mxu0 0.0
    %5544 = vmatpush1.msra.mxu0 0.0
    %5545 = vmatprep.subr.mxu0 0.0
    %5546 = vmatpush1.msra.mxu0 0.0
    %5547 = vmatprep.subr.mxu0 0.0
    %5548 = vmatpush1.msra.mxu0 0.0
    %5549 = vmatprep.subr.mxu0 0.0
    %5550 = vmatpush1.msra.mxu0 0.0
    %5551 = vmatprep.subr.mxu0 0.0
    %5552 = vmatpush1.msra.mxu0 %v3738
    %5553 = vmatprep.subr.mxu0 0.0
    %5554 = vmatpush1.msra.mxu0 %v3736
    %5555 = vmatprep.subr.mxu0 0.0
    %5556 = vmatpush2.msra.mxu0 0.0
    %5557 = vmatprep.subr.mxu0 0.0
    %5558 = vmatpush2.msra.mxu0 0.0
    %5559 = vmatprep.subr.mxu0 0.0
    %5560 = vmatpush2.msra.mxu0 0.0
    %5561 = vmatprep.subr.mxu0 0.0
    %5562 = vmatpush2.msra.mxu0 0.0
    %5563 = vmatprep.subr.mxu0 0.0
    %5564 = vmatpush2.msra.mxu0 0.0
    %5565 = vmatprep.subr.mxu0 0.0
    %5566 = vmatpush2.msra.mxu0 0.0
    %5567 = vmatprep.subr.mxu0 0.0
    %5568 = vmatpush2.msra.mxu0 0.0
    %5569 = vmatprep.subr.mxu0 0.0
    %5570 = vmatpush2.msra.mxu0 0.0
    %5571 = vmatprep.subr.mxu0 0.0
    %5572 = vmatpush2.msra.mxu0 0.0
    %5573 = vmatprep.subr.mxu0 0.0
    %5574 = vmatpush2.msra.mxu0 0.0
    %5575 = vmatprep.subr.mxu0 0.0
    %5576 = vmatpush2.msra.mxu0 0.0
    %5577 = vmatprep.subr.mxu0 0.0
    %5578 = vmatpush2.msra.mxu0 0.0
    %5579 = vmatprep.subr.mxu0 0.0
    %5580 = vmatpush2.msra.mxu0 0.0
    %5581 = vmatprep.subr.mxu0 0.0
    %5582 = vmatpush2.msra.mxu0 0.0
    %5583 = vmatprep.subr.mxu0 0.0
    %5584 = vmatpush2.msra.mxu0 0.0
    %5585 = vmatprep.subr.mxu0 0.0
    %5586 = vmatpush2.msra.mxu0 0.0
    %5587 = vmatprep.mubr.f32.mxu0 0.0
    %5588 = vmatmul.mubr.f32.gmra.mxu0 %v3774
    %v5589 = vpop.f32.mrf.mxu0
    %v5590 = vadd.f32 0.0, %v5589
    %v5591 = vpop.f32.mrf.mxu0
    %5592 = vdwg.mxu0
    %5593 = vmatprep.subr.mxu0 0.0
    %5594 = vmatpush1.msra.mxu0 0.0
    %5595 = vmatprep.subr.mxu0 0.0
    %5596 = vmatpush1.msra.mxu0 0.0
    %5597 = vmatprep.subr.mxu0 0.0
    %5598 = vmatpush1.msra.mxu0 0.0
    %5599 = vmatprep.subr.mxu0 0.0
    %5600 = vmatpush1.msra.mxu0 0.0
    %5601 = vmatprep.subr.mxu0 0.0
    %5602 = vmatpush1.msra.mxu0 0.0
    %5603 = vmatprep.subr.mxu0 0.0
    %5604 = vmatpush1.msra.mxu0 0.0
    %5605 = vmatprep.subr.mxu0 0.0
    %5606 = vmatpush1.msra.mxu0 0.0
    %5607 = vmatprep.subr.mxu0 0.0
    %5608 = vmatpush1.msra.mxu0 0.0
    %5609 = vmatprep.subr.mxu0 0.0
    %5610 = vmatpush1.msra.mxu0 0.0
    %5611 = vmatprep.subr.mxu0 0.0
    %5612 = vmatpush1.msra.mxu0 0.0
    %5613 = vmatprep.subr.mxu0 0.0
    %5614 = vmatpush1.msra.mxu0 0.0
    %5615 = vmatprep.subr.mxu0 0.0
    %5616 = vmatpush1.msra.mxu0 0.0
    %5617 = vmatprep.subr.mxu0 0.0
    %5618 = vmatpush1.msra.mxu0 0.0
    %5619 = vmatprep.subr.mxu0 0.0
    %5620 = vmatpush1.msra.mxu0 0.0
    %5621 = vmatprep.subr.mxu0 0.0
    %5622 = vmatpush1.msra.mxu0 %v3851
    %5623 = vmatprep.subr.mxu0 0.0
    %5624 = vmatpush1.msra.mxu0 %v3849
    %5625 = vmatprep.subr.mxu0 0.0
    %5626 = vmatpush2.msra.mxu0 0.0
    %5627 = vmatprep.subr.mxu0 0.0
    %5628 = vmatpush2.msra.mxu0 0.0
    %5629 = vmatprep.subr.mxu0 0.0
    %5630 = vmatpush2.msra.mxu0 0.0
    %5631 = vmatprep.subr.mxu0 0.0
    %5632 = vmatpush2.msra.mxu0 0.0
    %5633 = vmatprep.subr.mxu0 0.0
    %5634 = vmatpush2.msra.mxu0 0.0
    %5635 = vmatprep.subr.mxu0 0.0
    %5636 = vmatpush2.msra.mxu0 0.0
    %5637 = vmatprep.subr.mxu0 0.0
    %5638 = vmatpush2.msra.mxu0 0.0
    %5639 = vmatprep.subr.mxu0 0.0
    %5640 = vmatpush2.msra.mxu0 0.0
    %5641 = vmatprep.subr.mxu0 0.0
    %5642 = vmatpush2.msra.mxu0 0.0
    %5643 = vmatprep.subr.mxu0 0.0
    %5644 = vmatpush2.msra.mxu0 0.0
    %5645 = vmatprep.subr.mxu0 0.0
    %5646 = vmatpush2.msra.mxu0 0.0
    %5647 = vmatprep.subr.mxu0 0.0
    %5648 = vmatpush2.msra.mxu0 0.0
    %5649 = vmatprep.subr.mxu0 0.0
    %5650 = vmatpush2.msra.mxu0 0.0
    %5651 = vmatprep.subr.mxu0 0.0
    %5652 = vmatpush2.msra.mxu0 0.0
    %5653 = vmatprep.subr.mxu0 0.0
    %5654 = vmatpush2.msra.mxu0 0.0
    %5655 = vmatprep.subr.mxu0 0.0
    %5656 = vmatpush2.msra.mxu0 0.0
    %5657 = vmatprep.mubr.f32.mxu0 0.0
    %5658 = vmatmul.mubr.f32.gmra.mxu0 %v3887
    %v5659 = vpop.f32.mrf.mxu0
    %v5660 = vadd.f32 0.0, %v5659
    %v5661 = vpop.f32.mrf.mxu0
    %5662 = vdwg.mxu0
    %v5663 = vmul.f32 %v37, %v37
    %v5664 = vmul.f32 %v38, %v38
    %v5665 = vmul.f32 %v39, %v39
    %v5666 = vmul.f32 %v40, %v40
    %v5667 = vmul.f32 %v41, %v41
    %v5668 = vmul.f32 %v42, %v42
    %v5669 = vmul.f32 %v43, %v43
    %v5670 = vmul.f32 %v44, %v44
    %v5671 = vmul.f32 %v45, %v45
    %v5672 = vmul.f32 %v46, %v46
    %v5673 = vmul.f32 %v47, %v47
    %v5674 = vmul.f32 %v48, %v48
    %v5675 = vmul.f32 %v49, %v49
    %v5676 = vmul.f32 %v50, %v50
    %v5677 = vmul.f32 %v51, %v51
    %v5678 = vmul.f32 %v52, %v52
    %v5679 = vsel %vm101, %v5663, 0.0
    %5680 = vadd.xlane.f32.xlu0 %v5679
    %v5681 = vpop.xlane.xlu0 %5680
    %v5682 = vsel %vm101, %v5664, 0.0
    %5683 = vadd.xlane.f32.xlu0 %v5682
    %v5684 = vpop.xlane.xlu0 %5683
    %v5685 = vsel %vm101, %v5665, 0.0
    %5686 = vadd.xlane.f32.xlu0 %v5685
    %v5687 = vpop.xlane.xlu0 %5686
    %v5688 = vsel %vm101, %v5666, 0.0
    %5689 = vadd.xlane.f32.xlu0 %v5688
    %v5690 = vpop.xlane.xlu0 %5689
    %v5691 = vsel %vm101, %v5667, 0.0
    %5692 = vadd.xlane.f32.xlu0 %v5691
    %v5693 = vpop.xlane.xlu0 %5692
    %v5694 = vsel %vm101, %v5668, 0.0
    %5695 = vadd.xlane.f32.xlu0 %v5694
    %v5696 = vpop.xlane.xlu0 %5695
    %v5697 = vsel %vm101, %v5669, 0.0
    %5698 = vadd.xlane.f32.xlu0 %v5697
    %v5699 = vpop.xlane.xlu0 %5698
    %v5700 = vsel %vm101, %v5670, 0.0
    %5701 = vadd.xlane.f32.xlu0 %v5700
    %v5702 = vpop.xlane.xlu0 %5701
    %v5703 = vsel %vm101, %v5671, 0.0
    %5704 = vadd.xlane.f32.xlu0 %v5703
    %v5705 = vpop.xlane.xlu0 %5704
    %v5706 = vsel %vm101, %v5672, 0.0
    %5707 = vadd.xlane.f32.xlu0 %v5706
    %v5708 = vpop.xlane.xlu0 %5707
    %v5709 = vsel %vm101, %v5673, 0.0
    %5710 = vadd.xlane.f32.xlu0 %v5709
    %v5711 = vpop.xlane.xlu0 %5710
    %v5712 = vsel %vm101, %v5674, 0.0
    %5713 = vadd.xlane.f32.xlu0 %v5712
    %v5714 = vpop.xlane.xlu0 %5713
    %v5715 = vsel %vm101, %v5675, 0.0
    %5716 = vadd.xlane.f32.xlu0 %v5715
    %v5717 = vpop.xlane.xlu0 %5716
    %v5718 = vsel %vm101, %v5676, 0.0
    %5719 = vadd.xlane.f32.xlu0 %v5718
    %v5720 = vpop.xlane.xlu0 %5719
    %v5721 = vsel %vm101, %v5677, 0.0
    %5722 = vadd.xlane.f32.xlu0 %v5721
    %v5723 = vpop.xlane.xlu0 %5722
    %v5724 = vsel %vm101, %v5678, 0.0
    %5725 = vadd.xlane.f32.xlu0 %v5724
    %v5726 = vpop.xlane.xlu0 %5725
    %v5727 = vadd.f32 %v5681, %v5684
    %v5728 = vrot.slane %v5727, 4
    %v5729 = vadd.f32 %v5727, %v5728
    %v5730 = vrot.slane %v5729, 2
    %v5731 = vadd.f32 %v5729, %v5730
    %v5732 = vrot.slane %v5731, 1
    %v5733 = vadd.f32 %v5731, %v5732
    %v5734 = vadd.f32 %v5687, %v5690
    %v5735 = vrot.slane %v5734, 4
    %v5736 = vadd.f32 %v5734, %v5735
    %v5737 = vrot.slane %v5736, 2
    %v5738 = vadd.f32 %v5736, %v5737
    %v5739 = vrot.slane %v5738, 1
    %v5740 = vadd.f32 %v5738, %v5739
    %v5741 = vadd.f32 %v5693, %v5696
    %v5742 = vrot.slane %v5741, 4
    %v5743 = vadd.f32 %v5741, %v5742
    %v5744 = vrot.slane %v5743, 2
    %v5745 = vadd.f32 %v5743, %v5744
    %v5746 = vrot.slane %v5745, 1
    %v5747 = vadd.f32 %v5745, %v5746
    %v5748 = vadd.f32 %v5699, %v5702
    %v5749 = vrot.slane %v5748, 4
    %v5750 = vadd.f32 %v5748, %v5749
    %v5751 = vrot.slane %v5750, 2
    %v5752 = vadd.f32 %v5750, %v5751
    %v5753 = vrot.slane %v5752, 1
    %v5754 = vadd.f32 %v5752, %v5753
    %v5755 = vadd.f32 %v5705, %v5708
    %v5756 = vrot.slane %v5755, 4
    %v5757 = vadd.f32 %v5755, %v5756
    %v5758 = vrot.slane %v5757, 2
    %v5759 = vadd.f32 %v5757, %v5758
    %v5760 = vrot.slane %v5759, 1
    %v5761 = vadd.f32 %v5759, %v5760
    %v5762 = vadd.f32 %v5711, %v5714
    %v5763 = vrot.slane %v5762, 4
    %v5764 = vadd.f32 %v5762, %v5763
    %v5765 = vrot.slane %v5764, 2
    %v5766 = vadd.f32 %v5764, %v5765
    %v5767 = vrot.slane %v5766, 1
    %v5768 = vadd.f32 %v5766, %v5767
    %v5769 = vadd.f32 %v5717, %v5720
    %v5770 = vrot.slane %v5769, 4
    %v5771 = vadd.f32 %v5769, %v5770
    %v5772 = vrot.slane %v5771, 2
    %v5773 = vadd.f32 %v5771, %v5772
    %v5774 = vrot.slane %v5773, 1
    %v5775 = vadd.f32 %v5773, %v5774
    %v5776 = vadd.f32 %v5723, %v5726
    %v5777 = vrot.slane %v5776, 4
    %v5778 = vadd.f32 %v5776, %v5777
    %v5779 = vrot.slane %v5778, 2
    %v5780 = vadd.f32 %v5778, %v5779
    %v5781 = vrot.slane %v5780, 1
    %v5782 = vadd.f32 %v5780, %v5781
    %v5783 = vlaneseq
    %v5784 = vshrl.u32 %v5783, 7
    %v5785 = vlaneseq
    %v5786 = vand.u32 %v5785, 127
    %vm5787 = vcmp.eq.s32.totalorder %v5784, %v5786
    %v5788 = vsel %vm5787, 1, 0
    %v5789 = vcvt.s32.f32 %v5788
    %v5790 = vmul.f32 %v4589, %v5789
    %v5791 = vmul.f32 %v4662, %v5789
    %v5792 = vmul.f32 %v4735, %v5789
    %v5793 = vmul.f32 %v4808, %v5789
    %v5794 = vmul.f32 %v4881, %v5789
    %v5795 = vmul.f32 %v4954, %v5789
    %v5796 = vmul.f32 %v5027, %v5789
    %v5797 = vmul.f32 %v5100, %v5789
    %vm5798 = vcmask 27648
    %v5799 = vsel %vm5798, %v5790, 0.0
    %5800 = vadd.xlane.f32.xlu0 %v5799
    %v5801 = vpop.xlane.xlu0 %5800
    %v5802 = vsel %vm5798, %v5791, 0.0
    %5803 = vadd.xlane.f32.xlu0 %v5802
    %v5804 = vpop.xlane.xlu0 %5803
    %v5805 = vsel %vm5798, %v5792, 0.0
    %5806 = vadd.xlane.f32.xlu0 %v5805
    %v5807 = vpop.xlane.xlu0 %5806
    %v5808 = vsel %vm5798, %v5793, 0.0
    %5809 = vadd.xlane.f32.xlu0 %v5808
    %v5810 = vpop.xlane.xlu0 %5809
    %v5811 = vsel %vm5798, %v5794, 0.0
    %5812 = vadd.xlane.f32.xlu0 %v5811
    %v5813 = vpop.xlane.xlu0 %5812
    %v5814 = vsel %vm5798, %v5795, 0.0
    %5815 = vadd.xlane.f32.xlu0 %v5814
    %v5816 = vpop.xlane.xlu0 %5815
    %v5817 = vsel %vm5798, %v5796, 0.0
    %5818 = vadd.xlane.f32.xlu0 %v5817
    %v5819 = vpop.xlane.xlu0 %5818
    %v5820 = vsel %vm5798, %v5797, 0.0
    %5821 = vadd.xlane.f32.xlu0 %v5820
    %v5822 = vpop.xlane.xlu0 %5821
    %vm5823 = vcmask 1043456
    %v5824 = vsel %vm5823, %v5801, 0.0
    %v5825 = vrot.slane %v5824, 4
    %v5826 = vadd.f32 %v5824, %v5825
    %v5827 = vrot.slane %v5826, 2
    %v5828 = vadd.f32 %v5826, %v5827
    %v5829 = vrot.slane %v5828, 1
    %v5830 = vadd.f32 %v5828, %v5829
    %v5831 = vsel %vm5823, %v5804, 0.0
    %v5832 = vrot.slane %v5831, 4
    %v5833 = vadd.f32 %v5831, %v5832
    %v5834 = vrot.slane %v5833, 2
    %v5835 = vadd.f32 %v5833, %v5834
    %v5836 = vrot.slane %v5835, 1
    %v5837 = vadd.f32 %v5835, %v5836
    %v5838 = vsel %vm5823, %v5807, 0.0
    %v5839 = vrot.slane %v5838, 4
    %v5840 = vadd.f32 %v5838, %v5839
    %v5841 = vrot.slane %v5840, 2
    %v5842 = vadd.f32 %v5840, %v5841
    %v5843 = vrot.slane %v5842, 1
    %v5844 = vadd.f32 %v5842, %v5843
    %v5845 = vsel %vm5823, %v5810, 0.0
    %v5846 = vrot.slane %v5845, 4
    %v5847 = vadd.f32 %v5845, %v5846
    %v5848 = vrot.slane %v5847, 2
    %v5849 = vadd.f32 %v5847, %v5848
    %v5850 = vrot.slane %v5849, 1
    %v5851 = vadd.f32 %v5849, %v5850
    %v5852 = vsel %vm5823, %v5813, 0.0
    %v5853 = vrot.slane %v5852, 4
    %v5854 = vadd.f32 %v5852, %v5853
    %v5855 = vrot.slane %v5854, 2
    %v5856 = vadd.f32 %v5854, %v5855
    %v5857 = vrot.slane %v5856, 1
    %v5858 = vadd.f32 %v5856, %v5857
    %v5859 = vsel %vm5823, %v5816, 0.0
    %v5860 = vrot.slane %v5859, 4
    %v5861 = vadd.f32 %v5859, %v5860
    %v5862 = vrot.slane %v5861, 2
    %v5863 = vadd.f32 %v5861, %v5862
    %v5864 = vrot.slane %v5863, 1
    %v5865 = vadd.f32 %v5863, %v5864
    %v5866 = vsel %vm5823, %v5819, 0.0
    %v5867 = vrot.slane %v5866, 4
    %v5868 = vadd.f32 %v5866, %v5867
    %v5869 = vrot.slane %v5868, 2
    %v5870 = vadd.f32 %v5868, %v5869
    %v5871 = vrot.slane %v5870, 1
    %v5872 = vadd.f32 %v5870, %v5871
    %v5873 = vsel %vm5823, %v5822, 0.0
    %v5874 = vrot.slane %v5873, 4
    %v5875 = vadd.f32 %v5873, %v5874
    %v5876 = vrot.slane %v5875, 2
    %v5877 = vadd.f32 %v5875, %v5876
    %v5878 = vrot.slane %v5877, 1
    %v5879 = vadd.f32 %v5877, %v5878
    %v5880 = vmul.f32 %v5170, %v5170
    %v5881 = vmul.f32 %v5240, %v5240
    %v5882 = vmul.f32 %v5310, %v5310
    %v5883 = vmul.f32 %v5380, %v5380
    %v5884 = vmul.f32 %v5450, %v5450
    %v5885 = vmul.f32 %v5520, %v5520
    %v5886 = vmul.f32 %v5590, %v5590
    %v5887 = vmul.f32 %v5660, %v5660
    %v5888 = vsel %vm5798, %v5880, 0.0
    %5889 = vadd.xlane.f32.xlu0 %v5888
    %v5890 = vpop.xlane.xlu0 %5889
    %v5891 = vsel %vm5798, %v5881, 0.0
    %5892 = vadd.xlane.f32.xlu0 %v5891
    %v5893 = vpop.xlane.xlu0 %5892
    %v5894 = vsel %vm5798, %v5882, 0.0
    %5895 = vadd.xlane.f32.xlu0 %v5894
    %v5896 = vpop.xlane.xlu0 %5895
    %v5897 = vsel %vm5798, %v5883, 0.0
    %5898 = vadd.xlane.f32.xlu0 %v5897
    %v5899 = vpop.xlane.xlu0 %5898
    %v5900 = vsel %vm5798, %v5884, 0.0
    %5901 = vadd.xlane.f32.xlu0 %v5900
    %v5902 = vpop.xlane.xlu0 %5901
    %v5903 = vsel %vm5798, %v5885, 0.0
    %5904 = vadd.xlane.f32.xlu0 %v5903
    %v5905 = vpop.xlane.xlu0 %5904
    %v5906 = vsel %vm5798, %v5886, 0.0
    %5907 = vadd.xlane.f32.xlu0 %v5906
    %v5908 = vpop.xlane.xlu0 %5907
    %v5909 = vsel %vm5798, %v5887, 0.0
    %5910 = vadd.xlane.f32.xlu0 %v5909
    %v5911 = vpop.xlane.xlu0 %5910
    %v5912 = vsel %vm5823, %v5890, 0.0
    %v5913 = vrot.slane %v5912, 4
    %v5914 = vadd.f32 %v5912, %v5913
    %v5915 = vrot.slane %v5914, 2
    %v5916 = vadd.f32 %v5914, %v5915
    %v5917 = vrot.slane %v5916, 1
    %v5918 = vadd.f32 %v5916, %v5917
    %v5919 = vsel %vm5823, %v5893, 0.0
    %v5920 = vrot.slane %v5919, 4
    %v5921 = vadd.f32 %v5919, %v5920
    %v5922 = vrot.slane %v5921, 2
    %v5923 = vadd.f32 %v5921, %v5922
    %v5924 = vrot.slane %v5923, 1
    %v5925 = vadd.f32 %v5923, %v5924
    %v5926 = vsel %vm5823, %v5896, 0.0
    %v5927 = vrot.slane %v5926, 4
    %v5928 = vadd.f32 %v5926, %v5927
    %v5929 = vrot.slane %v5928, 2
    %v5930 = vadd.f32 %v5928, %v5929
    %v5931 = vrot.slane %v5930, 1
    %v5932 = vadd.f32 %v5930, %v5931
    %v5933 = vsel %vm5823, %v5899, 0.0
    %v5934 = vrot.slane %v5933, 4
    %v5935 = vadd.f32 %v5933, %v5934
    %v5936 = vrot.slane %v5935, 2
    %v5937 = vadd.f32 %v5935, %v5936
    %v5938 = vrot.slane %v5937, 1
    %v5939 = vadd.f32 %v5937, %v5938
    %v5940 = vsel %vm5823, %v5902, 0.0
    %v5941 = vrot.slane %v5940, 4
    %v5942 = vadd.f32 %v5940, %v5941
    %v5943 = vrot.slane %v5942, 2
    %v5944 = vadd.f32 %v5942, %v5943
    %v5945 = vrot.slane %v5944, 1
    %v5946 = vadd.f32 %v5944, %v5945
    %v5947 = vsel %vm5823, %v5905, 0.0
    %v5948 = vrot.slane %v5947, 4
    %v5949 = vadd.f32 %v5947, %v5948
    %v5950 = vrot.slane %v5949, 2
    %v5951 = vadd.f32 %v5949, %v5950
    %v5952 = vrot.slane %v5951, 1
    %v5953 = vadd.f32 %v5951, %v5952
    %v5954 = vsel %vm5823, %v5908, 0.0
    %v5955 = vrot.slane %v5954, 4
    %v5956 = vadd.f32 %v5954, %v5955
    %v5957 = vrot.slane %v5956, 2
    %v5958 = vadd.f32 %v5956, %v5957
    %v5959 = vrot.slane %v5958, 1
    %v5960 = vadd.f32 %v5958, %v5959
    %v5961 = vsel %vm5823, %v5911, 0.0
    %v5962 = vrot.slane %v5961, 4
    %v5963 = vadd.f32 %v5961, %v5962
    %v5964 = vrot.slane %v5963, 2
    %v5965 = vadd.f32 %v5963, %v5964
    %v5966 = vrot.slane %v5965, 1
    %v5967 = vadd.f32 %v5965, %v5966
    %v5968 = vmul.f32 %v5830, 2.0
    %v5969 = vmul.f32 %v5837, 2.0
    %v5970 = vmul.f32 %v5844, 2.0
    %v5971 = vmul.f32 %v5851, 2.0
    %v5972 = vmul.f32 %v5858, 2.0
    %v5973 = vmul.f32 %v5865, 2.0
    %v5974 = vmul.f32 %v5872, 2.0
    %v5975 = vmul.f32 %v5879, 2.0
    %v5976 = vsub.f32 %v5733, %v5968
    %v5977 = vsub.f32 %v5740, %v5969
    %v5978 = vsub.f32 %v5747, %v5970
    %v5979 = vsub.f32 %v5754, %v5971
    %v5980 = vsub.f32 %v5761, %v5972
    %v5981 = vsub.f32 %v5768, %v5973
    %v5982 = vsub.f32 %v5775, %v5974
    %v5983 = vsub.f32 %v5782, %v5975
    %v5984 = vadd.f32 %v5976, %v5918
    %v5985 = vadd.f32 %v5977, %v5925
    %v5986 = vadd.f32 %v5978, %v5932
    %v5987 = vadd.f32 %v5979, %v5939
    %v5988 = vadd.f32 %v5980, %v5946
    %v5989 = vadd.f32 %v5981, %v5953
    %v5990 = vadd.f32 %v5982, %v5960
    %v5991 = vadd.f32 %v5983, %v5967
    %v5992 = vmax.f32 %v5984, 0.0
    %v5993 = vmax.f32 %v5985, 0.0
    %v5994 = vmax.f32 %v5986, 0.0
    %v5995 = vmax.f32 %v5987, 0.0
    %v5996 = vmax.f32 %v5988, 0.0
    %v5997 = vmax.f32 %v5989, 0.0
    %v5998 = vmax.f32 %v5990, 0.0
    %v5999 = vmax.f32 %v5991, 0.0
    %v6000 = vsub.f32 0.0, %v3039
    %v6001 = vsub.f32 0.0, %v3040
    %v6002 = vsub.f32 0.0, %v3041
    %v6003 = vsub.f32 0.0, %v3042
    %v6004 = vsub.f32 0.0, %v3043
    %v6005 = vsub.f32 0.0, %v3044
    %v6006 = vsub.f32 0.0, %v3045
    %v6007 = vsub.f32 0.0, %v3046
    %v6008 = vsub.f32 0.0, %v3047
    %v6009 = vsub.f32 0.0, %v3048
    %v6010 = vsub.f32 0.0, %v3049
    %v6011 = vsub.f32 0.0, %v3050
    %v6012 = vsub.f32 0.0, %v3051
    %v6013 = vsub.f32 0.0, %v3052
    %v6014 = vsub.f32 0.0, %v3053
    %v6015 = vsub.f32 0.0, %v3054
    %v6016 = vadd.f32 %v3039, 1e-15
    %v6017 = vadd.f32 %v3040, 1e-15
    %v6018 = vadd.f32 %v3041, 1e-15
    %v6019 = vadd.f32 %v3042, 1e-15
    %v6020 = vadd.f32 %v3043, 1e-15
    %v6021 = vadd.f32 %v3044, 1e-15
    %v6022 = vadd.f32 %v3045, 1e-15
    %v6023 = vadd.f32 %v3046, 1e-15
    %v6024 = vadd.f32 %v3047, 1e-15
    %v6025 = vadd.f32 %v3048, 1e-15
    %v6026 = vadd.f32 %v3049, 1e-15
    %v6027 = vadd.f32 %v3050, 1e-15
    %v6028 = vadd.f32 %v3051, 1e-15
    %v6029 = vadd.f32 %v3052, 1e-15
    %v6030 = vadd.f32 %v3053, 1e-15
    %v6031 = vadd.f32 %v3054, 1e-15
    %v6032 = vlog2.pop %v6016
    %v6033 = vmul.f32 %v6032, 0.6931472
    %v6034 = vlog2.pop %v6017
    %v6035 = vmul.f32 %v6034, 0.6931472
    %v6036 = vlog2.pop %v6018
    %v6037 = vmul.f32 %v6036, 0.6931472
    %v6038 = vlog2.pop %v6019
    %v6039 = vmul.f32 %v6038, 0.6931472
    %v6040 = vlog2.pop %v6020
    %v6041 = vmul.f32 %v6040, 0.6931472
    %v6042 = vlog2.pop %v6021
    %v6043 = vmul.f32 %v6042, 0.6931472
    %v6044 = vlog2.pop %v6022
    %v6045 = vmul.f32 %v6044, 0.6931472
    %v6046 = vlog2.pop %v6023
    %v6047 = vmul.f32 %v6046, 0.6931472
    %v6048 = vlog2.pop %v6024
    %v6049 = vmul.f32 %v6048, 0.6931472
    %v6050 = vlog2.pop %v6025
    %v6051 = vmul.f32 %v6050, 0.6931472
    %v6052 = vlog2.pop %v6026
    %v6053 = vmul.f32 %v6052, 0.6931472
    %v6054 = vlog2.pop %v6027
    %v6055 = vmul.f32 %v6054, 0.6931472
    %v6056 = vlog2.pop %v6028
    %v6057 = vmul.f32 %v6056, 0.6931472
    %v6058 = vlog2.pop %v6029
    %v6059 = vmul.f32 %v6058, 0.6931472
    %v6060 = vlog2.pop %v6030
    %v6061 = vmul.f32 %v6060, 0.6931472
    %v6062 = vlog2.pop %v6031
    %v6063 = vmul.f32 %v6062, 0.6931472
    %v6064 = vmul.f32 %v6000, %v6033
    %v6065 = vmul.f32 %v6001, %v6035
    %v6066 = vmul.f32 %v6002, %v6037
    %v6067 = vmul.f32 %v6003, %v6039
    %v6068 = vmul.f32 %v6004, %v6041
    %v6069 = vmul.f32 %v6005, %v6043
    %v6070 = vmul.f32 %v6006, %v6045
    %v6071 = vmul.f32 %v6007, %v6047
    %v6072 = vmul.f32 %v6008, %v6049
    %v6073 = vmul.f32 %v6009, %v6051
    %v6074 = vmul.f32 %v6010, %v6053
    %v6075 = vmul.f32 %v6011, %v6055
    %v6076 = vmul.f32 %v6012, %v6057
    %v6077 = vmul.f32 %v6013, %v6059
    %v6078 = vmul.f32 %v6014, %v6061
    %v6079 = vmul.f32 %v6015, %v6063
    %6096 = vrot.lane.b32.xlu0 %v6064, 112
    %v6097 = vpop.permute.xlu0 %6096
    %6098 = vrot.lane.b32.xlu0 %v6065, 112
    %v6099 = vpop.permute.xlu0 %6098
    %6100 = vrot.lane.b32.xlu0 %v6066, 112
    %v6101 = vpop.permute.xlu0 %6100
    %6102 = vrot.lane.b32.xlu0 %v6067, 112
    %v6103 = vpop.permute.xlu0 %6102
    %6104 = vrot.lane.b32.xlu0 %v6068, 112
    %v6105 = vpop.permute.xlu0 %6104
    %6106 = vrot.lane.b32.xlu0 %v6069, 112
    %v6107 = vpop.permute.xlu0 %6106
    %6108 = vrot.lane.b32.xlu0 %v6070, 112
    %v6109 = vpop.permute.xlu0 %6108
    %6110 = vrot.lane.b32.xlu0 %v6071, 112
    %v6111 = vpop.permute.xlu0 %6110
    %6112 = vrot.lane.b32.xlu0 %v6072, 112
    %v6113 = vpop.permute.xlu0 %6112
    %6114 = vrot.lane.b32.xlu0 %v6073, 112
    %v6115 = vpop.permute.xlu0 %6114
    %6116 = vrot.lane.b32.xlu0 %v6074, 112
    %v6117 = vpop.permute.xlu0 %6116
    %6118 = vrot.lane.b32.xlu0 %v6075, 112
    %v6119 = vpop.permute.xlu0 %6118
    %6120 = vrot.lane.b32.xlu0 %v6076, 112
    %v6121 = vpop.permute.xlu0 %6120
    %6122 = vrot.lane.b32.xlu0 %v6077, 112
    %v6123 = vpop.permute.xlu0 %6122
    %6124 = vrot.lane.b32.xlu0 %v6078, 112
    %v6125 = vpop.permute.xlu0 %6124
    %6126 = vrot.lane.b32.xlu0 %v6079, 112
    %v6127 = vpop.permute.xlu0 %6126
    %v6144 = vsel %vm2429, %v6097, 0.0
    %6145 = vadd.xlane.f32.xlu0 %v6144
    %v6146 = vpop.xlane.xlu0 %6145
    %v6147 = vsel %vm2429, %v6099, 0.0
    %6148 = vadd.xlane.f32.xlu0 %v6147
    %v6149 = vpop.xlane.xlu0 %6148
    %v6150 = vsel %vm2429, %v6101, 0.0
    %6151 = vadd.xlane.f32.xlu0 %v6150
    %v6152 = vpop.xlane.xlu0 %6151
    %v6153 = vsel %vm2429, %v6103, 0.0
    %6154 = vadd.xlane.f32.xlu0 %v6153
    %v6155 = vpop.xlane.xlu0 %6154
    %v6156 = vsel %vm2429, %v6105, 0.0
    %6157 = vadd.xlane.f32.xlu0 %v6156
    %v6158 = vpop.xlane.xlu0 %6157
    %v6159 = vsel %vm2429, %v6107, 0.0
    %6160 = vadd.xlane.f32.xlu0 %v6159
    %v6161 = vpop.xlane.xlu0 %6160
    %v6162 = vsel %vm2429, %v6109, 0.0
    %6163 = vadd.xlane.f32.xlu0 %v6162
    %v6164 = vpop.xlane.xlu0 %6163
    %v6165 = vsel %vm2429, %v6111, 0.0
    %6166 = vadd.xlane.f32.xlu0 %v6165
    %v6167 = vpop.xlane.xlu0 %6166
    %v6168 = vsel %vm2429, %v6113, 0.0
    %6169 = vadd.xlane.f32.xlu0 %v6168
    %v6170 = vpop.xlane.xlu0 %6169
    %v6171 = vsel %vm2429, %v6115, 0.0
    %6172 = vadd.xlane.f32.xlu0 %v6171
    %v6173 = vpop.xlane.xlu0 %6172
    %v6174 = vsel %vm2429, %v6117, 0.0
    %6175 = vadd.xlane.f32.xlu0 %v6174
    %v6176 = vpop.xlane.xlu0 %6175
    %v6177 = vsel %vm2429, %v6119, 0.0
    %6178 = vadd.xlane.f32.xlu0 %v6177
    %v6179 = vpop.xlane.xlu0 %6178
    %v6180 = vsel %vm2429, %v6121, 0.0
    %6181 = vadd.xlane.f32.xlu0 %v6180
    %v6182 = vpop.xlane.xlu0 %6181
    %v6183 = vsel %vm2429, %v6123, 0.0
    %6184 = vadd.xlane.f32.xlu0 %v6183
    %v6185 = vpop.xlane.xlu0 %6184
    %v6186 = vsel %vm2429, %v6125, 0.0
    %6187 = vadd.xlane.f32.xlu0 %v6186
    %v6188 = vpop.xlane.xlu0 %6187
    %v6189 = vsel %vm2429, %v6127, 0.0
    %6190 = vadd.xlane.f32.xlu0 %v6189
    %v6191 = vpop.xlane.xlu0 %6190
    %v6192 = vadd.f32 %v6146, %v6149
    %v6193 = vrot.slane %v6192, 4
    %v6194 = vadd.f32 %v6192, %v6193
    %v6195 = vrot.slane %v6194, 2
    %v6196 = vadd.f32 %v6194, %v6195
    %v6197 = vrot.slane %v6196, 1
    %v6198 = vadd.f32 %v6196, %v6197
    %v6199 = vadd.f32 %v6152, %v6155
    %v6200 = vrot.slane %v6199, 4
    %v6201 = vadd.f32 %v6199, %v6200
    %v6202 = vrot.slane %v6201, 2
    %v6203 = vadd.f32 %v6201, %v6202
    %v6204 = vrot.slane %v6203, 1
    %v6205 = vadd.f32 %v6203, %v6204
    %v6206 = vadd.f32 %v6158, %v6161
    %v6207 = vrot.slane %v6206, 4
    %v6208 = vadd.f32 %v6206, %v6207
    %v6209 = vrot.slane %v6208, 2
    %v6210 = vadd.f32 %v6208, %v6209
    %v6211 = vrot.slane %v6210, 1
    %v6212 = vadd.f32 %v6210, %v6211
    %v6213 = vadd.f32 %v6164, %v6167
    %v6214 = vrot.slane %v6213, 4
    %v6215 = vadd.f32 %v6213, %v6214
    %v6216 = vrot.slane %v6215, 2
    %v6217 = vadd.f32 %v6215, %v6216
    %v6218 = vrot.slane %v6217, 1
    %v6219 = vadd.f32 %v6217, %v6218
    %v6220 = vadd.f32 %v6170, %v6173
    %v6221 = vrot.slane %v6220, 4
    %v6222 = vadd.f32 %v6220, %v6221
    %v6223 = vrot.slane %v6222, 2
    %v6224 = vadd.f32 %v6222, %v6223
    %v6225 = vrot.slane %v6224, 1
    %v6226 = vadd.f32 %v6224, %v6225
    %v6227 = vadd.f32 %v6176, %v6179
    %v6228 = vrot.slane %v6227, 4
    %v6229 = vadd.f32 %v6227, %v6228
    %v6230 = vrot.slane %v6229, 2
    %v6231 = vadd.f32 %v6229, %v6230
    %v6232 = vrot.slane %v6231, 1
    %v6233 = vadd.f32 %v6231, %v6232
    %v6234 = vadd.f32 %v6182, %v6185
    %v6235 = vrot.slane %v6234, 4
    %v6236 = vadd.f32 %v6234, %v6235
    %v6237 = vrot.slane %v6236, 2
    %v6238 = vadd.f32 %v6236, %v6237
    %v6239 = vrot.slane %v6238, 1
    %v6240 = vadd.f32 %v6238, %v6239
    %v6241 = vadd.f32 %v6188, %v6191
    %v6242 = vrot.slane %v6241, 4
    %v6243 = vadd.f32 %v6241, %v6242
    %v6244 = vrot.slane %v6243, 2
    %v6245 = vadd.f32 %v6243, %v6244
    %v6246 = vrot.slane %v6245, 1
    %v6247 = vadd.f32 %v6245, %v6246
    %vm6248 = vcmask 1040384
    %v6249 = vsel %vm6248, %v5992, %v6198
    %v6250 = vsel %vm6248, %v5993, %v6205
    %v6251 = vsel %vm6248, %v5994, %v6212
    %v6252 = vsel %vm6248, %v5995, %v6219
    %v6253 = vsel %vm6248, %v5996, %v6226
    %v6254 = vsel %vm6248, %v5997, %v6233
    %v6255 = vsel %vm6248, %v5998, %v6240
    %v6256 = vsel %vm6248, %v5999, %v6247
    %vm6257 = vcmask 1041408
    %v6258 = vsel %vm6257, %v6249, 0.0
    %v6259 = vsel %vm6257, %v6250, 0.0
    %v6260 = vsel %vm6257, %v6251, 0.0
    %v6261 = vsel %vm6257, %v6252, 0.0
    %v6262 = vsel %vm6257, %v6253, 0.0
    %v6263 = vsel %vm6257, %v6254, 0.0
    %v6264 = vsel %vm6257, %v6255, 0.0
    %v6265 = vsel %vm6257, %v6256, 0.0
    %6274 = vrot.lane.b32.xlu0 %v4589, 16
    %v6275 = vpop.permute.xlu0 %6274
    %6276 = vrot.lane.b32.xlu0 %v4662, 16
    %v6277 = vpop.permute.xlu0 %6276
    %6278 = vrot.lane.b32.xlu0 %v4735, 16
    %v6279 = vpop.permute.xlu0 %6278
    %6280 = vrot.lane.b32.xlu0 %v4808, 16
    %v6281 = vpop.permute.xlu0 %6280
    %6282 = vrot.lane.b32.xlu0 %v4881, 16
    %v6283 = vpop.permute.xlu0 %6282
    %6284 = vrot.lane.b32.xlu0 %v4954, 16
    %v6285 = vpop.permute.xlu0 %6284
    %6286 = vrot.lane.b32.xlu0 %v5027, 16
    %v6287 = vpop.permute.xlu0 %6286
    %6288 = vrot.lane.b32.xlu0 %v5100, 16
    %v6289 = vpop.permute.xlu0 %6288
    %6306 = vrot.lane.b32.xlu0 %v6258, 20
    %v6307 = vpop.permute.xlu0 %6306
    %6308 = vrot.lane.b32.xlu0 %v6259, 20
    %v6309 = vpop.permute.xlu0 %6308
    %6310 = vrot.lane.b32.xlu0 %v6260, 20
    %v6311 = vpop.permute.xlu0 %6310
    %6312 = vrot.lane.b32.xlu0 %v6261, 20
    %v6313 = vpop.permute.xlu0 %6312
    %6314 = vrot.lane.b32.xlu0 %v6262, 20
    %v6315 = vpop.permute.xlu0 %6314
    %6316 = vrot.lane.b32.xlu0 %v6263, 20
    %v6317 = vpop.permute.xlu0 %6316
    %6318 = vrot.lane.b32.xlu0 %v6264, 20
    %v6319 = vpop.permute.xlu0 %6318
    %6320 = vrot.lane.b32.xlu0 %v6265, 20
    %v6321 = vpop.permute.xlu0 %6320
    %v6330 = vsel %vm101, %v3165, %v6275
    %v6331 = vsel %vm101, %v3278, %v6277
    %v6332 = vsel %vm101, %v3391, %v6279
    %v6333 = vsel %vm101, %v3504, %v6281
    %v6334 = vsel %vm101, %v3617, %v6283
    %v6335 = vsel %vm101, %v3730, %v6285
    %v6336 = vsel %vm101, %v3843, %v6287
    %v6337 = vsel %vm101, %v3956, %v6289
    %vm6338 = vcmask 162816
    %v6339 = vsel %vm6338, %v6330, %v6307
    %v6340 = vsel %vm6338, %v6331, %v6309
    %v6341 = vsel %vm6338, %v6332, %v6311
    %v6342 = vsel %vm6338, %v6333, %v6313
    %v6343 = vsel %vm6338, %v6334, %v6315
    %v6344 = vsel %vm6338, %v6335, %v6317
    %v6345 = vsel %vm6338, %v6336, %v6319
    %v6346 = vsel %vm6338, %v6337, %v6321
    %vm6347 = vcmask 171008
    %v6348 = vsel %vm6347, %v6339, 0.0
    %v6349 = vsel %vm6347, %v6340, 0.0
    %v6350 = vsel %vm6347, %v6341, 0.0
    %v6351 = vsel %vm6347, %v6342, 0.0
    %v6352 = vsel %vm6347, %v6343, 0.0
    %v6353 = vsel %vm6347, %v6344, 0.0
    %v6354 = vsel %vm6347, %v6345, 0.0
    %v6355 = vsel %vm6347, %v6346, 0.0
    %6356 = vst [vmem:[#allocation2] sm:$0xf] %v6348
    %6357 = vst [vmem:[#allocation2 + $0x4] sm:$0xf] %v6349
    %6358 = vst [vmem:[#allocation2 + $0x8] sm:$0xf] %v6350
    %6359 = vst [vmem:[#allocation2 + $0xc] sm:$0xf] %v6351
    %6360 = vst [vmem:[#allocation2 + $0x10] sm:$0xf] %v6352
    %6361 = vst [vmem:[#allocation2 + $0x14] sm:$0xf] %v6353
    %6362 = vst [vmem:[#allocation2 + $0x18] sm:$0xf] %v6354
    %6363 = vst [vmem:[#allocation2 + $0x1c] sm:$0xf] %v6355
    // Predicated region
    $region22: #{tpu_custom_call.1} parent=1 // pred_check
      _
    $region23: #{tpu_custom_call.1} parent=1 // pred_check_branch
      %6365 = sbr.rel (0) target = $region25
    $region24: #{tpu_custom_call.1} parent=1 // pred_region
      %s6367 = ssub.s32 512, 512
      %6368 = vsyncadd [#allocation3], %s6367
      %s6369 = sshll.u32 [#allocation2], 4
      %s6370 = int_to_ptr.vmem [resolvable:$true] %s6369
      %6375 = dma.vmem_to_hbm [thread:$0]  %s6370, 512, %s5, [#allocation3], 64, 64, 4
    $region25: #{tpu_custom_call.1} parent=1 // pred_fallthru
      _
    // Predicated region
    $region26: #{tpu_custom_call.1} parent=1 // pred_check
      _
    $region27: #{tpu_custom_call.1} parent=1 // pred_check_branch
      %6377 = sbr.rel (0) target = $region29
    $region28: #{tpu_custom_call.1} parent=1 // pred_region
      %6378 = dma.done [#allocation3], 512
    $region29: #{tpu_custom_call.1} parent=1 // pred_fallthru
      _
    %6379 = vsyncpa [#allocation3], 1

</llo_original>
